<compile_context>
chip_gen: v7x
topology: tpu7x:2x2x1
jax: 0.10.0
libtpu: 0.0.40
codegen_flags: <defaults>
</compile_context>

<pallas_src>
import jax
import jax.numpy as jnp
from jax import lax
from jax.experimental import pallas as pl
from jax.experimental.pallas import tpu as pltpu


LAYER_DIMS = ((64, 64), (64, 32), (32, 16), (16, 8))   # (C_in, C_out) of layer1..4


def _ceil_to(v, m):
    return ((v + m - 1) // m) * m


def _bn_fold(bn, eps=1e-5):
    gamma, beta, mean, var = bn
    s = gamma * lax.rsqrt(var + eps)
    return s, beta - mean * s


# ----------------------------------------------------------------------------
# Host-side parameter packing: BN folding, tap concatenation along N, and
# consolidation into one bf16 weight pack + one f32 bias pack.
# ----------------------------------------------------------------------------
def _pack_params(params):
    mats = []                                              # (name, (K, N) f32)
    wd, bd = params["dense_w"], params["dense_b"]          # (128, Cin), (128,)
    # dense columns reordered [even features | odd features] so the two length
    # positions of x.view(B, 64, 2) come out as contiguous column halves.
    mats.append(("dense", jnp.concatenate([wd[0::2], wd[1::2]], axis=0).T))
    bias_rows = [jnp.concatenate([bd[0::2], bd[1::2]])]

    for i, lp in enumerate(params["layers"]):
        s1, b1 = _bn_fold(lp["bn1"])
        s2, b2 = _bn_fold(lp["bn2"])
        su, bu = _bn_fold(lp["bn_up"])
        w1, w2, wu = lp["w1"], lp["w2"], lp["w_up"]
        # deconv3x3 taps 0..2 (bn1 folded) + 1x1-skip tap (bn_up folded), wide RHS
        mats.append((f"A{i}", jnp.concatenate(
            [w1[:, :, 0] * s1, w1[:, :, 1] * s1, w1[:, :, 2] * s1,
             wu[:, :, 0] * su], axis=1)))
        # conv3x3 taps (transposed, bn2 folded), wide RHS
        mats.append((f"B{i}", jnp.concatenate(
            [w2[:, :, 0].T * s2, w2[:, :, 1].T * s2, w2[:, :, 2].T * s2], axis=1)))
        bias_rows += [b1, b2, bu]

    wo = params["w_out"]                                   # (8, out_ch, 3)
    mats.append(("out", jnp.concatenate([wo[:, :, 0], wo[:, :, 1], wo[:, :, 2]],
                                        axis=1)))

    wcols = 256
    plan, cursor = {}, 0
    for name, m in mats:
        k, n = m.shape
        off = _ceil_to(cursor, 16)                         # bf16 sublane-tile align
        plan[name] = (off, k, n)
        cursor = off + k
    total = _ceil_to(cursor, 16)

    wpack = jnp.zeros((total, wcols), jnp.float32)
    for name, m in mats:
        off, k, n = plan[name]
        wpack = wpack.at[off:off + k, :n].set(m.astype(jnp.float32))
    wpack = wpack.astype(jnp.bfloat16)

    bpack = jnp.zeros((16, 128), jnp.float32)
    for r, row in enumerate(bias_rows):
        bpack = bpack.at[r, :row.shape[0]].set(row.astype(jnp.float32))
    return wpack, bpack, plan


# ----------------------------------------------------------------------------
# Kernel: whole decoder for a BB-sample block, channels-last & length-major.
# Activation layout: (L*BB, C) with row = position*BB + sample.
# ----------------------------------------------------------------------------
def _make_kernel(plan, bb, c_out):

    def shift_up(x):      # out[pos] = x[pos + 1]; last position -> 0
        return jnp.concatenate(
            [x[bb:], jnp.zeros((bb, x.shape[1]), x.dtype)], axis=0)

    def shift_down(x):    # out[pos] = x[pos - 1]; first position -> 0
        return jnp.concatenate(
            [jnp.zeros((bb, x.shape[1]), x.dtype), x[:-bb]], axis=0)

    def interleave(a, b):  # block-row interleave: a0, b0, a1, b1, ...
        n = a.shape[0]
        parts = []
        for r in range(0, n, bb):
            parts.append(a[r:r + bb])
            parts.append(b[r:r + bb])
        return jnp.concatenate(parts, axis=0)

    def kernel(x_ref, w_ref, b_ref, out_ref):
        def wmat(name):
            off, k, n = plan[name]
            return w_ref[off:off + k, :n]

        def brow(idx, width):
            return b_ref[idx:idx + 1, :width]

        # ---- dense_block: Linear(Cin, 128) + ReLU, then view(B, 64, 2) ----
        x = x_ref[...].astype(jnp.bfloat16)                          # (BB, Cin)
        h = jnp.dot(x, wmat("dense"), preferred_element_type=jnp.float32)
        h = jnp.maximum(h + brow(0, 128), 0.0)                       # (BB, 128)
        # length-major: rows [position 0 samples ; position 1 samples]
        z = jnp.concatenate([h[:, :64], h[:, 64:]], axis=0)          # (2*BB, 64)

        # ---- layer1 .. layer4 (decoder BasicBlock, stride 2) ----
        for i, (_, co) in enumerate(LAYER_DIMS):
            b1 = brow(1 + 3 * i, co)
            b2 = brow(2 + 3 * i, co)
            bu = brow(3 + 3 * i, co)

            # one wide matmul: [tap0 | tap1 | tap2 | skip]
            P = jnp.dot(z.astype(jnp.bfloat16), wmat(f"A{i}"),
                        preferred_element_type=jnp.float32)          # (L*BB, 4co)
            a_e = jnp.maximum(P[:, co:2 * co] + b1, 0.0)             # even outputs
            a_o = jnp.maximum(shift_up(P[:, :co]) + P[:, 2 * co:3 * co] + b1,
                              0.0)                                   # odd outputs
            id_e = P[:, 3 * co:4 * co] + bu                          # skip (even)

            # conv3x3 on both phases: one matmul with [a_e; a_o] stacked along M
            n_rows = a_e.shape[0]
            QR = jnp.dot(jnp.concatenate([a_e, a_o], axis=0).astype(jnp.bfloat16),
                         wmat(f"B{i}"), preferred_element_type=jnp.float32)
            Q, R = QR[:n_rows], QR[n_rows:]                          # (L*BB, 3co)
            v_e = shift_down(R[:, :co]) + Q[:, co:2 * co] + R[:, 2 * co:] + b2
            v_o = Q[:, :co] + R[:, co:2 * co] + shift_up(Q[:, 2 * co:]) + b2

            o_e = jnp.maximum(v_e + id_e, 0.0)
            o_o = jnp.maximum(v_o + bu, 0.0)
            z = interleave(o_e, o_o)                                 # (2L*BB, co)

        # ---- deconv_out (k=3, stride 2, pad 1, no bias) + crop [5:57] ----
        Y = jnp.dot(z.astype(jnp.bfloat16), wmat("out"),
                    preferred_element_type=jnp.float32)              # (32*BB, 3*cout)
        y0, y1, y2 = Y[:, :c_out], Y[:, c_out:2 * c_out], Y[:, 2 * c_out:]
        odd = y0[3 * bb:29 * bb] + y2[2 * bb:28 * bb]                # positions 5,7..55
        even = y1[3 * bb:29 * bb]                                    # positions 6,8..56
        out_ref[...] = interleave(odd, even)                         # (52*BB, cout)

    return kernel


# ----------------------------------------------------------------------------
# Wrapper: batch padding/blocking, packing, pallas_call, NCL layout fix.
# ----------------------------------------------------------------------------
def resnet_decoder_forward(params, x, *, block_batch=32):
    batch, c_in = x.shape
    c_out = params["w_out"].shape[1]

    bb = min(_ceil_to(block_batch, 8), max(8, _ceil_to(batch, 8)))
    padded = _ceil_to(batch, bb)
    nb = padded // bb
    if padded != batch:
        x = jnp.concatenate(
            [x, jnp.zeros((padded - batch, c_in), x.dtype)], axis=0)

    wpack, bpack, plan = _pack_params(params)
    kernel = _make_kernel(plan, bb, c_out)

    out = pl.pallas_call(
        kernel,
        grid=(nb,),
        in_specs=[
            pl.BlockSpec((bb, c_in), lambda i: (i, 0)),
            pl.BlockSpec(wpack.shape, lambda i: (0, 0)),
            pl.BlockSpec(bpack.shape, lambda i: (0, 0)),
        ],
        out_specs=pl.BlockSpec((52 * bb, c_out), lambda i: (i, 0)),
        out_shape=jax.ShapeDtypeStruct((nb * 52 * bb, c_out), jnp.float32),
        compiler_params=pltpu.CompilerParams(
            dimension_semantics=("parallel",)),
    )(x.astype(jnp.float32), wpack, bpack)

    # length-major (block, position, sample, channel) -> PyTorch NCL (B, C, 52)
    out = out.reshape(nb, 52, bb, c_out)
    out = jnp.transpose(out, (0, 2, 3, 1)).reshape(padded, c_out, 52)
    return out[:batch]


# ----------------------------------------------------------------------------
# Pure-JAX reference (XLA convolutions) - independent numerical sanity check.
# ----------------------------------------------------------------------------
def _ref_bn(y, bn, eps=1e-5):
    gamma, beta, mean, var = (v[None, :, None] for v in bn)
    return (y - mean) * lax.rsqrt(var + eps) * gamma + beta


def _ref_conv1d(y, w, pad):
    return lax.conv_general_dilated(y, w, (1,), [(pad, pad)],
                                    dimension_numbers=("NCH", "OIH", "NCH"))


def _ref_deconv1d(y, w, stride, pad, out_pad):
    k = w.shape[-1]
    wt = jnp.flip(jnp.transpose(w, (1, 0, 2)), axis=-1)
    return lax.conv_general_dilated(
        y, wt, (1,), [(k - 1 - pad, k - 1 - pad + out_pad)],
        lhs_dilation=(stride,), dimension_numbers=("NCH", "OIH", "NCH"))


def _ref_forward(params, x):
    h = jnp.maximum(x @ params["dense_w"].T + params["dense_b"], 0.0)
    h = h.reshape(x.shape[0], 64, 2)
    for lp in params["layers"]:
        idn = _ref_bn(_ref_deconv1d(h, lp["w_up"], 2, 0, 1), lp["bn_up"])
        o = jnp.maximum(_ref_bn(_ref_deconv1d(h, lp["w1"], 2, 1, 1), lp["bn1"]), 0.0)
        o = _ref_bn(_ref_conv1d(o, lp["w2"], 1), lp["bn2"])
        h = jnp.maximum(o + idn, 0.0)
    h = _ref_deconv1d(h, params["w_out"], 2, 1, 0)
    return h[:, :, 5:57]


# ----------------------------------------------------------------------------
# Deterministic parameter initialisation (PyTorch layouts).
# ----------------------------------------------------------------------------
def _bn_init(c):
    return (jnp.ones((c,), jnp.float32), jnp.zeros((c,), jnp.float32),
            jnp.zeros((c,), jnp.float32), jnp.ones((c,), jnp.float32))


def init_params(key, in_channels, out_channels):
    keys = jax.random.split(key, 2 + 3 * len(LAYER_DIMS) + 1)
    ki = iter(keys)

    def nrm(k, shape, fan_out):
        return jax.random.normal(k, shape, jnp.float32) * (2.0 / fan_out) ** 0.5

    params = {
        "dense_w": nrm(next(ki), (128, in_channels), 128),
        "dense_b": jax.random.normal(next(ki), (128,), jnp.float32) * 0.05,
        "layers": [],
    }
    for cin, cout in LAYER_DIMS:
        params["layers"].append({
            "w1": nrm(next(ki), (cin, cout, 3), cout * 3),   # ConvTranspose1d (I, O, K)
            "w2": nrm(next(ki), (cout, cout, 3), cout * 3),  # Conv1d (O, I, K)
            "w_up": nrm(next(ki), (cin, cout, 1), cout),     # ConvTranspose1d (I, O, 1)
            "bn1": _bn_init(cout),
            "bn2": _bn_init(cout),
            "bn_up": _bn_init(cout),
        })
    params["w_out"] = nrm(next(ki), (8, out_channels, 3), out_channels * 3)
    return params


# ----------------------------------------------------------------------------
if __name__ == "__main__":
    key = jax.random.PRNGKey(0)
    k_x, k_p = jax.random.split(key)

    batch, in_channels, out_channels = 2, 32, 4
    x = jax.random.normal(k_x, (batch, in_channels), jnp.float32)
    params = init_params(k_p, in_channels, out_channels)

    fwd = jax.jit(resnet_decoder_forward)
    y = jax.block_until_ready(fwd(params, x))

    assert y.shape == (batch, out_channels, 52), y.shape
    assert bool(jnp.all(jnp.isfinite(y)))

    # Numerical sanity check against an independent XLA-conv reference
    # (loose tolerance because the kernel uses bf16 matmul operands).
    y_ref = _ref_forward(params, x)
    max_err = float(jnp.max(jnp.abs(y - y_ref)))
    assert jnp.allclose(y, y_ref, rtol=0.1, atol=0.1), max_err

    print("KERNEL_OK")
</pallas_src>

<mosaic_0001>
module attributes {stable_mosaic.version = 11 : i64} {
  func.func @kernel(%arg0: i32, %arg1: memref<8x32xf32, #tpu.memory_space<vmem>>, %arg2: memref<352x256xbf16, #tpu.memory_space<vmem>>, %arg3: memref<16x128xf32, #tpu.memory_space<vmem>>, %arg4: memref<416x4xf32, #tpu.memory_space<vmem>>) attributes {dimension_semantics = [#tpu.dimension_semantics<parallel>], iteration_bounds = array<i64: 1>, scalar_prefetch = 0 : i64, scratch_operands = 0 : i64, tpu.core_type = #tpu.core_type<tc>, window_params = [{transform_indices = @transform_0, window_bounds = array<i64: 8, 32>}, {pipeline_mode = #tpu.pipeline_mode<synchronous>, transform_indices = @transform_1, window_bounds = array<i64: 352, 256>}, {pipeline_mode = #tpu.pipeline_mode<synchronous>, transform_indices = @transform_2, window_bounds = array<i64: 16, 128>}, {transform_indices = @transform_3, window_bounds = array<i64: 416, 4>}]} {
    %c0 = arith.constant 0 : index
    %c0_0 = arith.constant 0 : index
    %0 = vector.load %arg1[%c0, %c0_0] : memref<8x32xf32, #tpu.memory_space<vmem>>, vector<8x32xf32>
    %1 = arith.truncf %0 : vector<8x32xf32> to vector<8x32xbf16>
    %c0_1 = arith.constant 0 : index
    %c0_2 = arith.constant 0 : index
    %2 = vector.load %arg2[%c0_1, %c0_2] : memref<352x256xbf16, #tpu.memory_space<vmem>>, vector<32x128xbf16>
    %cst = arith.constant dense<0.000000e+00> : vector<8x128xf32>
    %3 = tpu.matmul %1, %2, %cst {dimension_numbers = #tpu.dot_dimension_numbers<[1], [0], [0], [1], [0, 0, 1, 1], [], []>} : vector<8x32xbf16>, vector<32x128xbf16>, vector<8x128xf32> -> vector<8x128xf32>
    %c0_3 = arith.constant 0 : index
    %c0_4 = arith.constant 0 : index
    %4 = vector.load %arg3[%c0_3, %c0_4] : memref<16x128xf32, #tpu.memory_space<vmem>>, vector<1x128xf32>
    %5 = vector.broadcast %4 : vector<1x128xf32> to vector<8x128xf32>
    %6 = arith.addf %3, %5 : vector<8x128xf32>
    %cst_5 = arith.constant 0.000000e+00 : f32
    %7 = vector.broadcast %cst_5 : f32 to vector<8x128xf32>
    %8 = arith.maximumf %6, %7 : vector<8x128xf32>
    %9 = vector.extract_strided_slice %8 {offsets = [0, 0], sizes = [8, 64], strides = [1, 1]} : vector<8x128xf32> to vector<8x64xf32>
    %10 = vector.extract_strided_slice %8 {offsets = [0, 64], sizes = [8, 64], strides = [1, 1]} : vector<8x128xf32> to vector<8x64xf32>
    %11 = tpu.concatenate %9, %10 in 0 : vector<8x64xf32>, vector<8x64xf32> -> vector<16x64xf32>
    %c1 = arith.constant 1 : index
    %c0_6 = arith.constant 0 : index
    %12 = vector.load %arg3[%c1, %c0_6] : memref<16x128xf32, #tpu.memory_space<vmem>>, vector<1x64xf32>
    %c2 = arith.constant 2 : index
    %c0_7 = arith.constant 0 : index
    %13 = vector.load %arg3[%c2, %c0_7] : memref<16x128xf32, #tpu.memory_space<vmem>>, vector<1x64xf32>
    %c3 = arith.constant 3 : index
    %c0_8 = arith.constant 0 : index
    %14 = vector.load %arg3[%c3, %c0_8] : memref<16x128xf32, #tpu.memory_space<vmem>>, vector<1x64xf32>
    %15 = arith.truncf %11 : vector<16x64xf32> to vector<16x64xbf16>
    %c32 = arith.constant 32 : index
    %c0_9 = arith.constant 0 : index
    %16 = vector.load %arg2[%c32, %c0_9] : memref<352x256xbf16, #tpu.memory_space<vmem>>, vector<64x256xbf16>
    %cst_10 = arith.constant dense<0.000000e+00> : vector<16x256xf32>
    %17 = tpu.matmul %15, %16, %cst_10 {dimension_numbers = #tpu.dot_dimension_numbers<[1], [0], [0], [1], [0, 0, 1, 1], [], []>} : vector<16x64xbf16>, vector<64x256xbf16>, vector<16x256xf32> -> vector<16x256xf32>
    %18 = vector.extract_strided_slice %17 {offsets = [0, 64], sizes = [16, 64], strides = [1, 1]} : vector<16x256xf32> to vector<16x64xf32>
    %19 = vector.broadcast %12 : vector<1x64xf32> to vector<16x64xf32>
    %20 = arith.addf %18, %19 : vector<16x64xf32>
    %cst_11 = arith.constant 0.000000e+00 : f32
    %21 = vector.broadcast %cst_11 : f32 to vector<16x64xf32>
    %22 = arith.maximumf %20, %21 : vector<16x64xf32>
    %23 = vector.extract_strided_slice %17 {offsets = [0, 0], sizes = [16, 64], strides = [1, 1]} : vector<16x256xf32> to vector<16x64xf32>
    %24 = vector.extract_strided_slice %23 {offsets = [8, 0], sizes = [8, 64], strides = [1, 1]} : vector<16x64xf32> to vector<8x64xf32>
    %cst_12 = arith.constant 0.000000e+00 : f32
    %25 = vector.broadcast %cst_12 : f32 to vector<8x64xf32>
    %26 = tpu.concatenate %24, %25 in 0 : vector<8x64xf32>, vector<8x64xf32> -> vector<16x64xf32>
    %27 = vector.extract_strided_slice %17 {offsets = [0, 128], sizes = [16, 64], strides = [1, 1]} : vector<16x256xf32> to vector<16x64xf32>
    %28 = arith.addf %26, %27 : vector<16x64xf32>
    %29 = vector.broadcast %12 : vector<1x64xf32> to vector<16x64xf32>
    %30 = arith.addf %28, %29 : vector<16x64xf32>
    %cst_13 = arith.constant 0.000000e+00 : f32
    %31 = vector.broadcast %cst_13 : f32 to vector<16x64xf32>
    %32 = arith.maximumf %30, %31 : vector<16x64xf32>
    %33 = vector.extract_strided_slice %17 {offsets = [0, 192], sizes = [16, 64], strides = [1, 1]} : vector<16x256xf32> to vector<16x64xf32>
    %34 = vector.broadcast %14 : vector<1x64xf32> to vector<16x64xf32>
    %35 = arith.addf %33, %34 : vector<16x64xf32>
    %36 = tpu.concatenate %22, %32 in 0 : vector<16x64xf32>, vector<16x64xf32> -> vector<32x64xf32>
    %37 = arith.truncf %36 : vector<32x64xf32> to vector<32x64xbf16>
    %c96 = arith.constant 96 : index
    %c0_14 = arith.constant 0 : index
    %38 = vector.load %arg2[%c96, %c0_14] : memref<352x256xbf16, #tpu.memory_space<vmem>>, vector<64x192xbf16>
    %cst_15 = arith.constant dense<0.000000e+00> : vector<32x192xf32>
    %39 = tpu.matmul %37, %38, %cst_15 {dimension_numbers = #tpu.dot_dimension_numbers<[1], [0], [0], [1], [0, 0, 1, 1], [], []>} : vector<32x64xbf16>, vector<64x192xbf16>, vector<32x192xf32> -> vector<32x192xf32>
    %40 = vector.extract_strided_slice %39 {offsets = [0, 0], sizes = [16, 192], strides = [1, 1]} : vector<32x192xf32> to vector<16x192xf32>
    %41 = vector.extract_strided_slice %39 {offsets = [16, 0], sizes = [16, 192], strides = [1, 1]} : vector<32x192xf32> to vector<16x192xf32>
    %42 = vector.extract_strided_slice %41 {offsets = [0, 0], sizes = [16, 64], strides = [1, 1]} : vector<16x192xf32> to vector<16x64xf32>
    %cst_16 = arith.constant 0.000000e+00 : f32
    %43 = vector.broadcast %cst_16 : f32 to vector<8x64xf32>
    %44 = vector.extract_strided_slice %42 {offsets = [0, 0], sizes = [8, 64], strides = [1, 1]} : vector<16x64xf32> to vector<8x64xf32>
    %45 = tpu.concatenate %43, %44 in 0 : vector<8x64xf32>, vector<8x64xf32> -> vector<16x64xf32>
    %46 = vector.extract_strided_slice %40 {offsets = [0, 64], sizes = [16, 64], strides = [1, 1]} : vector<16x192xf32> to vector<16x64xf32>
    %47 = arith.addf %45, %46 : vector<16x64xf32>
    %48 = vector.extract_strided_slice %41 {offsets = [0, 128], sizes = [16, 64], strides = [1, 1]} : vector<16x192xf32> to vector<16x64xf32>
    %49 = arith.addf %47, %48 : vector<16x64xf32>
    %50 = vector.broadcast %13 : vector<1x64xf32> to vector<16x64xf32>
    %51 = arith.addf %49, %50 : vector<16x64xf32>
    %52 = vector.extract_strided_slice %40 {offsets = [0, 0], sizes = [16, 64], strides = [1, 1]} : vector<16x192xf32> to vector<16x64xf32>
    %53 = vector.extract_strided_slice %41 {offsets = [0, 64], sizes = [16, 64], strides = [1, 1]} : vector<16x192xf32> to vector<16x64xf32>
    %54 = arith.addf %52, %53 : vector<16x64xf32>
    %55 = vector.extract_strided_slice %40 {offsets = [0, 128], sizes = [16, 64], strides = [1, 1]} : vector<16x192xf32> to vector<16x64xf32>
    %56 = vector.extract_strided_slice %55 {offsets = [8, 0], sizes = [8, 64], strides = [1, 1]} : vector<16x64xf32> to vector<8x64xf32>
    %cst_17 = arith.constant 0.000000e+00 : f32
    %57 = vector.broadcast %cst_17 : f32 to vector<8x64xf32>
    %58 = tpu.concatenate %56, %57 in 0 : vector<8x64xf32>, vector<8x64xf32> -> vector<16x64xf32>
    %59 = arith.addf %54, %58 : vector<16x64xf32>
    %60 = vector.broadcast %13 : vector<1x64xf32> to vector<16x64xf32>
    %61 = arith.addf %59, %60 : vector<16x64xf32>
    %62 = arith.addf %51, %35 : vector<16x64xf32>
    %cst_18 = arith.constant 0.000000e+00 : f32
    %63 = vector.broadcast %cst_18 : f32 to vector<16x64xf32>
    %64 = arith.maximumf %62, %63 : vector<16x64xf32>
    %65 = vector.broadcast %14 : vector<1x64xf32> to vector<16x64xf32>
    %66 = arith.addf %61, %65 : vector<16x64xf32>
    %cst_19 = arith.constant 0.000000e+00 : f32
    %67 = vector.broadcast %cst_19 : f32 to vector<16x64xf32>
    %68 = arith.maximumf %66, %67 : vector<16x64xf32>
    %69 = vector.extract_strided_slice %64 {offsets = [0, 0], sizes = [8, 64], strides = [1, 1]} : vector<16x64xf32> to vector<8x64xf32>
    %70 = vector.extract_strided_slice %68 {offsets = [0, 0], sizes = [8, 64], strides = [1, 1]} : vector<16x64xf32> to vector<8x64xf32>
    %71 = vector.extract_strided_slice %64 {offsets = [8, 0], sizes = [8, 64], strides = [1, 1]} : vector<16x64xf32> to vector<8x64xf32>
    %72 = vector.extract_strided_slice %68 {offsets = [8, 0], sizes = [8, 64], strides = [1, 1]} : vector<16x64xf32> to vector<8x64xf32>
    %73 = tpu.concatenate %69, %70, %71, %72 in 0 : vector<8x64xf32>, vector<8x64xf32>, vector<8x64xf32>, vector<8x64xf32> -> vector<32x64xf32>
    %c4 = arith.constant 4 : index
    %c0_20 = arith.constant 0 : index
    %74 = vector.load %arg3[%c4, %c0_20] : memref<16x128xf32, #tpu.memory_space<vmem>>, vector<1x32xf32>
    %c5 = arith.constant 5 : index
    %c0_21 = arith.constant 0 : index
    %75 = vector.load %arg3[%c5, %c0_21] : memref<16x128xf32, #tpu.memory_space<vmem>>, vector<1x32xf32>
    %c6 = arith.constant 6 : index
    %c0_22 = arith.constant 0 : index
    %76 = vector.load %arg3[%c6, %c0_22] : memref<16x128xf32, #tpu.memory_space<vmem>>, vector<1x32xf32>
    %77 = arith.truncf %73 : vector<32x64xf32> to vector<32x64xbf16>
    %c160 = arith.constant 160 : index
    %c0_23 = arith.constant 0 : index
    %78 = vector.load %arg2[%c160, %c0_23] : memref<352x256xbf16, #tpu.memory_space<vmem>>, vector<64x128xbf16>
    %cst_24 = arith.constant dense<0.000000e+00> : vector<32x128xf32>
    %79 = tpu.matmul %77, %78, %cst_24 {dimension_numbers = #tpu.dot_dimension_numbers<[1], [0], [0], [1], [0, 0, 1, 1], [], []>} : vector<32x64xbf16>, vector<64x128xbf16>, vector<32x128xf32> -> vector<32x128xf32>
    %80 = vector.extract_strided_slice %79 {offsets = [0, 32], sizes = [32, 32], strides = [1, 1]} : vector<32x128xf32> to vector<32x32xf32>
    %81 = vector.broadcast %74 : vector<1x32xf32> to vector<32x32xf32>
    %82 = arith.addf %80, %81 : vector<32x32xf32>
    %cst_25 = arith.constant 0.000000e+00 : f32
    %83 = vector.broadcast %cst_25 : f32 to vector<32x32xf32>
    %84 = arith.maximumf %82, %83 : vector<32x32xf32>
    %85 = vector.extract_strided_slice %79 {offsets = [0, 0], sizes = [32, 32], strides = [1, 1]} : vector<32x128xf32> to vector<32x32xf32>
    %86 = vector.extract_strided_slice %85 {offsets = [8, 0], sizes = [24, 32], strides = [1, 1]} : vector<32x32xf32> to vector<24x32xf32>
    %cst_26 = arith.constant 0.000000e+00 : f32
    %87 = vector.broadcast %cst_26 : f32 to vector<8x32xf32>
    %88 = tpu.concatenate %86, %87 in 0 : vector<24x32xf32>, vector<8x32xf32> -> vector<32x32xf32>
    %89 = vector.extract_strided_slice %79 {offsets = [0, 64], sizes = [32, 32], strides = [1, 1]} : vector<32x128xf32> to vector<32x32xf32>
    %90 = arith.addf %88, %89 : vector<32x32xf32>
    %91 = vector.broadcast %74 : vector<1x32xf32> to vector<32x32xf32>
    %92 = arith.addf %90, %91 : vector<32x32xf32>
    %cst_27 = arith.constant 0.000000e+00 : f32
    %93 = vector.broadcast %cst_27 : f32 to vector<32x32xf32>
    %94 = arith.maximumf %92, %93 : vector<32x32xf32>
    %95 = vector.extract_strided_slice %79 {offsets = [0, 96], sizes = [32, 32], strides = [1, 1]} : vector<32x128xf32> to vector<32x32xf32>
    %96 = vector.broadcast %76 : vector<1x32xf32> to vector<32x32xf32>
    %97 = arith.addf %95, %96 : vector<32x32xf32>
    %98 = tpu.concatenate %84, %94 in 0 : vector<32x32xf32>, vector<32x32xf32> -> vector<64x32xf32>
    %99 = arith.truncf %98 : vector<64x32xf32> to vector<64x32xbf16>
    %c224 = arith.constant 224 : index
    %c0_28 = arith.constant 0 : index
    %100 = vector.load %arg2[%c224, %c0_28] : memref<352x256xbf16, #tpu.memory_space<vmem>>, vector<32x96xbf16>
    %cst_29 = arith.constant dense<0.000000e+00> : vector<64x96xf32>
    %101 = tpu.matmul %99, %100, %cst_29 {dimension_numbers = #tpu.dot_dimension_numbers<[1], [0], [0], [1], [0, 0, 1, 1], [], []>} : vector<64x32xbf16>, vector<32x96xbf16>, vector<64x96xf32> -> vector<64x96xf32>
    %102 = vector.extract_strided_slice %101 {offsets = [0, 0], sizes = [32, 96], strides = [1, 1]} : vector<64x96xf32> to vector<32x96xf32>
    %103 = vector.extract_strided_slice %101 {offsets = [32, 0], sizes = [32, 96], strides = [1, 1]} : vector<64x96xf32> to vector<32x96xf32>
    %104 = vector.extract_strided_slice %103 {offsets = [0, 0], sizes = [32, 32], strides = [1, 1]} : vector<32x96xf32> to vector<32x32xf32>
    %cst_30 = arith.constant 0.000000e+00 : f32
    %105 = vector.broadcast %cst_30 : f32 to vector<8x32xf32>
    %106 = vector.extract_strided_slice %104 {offsets = [0, 0], sizes = [24, 32], strides = [1, 1]} : vector<32x32xf32> to vector<24x32xf32>
    %107 = tpu.concatenate %105, %106 in 0 : vector<8x32xf32>, vector<24x32xf32> -> vector<32x32xf32>
    %108 = vector.extract_strided_slice %102 {offsets = [0, 32], sizes = [32, 32], strides = [1, 1]} : vector<32x96xf32> to vector<32x32xf32>
    %109 = arith.addf %107, %108 : vector<32x32xf32>
    %110 = vector.extract_strided_slice %103 {offsets = [0, 64], sizes = [32, 32], strides = [1, 1]} : vector<32x96xf32> to vector<32x32xf32>
    %111 = arith.addf %109, %110 : vector<32x32xf32>
    %112 = vector.broadcast %75 : vector<1x32xf32> to vector<32x32xf32>
    %113 = arith.addf %111, %112 : vector<32x32xf32>
    %114 = vector.extract_strided_slice %102 {offsets = [0, 0], sizes = [32, 32], strides = [1, 1]} : vector<32x96xf32> to vector<32x32xf32>
    %115 = vector.extract_strided_slice %103 {offsets = [0, 32], sizes = [32, 32], strides = [1, 1]} : vector<32x96xf32> to vector<32x32xf32>
    %116 = arith.addf %114, %115 : vector<32x32xf32>
    %117 = vector.extract_strided_slice %102 {offsets = [0, 64], sizes = [32, 32], strides = [1, 1]} : vector<32x96xf32> to vector<32x32xf32>
    %118 = vector.extract_strided_slice %117 {offsets = [8, 0], sizes = [24, 32], strides = [1, 1]} : vector<32x32xf32> to vector<24x32xf32>
    %cst_31 = arith.constant 0.000000e+00 : f32
    %119 = vector.broadcast %cst_31 : f32 to vector<8x32xf32>
    %120 = tpu.concatenate %118, %119 in 0 : vector<24x32xf32>, vector<8x32xf32> -> vector<32x32xf32>
    %121 = arith.addf %116, %120 : vector<32x32xf32>
    %122 = vector.broadcast %75 : vector<1x32xf32> to vector<32x32xf32>
    %123 = arith.addf %121, %122 : vector<32x32xf32>
    %124 = arith.addf %113, %97 : vector<32x32xf32>
    %cst_32 = arith.constant 0.000000e+00 : f32
    %125 = vector.broadcast %cst_32 : f32 to vector<32x32xf32>
    %126 = arith.maximumf %124, %125 : vector<32x32xf32>
    %127 = vector.broadcast %76 : vector<1x32xf32> to vector<32x32xf32>
    %128 = arith.addf %123, %127 : vector<32x32xf32>
    %cst_33 = arith.constant 0.000000e+00 : f32
    %129 = vector.broadcast %cst_33 : f32 to vector<32x32xf32>
    %130 = arith.maximumf %128, %129 : vector<32x32xf32>
    %131 = vector.extract_strided_slice %126 {offsets = [0, 0], sizes = [8, 32], strides = [1, 1]} : vector<32x32xf32> to vector<8x32xf32>
    %132 = vector.extract_strided_slice %130 {offsets = [0, 0], sizes = [8, 32], strides = [1, 1]} : vector<32x32xf32> to vector<8x32xf32>
    %133 = vector.extract_strided_slice %126 {offsets = [8, 0], sizes = [8, 32], strides = [1, 1]} : vector<32x32xf32> to vector<8x32xf32>
    %134 = vector.extract_strided_slice %130 {offsets = [8, 0], sizes = [8, 32], strides = [1, 1]} : vector<32x32xf32> to vector<8x32xf32>
    %135 = vector.extract_strided_slice %126 {offsets = [16, 0], sizes = [8, 32], strides = [1, 1]} : vector<32x32xf32> to vector<8x32xf32>
    %136 = vector.extract_strided_slice %130 {offsets = [16, 0], sizes = [8, 32], strides = [1, 1]} : vector<32x32xf32> to vector<8x32xf32>
    %137 = vector.extract_strided_slice %126 {offsets = [24, 0], sizes = [8, 32], strides = [1, 1]} : vector<32x32xf32> to vector<8x32xf32>
    %138 = vector.extract_strided_slice %130 {offsets = [24, 0], sizes = [8, 32], strides = [1, 1]} : vector<32x32xf32> to vector<8x32xf32>
    %139 = tpu.concatenate %131, %132, %133, %134, %135, %136, %137, %138 in 0 : vector<8x32xf32>, vector<8x32xf32>, vector<8x32xf32>, vector<8x32xf32>, vector<8x32xf32>, vector<8x32xf32>, vector<8x32xf32>, vector<8x32xf32> -> vector<64x32xf32>
    %c7 = arith.constant 7 : index
    %c0_34 = arith.constant 0 : index
    %140 = vector.load %arg3[%c7, %c0_34] : memref<16x128xf32, #tpu.memory_space<vmem>>, vector<1x16xf32>
    %c8 = arith.constant 8 : index
    %c0_35 = arith.constant 0 : index
    %141 = vector.load %arg3[%c8, %c0_35] : memref<16x128xf32, #tpu.memory_space<vmem>>, vector<1x16xf32>
    %c9 = arith.constant 9 : index
    %c0_36 = arith.constant 0 : index
    %142 = vector.load %arg3[%c9, %c0_36] : memref<16x128xf32, #tpu.memory_space<vmem>>, vector<1x16xf32>
    %143 = arith.truncf %139 : vector<64x32xf32> to vector<64x32xbf16>
    %c256 = arith.constant 256 : index
    %c0_37 = arith.constant 0 : index
    %144 = vector.load %arg2[%c256, %c0_37] : memref<352x256xbf16, #tpu.memory_space<vmem>>, vector<32x64xbf16>
    %cst_38 = arith.constant dense<0.000000e+00> : vector<64x64xf32>
    %145 = tpu.matmul %143, %144, %cst_38 {dimension_numbers = #tpu.dot_dimension_numbers<[1], [0], [0], [1], [0, 0, 1, 1], [], []>} : vector<64x32xbf16>, vector<32x64xbf16>, vector<64x64xf32> -> vector<64x64xf32>
    %146 = vector.extract_strided_slice %145 {offsets = [0, 16], sizes = [64, 16], strides = [1, 1]} : vector<64x64xf32> to vector<64x16xf32>
    %147 = vector.broadcast %140 : vector<1x16xf32> to vector<64x16xf32>
    %148 = arith.addf %146, %147 : vector<64x16xf32>
    %cst_39 = arith.constant 0.000000e+00 : f32
    %149 = vector.broadcast %cst_39 : f32 to vector<64x16xf32>
    %150 = arith.maximumf %148, %149 : vector<64x16xf32>
    %151 = vector.extract_strided_slice %145 {offsets = [0, 0], sizes = [64, 16], strides = [1, 1]} : vector<64x64xf32> to vector<64x16xf32>
    %152 = vector.extract_strided_slice %151 {offsets = [8, 0], sizes = [56, 16], strides = [1, 1]} : vector<64x16xf32> to vector<56x16xf32>
    %cst_40 = arith.constant 0.000000e+00 : f32
    %153 = vector.broadcast %cst_40 : f32 to vector<8x16xf32>
    %154 = tpu.concatenate %152, %153 in 0 : vector<56x16xf32>, vector<8x16xf32> -> vector<64x16xf32>
    %155 = vector.extract_strided_slice %145 {offsets = [0, 32], sizes = [64, 16], strides = [1, 1]} : vector<64x64xf32> to vector<64x16xf32>
    %156 = arith.addf %154, %155 : vector<64x16xf32>
    %157 = vector.broadcast %140 : vector<1x16xf32> to vector<64x16xf32>
    %158 = arith.addf %156, %157 : vector<64x16xf32>
    %cst_41 = arith.constant 0.000000e+00 : f32
    %159 = vector.broadcast %cst_41 : f32 to vector<64x16xf32>
    %160 = arith.maximumf %158, %159 : vector<64x16xf32>
    %161 = vector.extract_strided_slice %145 {offsets = [0, 48], sizes = [64, 16], strides = [1, 1]} : vector<64x64xf32> to vector<64x16xf32>
    %162 = vector.broadcast %142 : vector<1x16xf32> to vector<64x16xf32>
    %163 = arith.addf %161, %162 : vector<64x16xf32>
    %164 = tpu.concatenate %150, %160 in 0 : vector<64x16xf32>, vector<64x16xf32> -> vector<128x16xf32>
    %165 = arith.truncf %164 : vector<128x16xf32> to vector<128x16xbf16>
    %c288 = arith.constant 288 : index
    %c0_42 = arith.constant 0 : index
    %166 = vector.load %arg2[%c288, %c0_42] : memref<352x256xbf16, #tpu.memory_space<vmem>>, vector<16x48xbf16>
    %cst_43 = arith.constant dense<0.000000e+00> : vector<128x48xf32>
    %167 = tpu.matmul %165, %166, %cst_43 {dimension_numbers = #tpu.dot_dimension_numbers<[1], [0], [0], [1], [0, 0, 1, 1], [], []>} : vector<128x16xbf16>, vector<16x48xbf16>, vector<128x48xf32> -> vector<128x48xf32>
    %168 = vector.extract_strided_slice %167 {offsets = [0, 0], sizes = [64, 48], strides = [1, 1]} : vector<128x48xf32> to vector<64x48xf32>
    %169 = vector.extract_strided_slice %167 {offsets = [64, 0], sizes = [64, 48], strides = [1, 1]} : vector<128x48xf32> to vector<64x48xf32>
    %170 = vector.extract_strided_slice %169 {offsets = [0, 0], sizes = [64, 16], strides = [1, 1]} : vector<64x48xf32> to vector<64x16xf32>
    %cst_44 = arith.constant 0.000000e+00 : f32
    %171 = vector.broadcast %cst_44 : f32 to vector<8x16xf32>
    %172 = vector.extract_strided_slice %170 {offsets = [0, 0], sizes = [56, 16], strides = [1, 1]} : vector<64x16xf32> to vector<56x16xf32>
    %173 = tpu.concatenate %171, %172 in 0 : vector<8x16xf32>, vector<56x16xf32> -> vector<64x16xf32>
    %174 = vector.extract_strided_slice %168 {offsets = [0, 16], sizes = [64, 16], strides = [1, 1]} : vector<64x48xf32> to vector<64x16xf32>
    %175 = arith.addf %173, %174 : vector<64x16xf32>
    %176 = vector.extract_strided_slice %169 {offsets = [0, 32], sizes = [64, 16], strides = [1, 1]} : vector<64x48xf32> to vector<64x16xf32>
    %177 = arith.addf %175, %176 : vector<64x16xf32>
    %178 = vector.broadcast %141 : vector<1x16xf32> to vector<64x16xf32>
    %179 = arith.addf %177, %178 : vector<64x16xf32>
    %180 = vector.extract_strided_slice %168 {offsets = [0, 0], sizes = [64, 16], strides = [1, 1]} : vector<64x48xf32> to vector<64x16xf32>
    %181 = vector.extract_strided_slice %169 {offsets = [0, 16], sizes = [64, 16], strides = [1, 1]} : vector<64x48xf32> to vector<64x16xf32>
    %182 = arith.addf %180, %181 : vector<64x16xf32>
    %183 = vector.extract_strided_slice %168 {offsets = [0, 32], sizes = [64, 16], strides = [1, 1]} : vector<64x48xf32> to vector<64x16xf32>
    %184 = vector.extract_strided_slice %183 {offsets = [8, 0], sizes = [56, 16], strides = [1, 1]} : vector<64x16xf32> to vector<56x16xf32>
    %cst_45 = arith.constant 0.000000e+00 : f32
    %185 = vector.broadcast %cst_45 : f32 to vector<8x16xf32>
    %186 = tpu.concatenate %184, %185 in 0 : vector<56x16xf32>, vector<8x16xf32> -> vector<64x16xf32>
    %187 = arith.addf %182, %186 : vector<64x16xf32>
    %188 = vector.broadcast %141 : vector<1x16xf32> to vector<64x16xf32>
    %189 = arith.addf %187, %188 : vector<64x16xf32>
    %190 = arith.addf %179, %163 : vector<64x16xf32>
    %cst_46 = arith.constant 0.000000e+00 : f32
    %191 = vector.broadcast %cst_46 : f32 to vector<64x16xf32>
    %192 = arith.maximumf %190, %191 : vector<64x16xf32>
    %193 = vector.broadcast %142 : vector<1x16xf32> to vector<64x16xf32>
    %194 = arith.addf %189, %193 : vector<64x16xf32>
    %cst_47 = arith.constant 0.000000e+00 : f32
    %195 = vector.broadcast %cst_47 : f32 to vector<64x16xf32>
    %196 = arith.maximumf %194, %195 : vector<64x16xf32>
    %197 = vector.extract_strided_slice %192 {offsets = [0, 0], sizes = [8, 16], strides = [1, 1]} : vector<64x16xf32> to vector<8x16xf32>
    %198 = vector.extract_strided_slice %196 {offsets = [0, 0], sizes = [8, 16], strides = [1, 1]} : vector<64x16xf32> to vector<8x16xf32>
    %199 = vector.extract_strided_slice %192 {offsets = [8, 0], sizes = [8, 16], strides = [1, 1]} : vector<64x16xf32> to vector<8x16xf32>
    %200 = vector.extract_strided_slice %196 {offsets = [8, 0], sizes = [8, 16], strides = [1, 1]} : vector<64x16xf32> to vector<8x16xf32>
    %201 = vector.extract_strided_slice %192 {offsets = [16, 0], sizes = [8, 16], strides = [1, 1]} : vector<64x16xf32> to vector<8x16xf32>
    %202 = vector.extract_strided_slice %196 {offsets = [16, 0], sizes = [8, 16], strides = [1, 1]} : vector<64x16xf32> to vector<8x16xf32>
    %203 = vector.extract_strided_slice %192 {offsets = [24, 0], sizes = [8, 16], strides = [1, 1]} : vector<64x16xf32> to vector<8x16xf32>
    %204 = vector.extract_strided_slice %196 {offsets = [24, 0], sizes = [8, 16], strides = [1, 1]} : vector<64x16xf32> to vector<8x16xf32>
    %205 = vector.extract_strided_slice %192 {offsets = [32, 0], sizes = [8, 16], strides = [1, 1]} : vector<64x16xf32> to vector<8x16xf32>
    %206 = vector.extract_strided_slice %196 {offsets = [32, 0], sizes = [8, 16], strides = [1, 1]} : vector<64x16xf32> to vector<8x16xf32>
    %207 = vector.extract_strided_slice %192 {offsets = [40, 0], sizes = [8, 16], strides = [1, 1]} : vector<64x16xf32> to vector<8x16xf32>
    %208 = vector.extract_strided_slice %196 {offsets = [40, 0], sizes = [8, 16], strides = [1, 1]} : vector<64x16xf32> to vector<8x16xf32>
    %209 = vector.extract_strided_slice %192 {offsets = [48, 0], sizes = [8, 16], strides = [1, 1]} : vector<64x16xf32> to vector<8x16xf32>
    %210 = vector.extract_strided_slice %196 {offsets = [48, 0], sizes = [8, 16], strides = [1, 1]} : vector<64x16xf32> to vector<8x16xf32>
    %211 = vector.extract_strided_slice %192 {offsets = [56, 0], sizes = [8, 16], strides = [1, 1]} : vector<64x16xf32> to vector<8x16xf32>
    %212 = vector.extract_strided_slice %196 {offsets = [56, 0], sizes = [8, 16], strides = [1, 1]} : vector<64x16xf32> to vector<8x16xf32>
    %213 = tpu.concatenate %197, %198, %199, %200, %201, %202, %203, %204, %205, %206, %207, %208, %209, %210, %211, %212 in 0 : vector<8x16xf32>, vector<8x16xf32>, vector<8x16xf32>, vector<8x16xf32>, vector<8x16xf32>, vector<8x16xf32>, vector<8x16xf32>, vector<8x16xf32>, vector<8x16xf32>, vector<8x16xf32>, vector<8x16xf32>, vector<8x16xf32>, vector<8x16xf32>, vector<8x16xf32>, vector<8x16xf32>, vector<8x16xf32> -> vector<128x16xf32>
    %c10 = arith.constant 10 : index
    %c0_48 = arith.constant 0 : index
    %214 = vector.load %arg3[%c10, %c0_48] : memref<16x128xf32, #tpu.memory_space<vmem>>, vector<1x8xf32>
    %c11 = arith.constant 11 : index
    %c0_49 = arith.constant 0 : index
    %215 = vector.load %arg3[%c11, %c0_49] : memref<16x128xf32, #tpu.memory_space<vmem>>, vector<1x8xf32>
    %c12 = arith.constant 12 : index
    %c0_50 = arith.constant 0 : index
    %216 = vector.load %arg3[%c12, %c0_50] : memref<16x128xf32, #tpu.memory_space<vmem>>, vector<1x8xf32>
    %217 = arith.truncf %213 : vector<128x16xf32> to vector<128x16xbf16>
    %c304 = arith.constant 304 : index
    %c0_51 = arith.constant 0 : index
    %218 = vector.load %arg2[%c304, %c0_51] : memref<352x256xbf16, #tpu.memory_space<vmem>>, vector<16x32xbf16>
    %cst_52 = arith.constant dense<0.000000e+00> : vector<128x32xf32>
    %219 = tpu.matmul %217, %218, %cst_52 {dimension_numbers = #tpu.dot_dimension_numbers<[1], [0], [0], [1], [0, 0, 1, 1], [], []>} : vector<128x16xbf16>, vector<16x32xbf16>, vector<128x32xf32> -> vector<128x32xf32>
    %220 = vector.extract_strided_slice %219 {offsets = [0, 8], sizes = [128, 8], strides = [1, 1]} : vector<128x32xf32> to vector<128x8xf32>
    %221 = vector.broadcast %214 : vector<1x8xf32> to vector<128x8xf32>
    %222 = arith.addf %220, %221 : vector<128x8xf32>
    %cst_53 = arith.constant 0.000000e+00 : f32
    %223 = vector.broadcast %cst_53 : f32 to vector<128x8xf32>
    %224 = arith.maximumf %222, %223 : vector<128x8xf32>
    %225 = vector.extract_strided_slice %219 {offsets = [0, 0], sizes = [128, 8], strides = [1, 1]} : vector<128x32xf32> to vector<128x8xf32>
    %226 = vector.extract_strided_slice %225 {offsets = [8, 0], sizes = [120, 8], strides = [1, 1]} : vector<128x8xf32> to vector<120x8xf32>
    %cst_54 = arith.constant 0.000000e+00 : f32
    %227 = vector.broadcast %cst_54 : f32 to vector<8x8xf32>
    %228 = tpu.concatenate %226, %227 in 0 : vector<120x8xf32>, vector<8x8xf32> -> vector<128x8xf32>
    %229 = vector.extract_strided_slice %219 {offsets = [0, 16], sizes = [128, 8], strides = [1, 1]} : vector<128x32xf32> to vector<128x8xf32>
    %230 = arith.addf %228, %229 : vector<128x8xf32>
    %231 = vector.broadcast %214 : vector<1x8xf32> to vector<128x8xf32>
    %232 = arith.addf %230, %231 : vector<128x8xf32>
    %cst_55 = arith.constant 0.000000e+00 : f32
    %233 = vector.broadcast %cst_55 : f32 to vector<128x8xf32>
    %234 = arith.maximumf %232, %233 : vector<128x8xf32>
    %235 = vector.extract_strided_slice %219 {offsets = [0, 24], sizes = [128, 8], strides = [1, 1]} : vector<128x32xf32> to vector<128x8xf32>
    %236 = vector.broadcast %216 : vector<1x8xf32> to vector<128x8xf32>
    %237 = arith.addf %235, %236 : vector<128x8xf32>
    %238 = tpu.concatenate %224, %234 in 0 : vector<128x8xf32>, vector<128x8xf32> -> vector<256x8xf32>
    %239 = arith.truncf %238 : vector<256x8xf32> to vector<256x8xbf16>
    %c320 = arith.constant 320 : index
    %c0_56 = arith.constant 0 : index
    %240 = vector.load %arg2[%c320, %c0_56] : memref<352x256xbf16, #tpu.memory_space<vmem>>, vector<8x24xbf16>
    %cst_57 = arith.constant dense<0.000000e+00> : vector<256x24xf32>
    %241 = tpu.matmul %239, %240, %cst_57 {dimension_numbers = #tpu.dot_dimension_numbers<[1], [0], [0], [1], [0, 0, 1, 1], [], []>} : vector<256x8xbf16>, vector<8x24xbf16>, vector<256x24xf32> -> vector<256x24xf32>
    %242 = vector.extract_strided_slice %241 {offsets = [0, 0], sizes = [128, 24], strides = [1, 1]} : vector<256x24xf32> to vector<128x24xf32>
    %243 = vector.extract_strided_slice %241 {offsets = [128, 0], sizes = [128, 24], strides = [1, 1]} : vector<256x24xf32> to vector<128x24xf32>
    %244 = vector.extract_strided_slice %243 {offsets = [0, 0], sizes = [128, 8], strides = [1, 1]} : vector<128x24xf32> to vector<128x8xf32>
    %cst_58 = arith.constant 0.000000e+00 : f32
    %245 = vector.broadcast %cst_58 : f32 to vector<8x8xf32>
    %246 = vector.extract_strided_slice %244 {offsets = [0, 0], sizes = [120, 8], strides = [1, 1]} : vector<128x8xf32> to vector<120x8xf32>
    %247 = tpu.concatenate %245, %246 in 0 : vector<8x8xf32>, vector<120x8xf32> -> vector<128x8xf32>
    %248 = vector.extract_strided_slice %242 {offsets = [0, 8], sizes = [128, 8], strides = [1, 1]} : vector<128x24xf32> to vector<128x8xf32>
    %249 = arith.addf %247, %248 : vector<128x8xf32>
    %250 = vector.extract_strided_slice %243 {offsets = [0, 16], sizes = [128, 8], strides = [1, 1]} : vector<128x24xf32> to vector<128x8xf32>
    %251 = arith.addf %249, %250 : vector<128x8xf32>
    %252 = vector.broadcast %215 : vector<1x8xf32> to vector<128x8xf32>
    %253 = arith.addf %251, %252 : vector<128x8xf32>
    %254 = vector.extract_strided_slice %242 {offsets = [0, 0], sizes = [128, 8], strides = [1, 1]} : vector<128x24xf32> to vector<128x8xf32>
    %255 = vector.extract_strided_slice %243 {offsets = [0, 8], sizes = [128, 8], strides = [1, 1]} : vector<128x24xf32> to vector<128x8xf32>
    %256 = arith.addf %254, %255 : vector<128x8xf32>
    %257 = vector.extract_strided_slice %242 {offsets = [0, 16], sizes = [128, 8], strides = [1, 1]} : vector<128x24xf32> to vector<128x8xf32>
    %258 = vector.extract_strided_slice %257 {offsets = [8, 0], sizes = [120, 8], strides = [1, 1]} : vector<128x8xf32> to vector<120x8xf32>
    %cst_59 = arith.constant 0.000000e+00 : f32
    %259 = vector.broadcast %cst_59 : f32 to vector<8x8xf32>
    %260 = tpu.concatenate %258, %259 in 0 : vector<120x8xf32>, vector<8x8xf32> -> vector<128x8xf32>
    %261 = arith.addf %256, %260 : vector<128x8xf32>
    %262 = vector.broadcast %215 : vector<1x8xf32> to vector<128x8xf32>
    %263 = arith.addf %261, %262 : vector<128x8xf32>
    %264 = arith.addf %253, %237 : vector<128x8xf32>
    %cst_60 = arith.constant 0.000000e+00 : f32
    %265 = vector.broadcast %cst_60 : f32 to vector<128x8xf32>
    %266 = arith.maximumf %264, %265 : vector<128x8xf32>
    %267 = vector.broadcast %216 : vector<1x8xf32> to vector<128x8xf32>
    %268 = arith.addf %263, %267 : vector<128x8xf32>
    %cst_61 = arith.constant 0.000000e+00 : f32
    %269 = vector.broadcast %cst_61 : f32 to vector<128x8xf32>
    %270 = arith.maximumf %268, %269 : vector<128x8xf32>
    %271 = vector.extract_strided_slice %266 {offsets = [0, 0], sizes = [8, 8], strides = [1, 1]} : vector<128x8xf32> to vector<8x8xf32>
    %272 = vector.extract_strided_slice %270 {offsets = [0, 0], sizes = [8, 8], strides = [1, 1]} : vector<128x8xf32> to vector<8x8xf32>
    %273 = vector.extract_strided_slice %266 {offsets = [8, 0], sizes = [8, 8], strides = [1, 1]} : vector<128x8xf32> to vector<8x8xf32>
    %274 = vector.extract_strided_slice %270 {offsets = [8, 0], sizes = [8, 8], strides = [1, 1]} : vector<128x8xf32> to vector<8x8xf32>
    %275 = vector.extract_strided_slice %266 {offsets = [16, 0], sizes = [8, 8], strides = [1, 1]} : vector<128x8xf32> to vector<8x8xf32>
    %276 = vector.extract_strided_slice %270 {offsets = [16, 0], sizes = [8, 8], strides = [1, 1]} : vector<128x8xf32> to vector<8x8xf32>
    %277 = vector.extract_strided_slice %266 {offsets = [24, 0], sizes = [8, 8], strides = [1, 1]} : vector<128x8xf32> to vector<8x8xf32>
    %278 = vector.extract_strided_slice %270 {offsets = [24, 0], sizes = [8, 8], strides = [1, 1]} : vector<128x8xf32> to vector<8x8xf32>
    %279 = vector.extract_strided_slice %266 {offsets = [32, 0], sizes = [8, 8], strides = [1, 1]} : vector<128x8xf32> to vector<8x8xf32>
    %280 = vector.extract_strided_slice %270 {offsets = [32, 0], sizes = [8, 8], strides = [1, 1]} : vector<128x8xf32> to vector<8x8xf32>
    %281 = vector.extract_strided_slice %266 {offsets = [40, 0], sizes = [8, 8], strides = [1, 1]} : vector<128x8xf32> to vector<8x8xf32>
    %282 = vector.extract_strided_slice %270 {offsets = [40, 0], sizes = [8, 8], strides = [1, 1]} : vector<128x8xf32> to vector<8x8xf32>
    %283 = vector.extract_strided_slice %266 {offsets = [48, 0], sizes = [8, 8], strides = [1, 1]} : vector<128x8xf32> to vector<8x8xf32>
    %284 = vector.extract_strided_slice %270 {offsets = [48, 0], sizes = [8, 8], strides = [1, 1]} : vector<128x8xf32> to vector<8x8xf32>
    %285 = vector.extract_strided_slice %266 {offsets = [56, 0], sizes = [8, 8], strides = [1, 1]} : vector<128x8xf32> to vector<8x8xf32>
    %286 = vector.extract_strided_slice %270 {offsets = [56, 0], sizes = [8, 8], strides = [1, 1]} : vector<128x8xf32> to vector<8x8xf32>
    %287 = vector.extract_strided_slice %266 {offsets = [64, 0], sizes = [8, 8], strides = [1, 1]} : vector<128x8xf32> to vector<8x8xf32>
    %288 = vector.extract_strided_slice %270 {offsets = [64, 0], sizes = [8, 8], strides = [1, 1]} : vector<128x8xf32> to vector<8x8xf32>
    %289 = vector.extract_strided_slice %266 {offsets = [72, 0], sizes = [8, 8], strides = [1, 1]} : vector<128x8xf32> to vector<8x8xf32>
    %290 = vector.extract_strided_slice %270 {offsets = [72, 0], sizes = [8, 8], strides = [1, 1]} : vector<128x8xf32> to vector<8x8xf32>
    %291 = vector.extract_strided_slice %266 {offsets = [80, 0], sizes = [8, 8], strides = [1, 1]} : vector<128x8xf32> to vector<8x8xf32>
    %292 = vector.extract_strided_slice %270 {offsets = [80, 0], sizes = [8, 8], strides = [1, 1]} : vector<128x8xf32> to vector<8x8xf32>
    %293 = vector.extract_strided_slice %266 {offsets = [88, 0], sizes = [8, 8], strides = [1, 1]} : vector<128x8xf32> to vector<8x8xf32>
    %294 = vector.extract_strided_slice %270 {offsets = [88, 0], sizes = [8, 8], strides = [1, 1]} : vector<128x8xf32> to vector<8x8xf32>
    %295 = vector.extract_strided_slice %266 {offsets = [96, 0], sizes = [8, 8], strides = [1, 1]} : vector<128x8xf32> to vector<8x8xf32>
    %296 = vector.extract_strided_slice %270 {offsets = [96, 0], sizes = [8, 8], strides = [1, 1]} : vector<128x8xf32> to vector<8x8xf32>
    %297 = vector.extract_strided_slice %266 {offsets = [104, 0], sizes = [8, 8], strides = [1, 1]} : vector<128x8xf32> to vector<8x8xf32>
    %298 = vector.extract_strided_slice %270 {offsets = [104, 0], sizes = [8, 8], strides = [1, 1]} : vector<128x8xf32> to vector<8x8xf32>
    %299 = vector.extract_strided_slice %266 {offsets = [112, 0], sizes = [8, 8], strides = [1, 1]} : vector<128x8xf32> to vector<8x8xf32>
    %300 = vector.extract_strided_slice %270 {offsets = [112, 0], sizes = [8, 8], strides = [1, 1]} : vector<128x8xf32> to vector<8x8xf32>
    %301 = vector.extract_strided_slice %266 {offsets = [120, 0], sizes = [8, 8], strides = [1, 1]} : vector<128x8xf32> to vector<8x8xf32>
    %302 = vector.extract_strided_slice %270 {offsets = [120, 0], sizes = [8, 8], strides = [1, 1]} : vector<128x8xf32> to vector<8x8xf32>
    %303 = tpu.concatenate %271, %272, %273, %274, %275, %276, %277, %278, %279, %280, %281, %282, %283, %284, %285, %286 in 0 : vector<8x8xf32>, vector<8x8xf32>, vector<8x8xf32>, vector<8x8xf32>, vector<8x8xf32>, vector<8x8xf32>, vector<8x8xf32>, vector<8x8xf32>, vector<8x8xf32>, vector<8x8xf32>, vector<8x8xf32>, vector<8x8xf32>, vector<8x8xf32>, vector<8x8xf32>, vector<8x8xf32>, vector<8x8xf32> -> vector<128x8xf32>
    %304 = tpu.concatenate %287, %288, %289, %290, %291, %292, %293, %294, %295, %296, %297, %298, %299, %300, %301, %302 in 0 : vector<8x8xf32>, vector<8x8xf32>, vector<8x8xf32>, vector<8x8xf32>, vector<8x8xf32>, vector<8x8xf32>, vector<8x8xf32>, vector<8x8xf32>, vector<8x8xf32>, vector<8x8xf32>, vector<8x8xf32>, vector<8x8xf32>, vector<8x8xf32>, vector<8x8xf32>, vector<8x8xf32>, vector<8x8xf32> -> vector<128x8xf32>
    %305 = tpu.concatenate %303, %304 in 0 : vector<128x8xf32>, vector<128x8xf32> -> vector<256x8xf32>
    %306 = arith.truncf %305 : vector<256x8xf32> to vector<256x8xbf16>
    %c336 = arith.constant 336 : index
    %c0_62 = arith.constant 0 : index
    %307 = vector.load %arg2[%c336, %c0_62] : memref<352x256xbf16, #tpu.memory_space<vmem>>, vector<8x12xbf16>
    %cst_63 = arith.constant dense<0.000000e+00> : vector<256x12xf32>
    %308 = tpu.matmul %306, %307, %cst_63 {dimension_numbers = #tpu.dot_dimension_numbers<[1], [0], [0], [1], [0, 0, 1, 1], [], []>} : vector<256x8xbf16>, vector<8x12xbf16>, vector<256x12xf32> -> vector<256x12xf32>
    %309 = vector.extract_strided_slice %308 {offsets = [0, 0], sizes = [256, 4], strides = [1, 1]} : vector<256x12xf32> to vector<256x4xf32>
    %310 = vector.extract_strided_slice %308 {offsets = [0, 4], sizes = [256, 4], strides = [1, 1]} : vector<256x12xf32> to vector<256x4xf32>
    %311 = vector.extract_strided_slice %308 {offsets = [0, 8], sizes = [256, 4], strides = [1, 1]} : vector<256x12xf32> to vector<256x4xf32>
    %312 = vector.extract_strided_slice %309 {offsets = [24, 0], sizes = [208, 4], strides = [1, 1]} : vector<256x4xf32> to vector<208x4xf32>
    %313 = vector.extract_strided_slice %311 {offsets = [16, 0], sizes = [208, 4], strides = [1, 1]} : vector<256x4xf32> to vector<208x4xf32>
    %314 = arith.addf %312, %313 : vector<208x4xf32>
    %315 = vector.extract_strided_slice %310 {offsets = [24, 0], sizes = [208, 4], strides = [1, 1]} : vector<256x4xf32> to vector<208x4xf32>
    %316 = vector.extract_strided_slice %314 {offsets = [0, 0], sizes = [8, 4], strides = [1, 1]} : vector<208x4xf32> to vector<8x4xf32>
    %317 = vector.extract_strided_slice %315 {offsets = [0, 0], sizes = [8, 4], strides = [1, 1]} : vector<208x4xf32> to vector<8x4xf32>
    %318 = vector.extract_strided_slice %314 {offsets = [8, 0], sizes = [8, 4], strides = [1, 1]} : vector<208x4xf32> to vector<8x4xf32>
    %319 = vector.extract_strided_slice %315 {offsets = [8, 0], sizes = [8, 4], strides = [1, 1]} : vector<208x4xf32> to vector<8x4xf32>
    %320 = vector.extract_strided_slice %314 {offsets = [16, 0], sizes = [8, 4], strides = [1, 1]} : vector<208x4xf32> to vector<8x4xf32>
    %321 = vector.extract_strided_slice %315 {offsets = [16, 0], sizes = [8, 4], strides = [1, 1]} : vector<208x4xf32> to vector<8x4xf32>
    %322 = vector.extract_strided_slice %314 {offsets = [24, 0], sizes = [8, 4], strides = [1, 1]} : vector<208x4xf32> to vector<8x4xf32>
    %323 = vector.extract_strided_slice %315 {offsets = [24, 0], sizes = [8, 4], strides = [1, 1]} : vector<208x4xf32> to vector<8x4xf32>
    %324 = vector.extract_strided_slice %314 {offsets = [32, 0], sizes = [8, 4], strides = [1, 1]} : vector<208x4xf32> to vector<8x4xf32>
    %325 = vector.extract_strided_slice %315 {offsets = [32, 0], sizes = [8, 4], strides = [1, 1]} : vector<208x4xf32> to vector<8x4xf32>
    %326 = vector.extract_strided_slice %314 {offsets = [40, 0], sizes = [8, 4], strides = [1, 1]} : vector<208x4xf32> to vector<8x4xf32>
    %327 = vector.extract_strided_slice %315 {offsets = [40, 0], sizes = [8, 4], strides = [1, 1]} : vector<208x4xf32> to vector<8x4xf32>
    %328 = vector.extract_strided_slice %314 {offsets = [48, 0], sizes = [8, 4], strides = [1, 1]} : vector<208x4xf32> to vector<8x4xf32>
    %329 = vector.extract_strided_slice %315 {offsets = [48, 0], sizes = [8, 4], strides = [1, 1]} : vector<208x4xf32> to vector<8x4xf32>
    %330 = vector.extract_strided_slice %314 {offsets = [56, 0], sizes = [8, 4], strides = [1, 1]} : vector<208x4xf32> to vector<8x4xf32>
    %331 = vector.extract_strided_slice %315 {offsets = [56, 0], sizes = [8, 4], strides = [1, 1]} : vector<208x4xf32> to vector<8x4xf32>
    %332 = vector.extract_strided_slice %314 {offsets = [64, 0], sizes = [8, 4], strides = [1, 1]} : vector<208x4xf32> to vector<8x4xf32>
    %333 = vector.extract_strided_slice %315 {offsets = [64, 0], sizes = [8, 4], strides = [1, 1]} : vector<208x4xf32> to vector<8x4xf32>
    %334 = vector.extract_strided_slice %314 {offsets = [72, 0], sizes = [8, 4], strides = [1, 1]} : vector<208x4xf32> to vector<8x4xf32>
    %335 = vector.extract_strided_slice %315 {offsets = [72, 0], sizes = [8, 4], strides = [1, 1]} : vector<208x4xf32> to vector<8x4xf32>
    %336 = vector.extract_strided_slice %314 {offsets = [80, 0], sizes = [8, 4], strides = [1, 1]} : vector<208x4xf32> to vector<8x4xf32>
    %337 = vector.extract_strided_slice %315 {offsets = [80, 0], sizes = [8, 4], strides = [1, 1]} : vector<208x4xf32> to vector<8x4xf32>
    %338 = vector.extract_strided_slice %314 {offsets = [88, 0], sizes = [8, 4], strides = [1, 1]} : vector<208x4xf32> to vector<8x4xf32>
    %339 = vector.extract_strided_slice %315 {offsets = [88, 0], sizes = [8, 4], strides = [1, 1]} : vector<208x4xf32> to vector<8x4xf32>
    %340 = vector.extract_strided_slice %314 {offsets = [96, 0], sizes = [8, 4], strides = [1, 1]} : vector<208x4xf32> to vector<8x4xf32>
    %341 = vector.extract_strided_slice %315 {offsets = [96, 0], sizes = [8, 4], strides = [1, 1]} : vector<208x4xf32> to vector<8x4xf32>
    %342 = vector.extract_strided_slice %314 {offsets = [104, 0], sizes = [8, 4], strides = [1, 1]} : vector<208x4xf32> to vector<8x4xf32>
    %343 = vector.extract_strided_slice %315 {offsets = [104, 0], sizes = [8, 4], strides = [1, 1]} : vector<208x4xf32> to vector<8x4xf32>
    %344 = vector.extract_strided_slice %314 {offsets = [112, 0], sizes = [8, 4], strides = [1, 1]} : vector<208x4xf32> to vector<8x4xf32>
    %345 = vector.extract_strided_slice %315 {offsets = [112, 0], sizes = [8, 4], strides = [1, 1]} : vector<208x4xf32> to vector<8x4xf32>
    %346 = vector.extract_strided_slice %314 {offsets = [120, 0], sizes = [8, 4], strides = [1, 1]} : vector<208x4xf32> to vector<8x4xf32>
    %347 = vector.extract_strided_slice %315 {offsets = [120, 0], sizes = [8, 4], strides = [1, 1]} : vector<208x4xf32> to vector<8x4xf32>
    %348 = vector.extract_strided_slice %314 {offsets = [128, 0], sizes = [8, 4], strides = [1, 1]} : vector<208x4xf32> to vector<8x4xf32>
    %349 = vector.extract_strided_slice %315 {offsets = [128, 0], sizes = [8, 4], strides = [1, 1]} : vector<208x4xf32> to vector<8x4xf32>
    %350 = vector.extract_strided_slice %314 {offsets = [136, 0], sizes = [8, 4], strides = [1, 1]} : vector<208x4xf32> to vector<8x4xf32>
    %351 = vector.extract_strided_slice %315 {offsets = [136, 0], sizes = [8, 4], strides = [1, 1]} : vector<208x4xf32> to vector<8x4xf32>
    %352 = vector.extract_strided_slice %314 {offsets = [144, 0], sizes = [8, 4], strides = [1, 1]} : vector<208x4xf32> to vector<8x4xf32>
    %353 = vector.extract_strided_slice %315 {offsets = [144, 0], sizes = [8, 4], strides = [1, 1]} : vector<208x4xf32> to vector<8x4xf32>
    %354 = vector.extract_strided_slice %314 {offsets = [152, 0], sizes = [8, 4], strides = [1, 1]} : vector<208x4xf32> to vector<8x4xf32>
    %355 = vector.extract_strided_slice %315 {offsets = [152, 0], sizes = [8, 4], strides = [1, 1]} : vector<208x4xf32> to vector<8x4xf32>
    %356 = vector.extract_strided_slice %314 {offsets = [160, 0], sizes = [8, 4], strides = [1, 1]} : vector<208x4xf32> to vector<8x4xf32>
    %357 = vector.extract_strided_slice %315 {offsets = [160, 0], sizes = [8, 4], strides = [1, 1]} : vector<208x4xf32> to vector<8x4xf32>
    %358 = vector.extract_strided_slice %314 {offsets = [168, 0], sizes = [8, 4], strides = [1, 1]} : vector<208x4xf32> to vector<8x4xf32>
    %359 = vector.extract_strided_slice %315 {offsets = [168, 0], sizes = [8, 4], strides = [1, 1]} : vector<208x4xf32> to vector<8x4xf32>
    %360 = vector.extract_strided_slice %314 {offsets = [176, 0], sizes = [8, 4], strides = [1, 1]} : vector<208x4xf32> to vector<8x4xf32>
    %361 = vector.extract_strided_slice %315 {offsets = [176, 0], sizes = [8, 4], strides = [1, 1]} : vector<208x4xf32> to vector<8x4xf32>
    %362 = vector.extract_strided_slice %314 {offsets = [184, 0], sizes = [8, 4], strides = [1, 1]} : vector<208x4xf32> to vector<8x4xf32>
    %363 = vector.extract_strided_slice %315 {offsets = [184, 0], sizes = [8, 4], strides = [1, 1]} : vector<208x4xf32> to vector<8x4xf32>
    %364 = vector.extract_strided_slice %314 {offsets = [192, 0], sizes = [8, 4], strides = [1, 1]} : vector<208x4xf32> to vector<8x4xf32>
    %365 = vector.extract_strided_slice %315 {offsets = [192, 0], sizes = [8, 4], strides = [1, 1]} : vector<208x4xf32> to vector<8x4xf32>
    %366 = vector.extract_strided_slice %314 {offsets = [200, 0], sizes = [8, 4], strides = [1, 1]} : vector<208x4xf32> to vector<8x4xf32>
    %367 = vector.extract_strided_slice %315 {offsets = [200, 0], sizes = [8, 4], strides = [1, 1]} : vector<208x4xf32> to vector<8x4xf32>
    %368 = tpu.concatenate %316, %317, %318, %319, %320, %321, %322, %323, %324, %325, %326, %327, %328, %329, %330, %331 in 0 : vector<8x4xf32>, vector<8x4xf32>, vector<8x4xf32>, vector<8x4xf32>, vector<8x4xf32>, vector<8x4xf32>, vector<8x4xf32>, vector<8x4xf32>, vector<8x4xf32>, vector<8x4xf32>, vector<8x4xf32>, vector<8x4xf32>, vector<8x4xf32>, vector<8x4xf32>, vector<8x4xf32>, vector<8x4xf32> -> vector<128x4xf32>
    %369 = tpu.concatenate %332, %333, %334, %335, %336, %337, %338, %339, %340, %341, %342, %343, %344, %345, %346, %347 in 0 : vector<8x4xf32>, vector<8x4xf32>, vector<8x4xf32>, vector<8x4xf32>, vector<8x4xf32>, vector<8x4xf32>, vector<8x4xf32>, vector<8x4xf32>, vector<8x4xf32>, vector<8x4xf32>, vector<8x4xf32>, vector<8x4xf32>, vector<8x4xf32>, vector<8x4xf32>, vector<8x4xf32>, vector<8x4xf32> -> vector<128x4xf32>
    %370 = tpu.concatenate %348, %349, %350, %351, %352, %353, %354, %355, %356, %357, %358, %359, %360, %361, %362, %363 in 0 : vector<8x4xf32>, vector<8x4xf32>, vector<8x4xf32>, vector<8x4xf32>, vector<8x4xf32>, vector<8x4xf32>, vector<8x4xf32>, vector<8x4xf32>, vector<8x4xf32>, vector<8x4xf32>, vector<8x4xf32>, vector<8x4xf32>, vector<8x4xf32>, vector<8x4xf32>, vector<8x4xf32>, vector<8x4xf32> -> vector<128x4xf32>
    %371 = tpu.concatenate %364, %365, %366, %367 in 0 : vector<8x4xf32>, vector<8x4xf32>, vector<8x4xf32>, vector<8x4xf32> -> vector<32x4xf32>
    %372 = tpu.concatenate %368, %369, %370, %371 in 0 : vector<128x4xf32>, vector<128x4xf32>, vector<128x4xf32>, vector<32x4xf32> -> vector<416x4xf32>
    %c0_64 = arith.constant 0 : index
    %c0_65 = arith.constant 0 : index
    %373 = vector.load %arg4[%c0_64, %c0_65] : memref<416x4xf32, #tpu.memory_space<vmem>>, vector<416x4xf32>
    tpu.vector_store %arg4[%c0_64, %c0_65], %372 {strides = array<i32>} : memref<416x4xf32, #tpu.memory_space<vmem>>, vector<416x4xf32>,
    return
  }
  func.func @transform_0(%arg0: i32) -> (i32, i32) {
    %c0_i32 = arith.constant 0 : i32
    %c0_i32_0 = arith.constant 0 : i32
    return %arg0, %c0_i32 : i32, i32
  }
  func.func @transform_1(%arg0: i32) -> (i32, i32) {
    %c0_i32 = arith.constant 0 : i32
    %c0_i32_0 = arith.constant 0 : i32
    %c0_i32_1 = arith.constant 0 : i32
    return %c0_i32, %c0_i32_0 : i32, i32
  }
  func.func @transform_2(%arg0: i32) -> (i32, i32) {
    %c0_i32 = arith.constant 0 : i32
    %c0_i32_0 = arith.constant 0 : i32
    %c0_i32_1 = arith.constant 0 : i32
    return %c0_i32, %c0_i32_0 : i32, i32
  }
  func.func @transform_3(%arg0: i32) -> (i32, i32) {
    %c0_i32 = arith.constant 0 : i32
    %c0_i32_0 = arith.constant 0 : i32
    return %arg0, %c0_i32 : i32, i32
  }
}

</mosaic_0001>

<llo_original>
// kernel: resnet_decoder_forward.1
$region0: #{resnet_decoder_forward.1}
  #allocation0 [shape = 'u32[]', space=smem, size = 0x4, offset = 0x4, fixed_abs, tag = 'smem constant byte address 0x4 - core index']
  #allocation1 [shape = 'u32[144,128]{1,0:T(1,128)}', space=vmem, size = 0x12000, scoped, tag = 'internal scratch']
  %s0 = inlined_call_operand.vmem [shape: f32[8,32], index: 0, kind: input, shape index: {}]
  %s1 = inlined_call_operand.vmem [shape: bf16[352,256], index: 1, kind: input, shape index: {}]
  %s2 = inlined_call_operand.vmem [shape: f32[16,128], index: 2, kind: input, shape index: {}]
  %s3 = inlined_call_operand.vmem [shape: f32[416,4], index: 3, kind: output, shape index: {}]
  %s4 = sld [smem:[#allocation0]]
  $region22: #{resnet_decoder_forward.1} parent=0
    _
  %s6 = ssub.s32 1, %s4
  %s7 = scalar_select 0, %s6, %s4
  // Predicated region
  $region2: #{resnet_decoder_forward.1} parent=0 // pred_check
    _
  $region3: #{resnet_decoder_forward.1} parent=0 // pred_check_branch
    %9 = sbr.rel (0) target = $region5
  $region4: #{resnet_decoder_forward.1} parent=0 // pred_region
    _
  $region5: #{resnet_decoder_forward.1} parent=0 // pred_fallthru
    _
  // Predicated region
  $region6: #{resnet_decoder_forward.1} parent=0 // pred_check
    _
  $region7: #{resnet_decoder_forward.1} parent=0 // pred_check_branch
    %11 = sbr.rel (0) target = $region9
  $region8: #{resnet_decoder_forward.1} parent=0 // pred_region
    _
  $region9: #{resnet_decoder_forward.1} parent=0 // pred_fallthru
    _
  // Predicated region
  $region10: #{resnet_decoder_forward.1} parent=0 // pred_check
    _
  $region11: #{resnet_decoder_forward.1} parent=0 // pred_check_branch
    %13 = sbr.rel (0) target = $region13
  $region12: #{resnet_decoder_forward.1} parent=0 // pred_region
    _
  $region13: #{resnet_decoder_forward.1} parent=0 // pred_fallthru
    _
  %v15 = vld [vmem:[%s0] sm:$0xff]
  %v16 = vpack.c.bf16 %v15, %v15
  %v17 = vld [vmem:[%s1] sm:$0xf]
  %v18 = vld [vmem:[%s1 + $0x8] sm:$0xf]
  %v19 = vld [vmem:[%s1 + $0x10] sm:$0xf]
  %v20 = vld [vmem:[%s1 + $0x18] sm:$0xf]
  %v21 = vld [vmem:[%s2] sm:$0x1]
  %v22 = vlaneseq
  %v23 = vshrl.u32 %v22, 7
  %v24 = vsub.s32 0, %v23
  %v25 = vrot.slane %v21, %v24
  %v30 = vunpack.c.l.b16 %v17
  %v31 = vunpack.c.l.b16 %v18
  %v32 = vunpack.c.l.b16 %v19
  %v33 = vunpack.c.l.b16 %v20
  %v34 = vpack.c.b16 %v31, %v30
  %v35 = vpack.c.b16 %v33, %v32
  %vm38 = vcmask 261120
  %v40 = vsel %vm38, %v16, 0
  %42 = vmatprep.subr.bf16.mxu0 0
  %43 = vmatpush1.bf16.msra.mxu0 %v34
  %44 = vmatprep.subr.bf16.mxu0 0
  %45 = vmatpush1.bf16.msra.mxu0 %v35
  %46 = vmatprep.subr.bf16.mxu0 0
  %47 = vmatpush1.bf16.msra.mxu0 0
  %48 = vmatprep.subr.bf16.mxu0 0
  %49 = vmatpush1.bf16.msra.mxu0 0
  %50 = vmatprep.subr.bf16.mxu0 0
  %51 = vmatpush1.bf16.msra.mxu0 0
  %52 = vmatprep.subr.bf16.mxu0 0
  %53 = vmatpush1.bf16.msra.mxu0 0
  %54 = vmatprep.subr.bf16.mxu0 0
  %55 = vmatpush1.bf16.msra.mxu0 0
  %56 = vmatprep.subr.bf16.mxu0 0
  %57 = vmatpush1.bf16.msra.mxu0 0
  %58 = vmatprep.subr.bf16.mxu0 0
  %59 = vmatpush1.bf16.msra.mxu0 0
  %60 = vmatprep.subr.bf16.mxu0 0
  %61 = vmatpush1.bf16.msra.mxu0 0
  %62 = vmatprep.subr.bf16.mxu0 0
  %63 = vmatpush1.bf16.msra.mxu0 0
  %64 = vmatprep.subr.bf16.mxu0 0
  %65 = vmatpush1.bf16.msra.mxu0 0
  %66 = vmatprep.subr.bf16.mxu0 0
  %67 = vmatpush1.bf16.msra.mxu0 0
  %68 = vmatprep.subr.bf16.mxu0 0
  %69 = vmatpush1.bf16.msra.mxu0 0
  %70 = vmatprep.subr.bf16.mxu0 0
  %71 = vmatpush1.bf16.msra.mxu0 0
  %72 = vmatprep.subr.bf16.mxu0 0
  %73 = vmatpush1.bf16.msra.mxu0 0
  %74 = vmatprep.mubr.bf16.mxu0 0
  %75 = vmatmul.mubr.bf16.gmra.mrb[0].mxu0 %v40
  %v76 = vpop.f32.mrb[0].mxu0
  %v77 = vadd.f32 %v25, %v76
  %v78 = vpop.f32.mrb[0].mxu0
  %v79 = vpop.f32.mrb[0].mxu0
  %v80 = vpop.f32.mrb[0].mxu0
  %81 = vdwg.mxu0
  %v82 = vmax.f32 %v77, 0.0
  %84 = vrot.lane.b32.xlu0 %v82, 64
  %v85 = vpop.permute.xlu0 %84
  %v87 = vld [vmem:[%s2 + $0x1] sm:$0x1]
  %v88 = vld [vmem:[%s2 + $0x2] sm:$0x1]
  %v89 = vld [vmem:[%s2 + $0x3] sm:$0x1]
  %v90 = vpack.c.bf16 %v85, %v82
  %v91 = vld [vmem:[%s1 + $0x20] sm:$0xff]
  %v92 = vld [vmem:[%s1 + $0x28] sm:$0xff]
  %v93 = vld [vmem:[%s1 + $0x30] sm:$0xff]
  %v94 = vld [vmem:[%s1 + $0x38] sm:$0xff]
  %v95 = vld [vmem:[%s1 + $0x40] sm:$0xff]
  %v96 = vld [vmem:[%s1 + $0x48] sm:$0xff]
  %v97 = vld [vmem:[%s1 + $0x50] sm:$0xff]
  %v98 = vld [vmem:[%s1 + $0x58] sm:$0xff]
  %v107 = vunpack.c.l.b16 %v91
  %v108 = vunpack.c.h.b16 %v91
  %v109 = vunpack.c.l.b16 %v92
  %v110 = vunpack.c.h.b16 %v92
  %v111 = vunpack.c.l.b16 %v93
  %v112 = vunpack.c.h.b16 %v93
  %v113 = vunpack.c.l.b16 %v94
  %v114 = vunpack.c.h.b16 %v94
  %v115 = vunpack.c.l.b16 %v95
  %v116 = vunpack.c.h.b16 %v95
  %v117 = vunpack.c.l.b16 %v96
  %v118 = vunpack.c.h.b16 %v96
  %v119 = vunpack.c.l.b16 %v97
  %v120 = vunpack.c.h.b16 %v97
  %v121 = vunpack.c.l.b16 %v98
  %v122 = vunpack.c.h.b16 %v98
  %v123 = vpack.c.b16 %v109, %v107
  %v124 = vpack.c.b16 %v110, %v108
  %v125 = vpack.c.b16 %v113, %v111
  %v126 = vpack.c.b16 %v114, %v112
  %v127 = vpack.c.b16 %v117, %v115
  %v128 = vpack.c.b16 %v118, %v116
  %v129 = vpack.c.b16 %v121, %v119
  %v130 = vpack.c.b16 %v122, %v120
  %vm139 = vcmask 523264
  %v141 = vsel %vm139, %v90, 0
  %143 = vmatprep.subr.bf16.mxu0 %v124
  %144 = vmatpush1.bf16.msra.mxu0 %v123
  %145 = vmatprep.subr.bf16.mxu0 %v126
  %146 = vmatpush1.bf16.msra.mxu0 %v125
  %147 = vmatprep.subr.bf16.mxu0 %v128
  %148 = vmatpush1.bf16.msra.mxu0 %v127
  %149 = vmatprep.subr.bf16.mxu0 %v130
  %150 = vmatpush1.bf16.msra.mxu0 %v129
  %151 = vmatprep.subr.bf16.mxu0 0
  %152 = vmatpush1.bf16.msra.mxu0 0
  %153 = vmatprep.subr.bf16.mxu0 0
  %154 = vmatpush1.bf16.msra.mxu0 0
  %155 = vmatprep.subr.bf16.mxu0 0
  %156 = vmatpush1.bf16.msra.mxu0 0
  %157 = vmatprep.subr.bf16.mxu0 0
  %158 = vmatpush1.bf16.msra.mxu0 0
  %159 = vmatprep.subr.bf16.mxu0 0
  %160 = vmatpush1.bf16.msra.mxu0 0
  %161 = vmatprep.subr.bf16.mxu0 0
  %162 = vmatpush1.bf16.msra.mxu0 0
  %163 = vmatprep.subr.bf16.mxu0 0
  %164 = vmatpush1.bf16.msra.mxu0 0
  %165 = vmatprep.subr.bf16.mxu0 0
  %166 = vmatpush1.bf16.msra.mxu0 0
  %167 = vmatprep.subr.bf16.mxu0 0
  %168 = vmatpush1.bf16.msra.mxu0 0
  %169 = vmatprep.subr.bf16.mxu0 0
  %170 = vmatpush1.bf16.msra.mxu0 0
  %171 = vmatprep.subr.bf16.mxu0 0
  %172 = vmatpush1.bf16.msra.mxu0 0
  %173 = vmatprep.subr.bf16.mxu0 0
  %174 = vmatpush1.bf16.msra.mxu0 0
  %175 = vmatprep.mubr.bf16.mxu0 0
  %176 = vmatmul.mubr.bf16.gmra.mrb[0].mxu0 %v141
  %v177 = vpop.f32.mrb[0].mxu0
  %v178 = vadd.f32 0.0, %v177
  %v179 = vpop.f32.mrb[0].mxu0
  %v180 = vadd.f32 0.0, %v179
  %v181 = vpop.f32.mrb[0].mxu0
  %v182 = vadd.f32 0.0, %v181
  %v183 = vpop.f32.mrb[0].mxu0
  %v184 = vadd.f32 0.0, %v183
  %185 = vdwg.mxu0
  %v186 = vlaneseq
  %v187 = vshrl.u32 %v186, 7
  %v188 = vsub.s32 0, %v187
  %v189 = vrot.slane %v87, %v188
  %191 = vrot.lane.b32.xlu0 %v189, 64
  %v192 = vpop.permute.xlu0 %191
  %v194 = vadd.f32 %v178, %v192
  %v195 = vadd.f32 %v182, %v192
  %v196 = vmax.f32 %v194, 0.0
  %v197 = vmax.f32 %v195, 0.0
  %v198 = vadd.f32 %v182, %v180
  %v199 = vadd.f32 %v184, 0.0
  %v200 = vadd.f32 %v198, %v189
  %v201 = vadd.f32 %v199, %v189
  %v202 = vmax.f32 %v200, 0.0
  %v203 = vmax.f32 %v201, 0.0
  %v204 = vlaneseq
  %v205 = vshrl.u32 %v204, 7
  %v206 = vsub.s32 0, %v205
  %v207 = vrot.slane %v89, %v206
  %209 = vrot.lane.b32.xlu0 %v207, 64
  %v210 = vpop.permute.xlu0 %209
  %v212 = vadd.f32 %v180, %v210
  %v213 = vadd.f32 %v184, %v210
  %216 = vrot.lane.b32.xlu0 %v202, 64
  %v217 = vpop.permute.xlu0 %216
  %218 = vrot.lane.b32.xlu0 %v203, 64
  %v219 = vpop.permute.xlu0 %218
  %v222 = vpack.c.bf16 %v197, %v196
  %v223 = vpack.c.bf16 %v219, %v217
  %v224 = vld [vmem:[%s1 + $0x60] sm:$0xff]
  %v225 = vld [vmem:[%s1 + $0x68] sm:$0xff]
  %v226 = vld [vmem:[%s1 + $0x70] sm:$0xff]
  %v227 = vld [vmem:[%s1 + $0x78] sm:$0xff]
  %v228 = vld [vmem:[%s1 + $0x80] sm:$0xff]
  %v229 = vld [vmem:[%s1 + $0x88] sm:$0xff]
  %v230 = vld [vmem:[%s1 + $0x90] sm:$0xff]
  %v231 = vld [vmem:[%s1 + $0x98] sm:$0xff]
  %234 = vrot.lane.b32.xlu0 %v222, 64
  %v235 = vpop.permute.xlu0 %234
  %236 = vrot.lane.b32.xlu0 %v223, 64
  %v237 = vpop.permute.xlu0 %236
  %v246 = vunpack.c.l.b16 %v224
  %v247 = vunpack.c.h.b16 %v224
  %v248 = vunpack.c.l.b16 %v225
  %v249 = vunpack.c.h.b16 %v225
  %v250 = vunpack.c.l.b16 %v226
  %v251 = vunpack.c.h.b16 %v226
  %v252 = vunpack.c.l.b16 %v227
  %v253 = vunpack.c.h.b16 %v227
  %v254 = vunpack.c.l.b16 %v228
  %v255 = vunpack.c.h.b16 %v228
  %v256 = vunpack.c.l.b16 %v229
  %v257 = vunpack.c.h.b16 %v229
  %v258 = vunpack.c.l.b16 %v230
  %v259 = vunpack.c.h.b16 %v230
  %v260 = vunpack.c.l.b16 %v231
  %v261 = vunpack.c.h.b16 %v231
  %v262 = vpack.c.b16 %v248, %v246
  %v263 = vpack.c.b16 %v249, %v247
  %v264 = vpack.c.b16 %v252, %v250
  %v265 = vpack.c.b16 %v253, %v251
  %v266 = vpack.c.b16 %v256, %v254
  %v267 = vpack.c.b16 %v257, %v255
  %v268 = vpack.c.b16 %v260, %v258
  %v269 = vpack.c.b16 %v261, %v259
  %v279 = vsel %vm139, %v235, 0
  %v282 = vsel %vm139, %v237, 0
  %284 = vmatprep.subr.bf16.mxu0 %v263
  %285 = vmatpush1.bf16.msra.mxu0 %v262
  %286 = vmatprep.subr.bf16.mxu0 %v265
  %287 = vmatpush1.bf16.msra.mxu0 %v264
  %288 = vmatprep.subr.bf16.mxu0 %v267
  %289 = vmatpush1.bf16.msra.mxu0 %v266
  %290 = vmatprep.subr.bf16.mxu0 %v269
  %291 = vmatpush1.bf16.msra.mxu0 %v268
  %292 = vmatprep.subr.bf16.mxu0 0
  %293 = vmatpush1.bf16.msra.mxu0 0
  %294 = vmatprep.subr.bf16.mxu0 0
  %295 = vmatpush1.bf16.msra.mxu0 0
  %296 = vmatprep.subr.bf16.mxu0 0
  %297 = vmatpush1.bf16.msra.mxu0 0
  %298 = vmatprep.subr.bf16.mxu0 0
  %299 = vmatpush1.bf16.msra.mxu0 0
  %300 = vmatprep.subr.bf16.mxu0 0
  %301 = vmatpush1.bf16.msra.mxu0 0
  %302 = vmatprep.subr.bf16.mxu0 0
  %303 = vmatpush1.bf16.msra.mxu0 0
  %304 = vmatprep.subr.bf16.mxu0 0
  %305 = vmatpush1.bf16.msra.mxu0 0
  %306 = vmatprep.subr.bf16.mxu0 0
  %307 = vmatpush1.bf16.msra.mxu0 0
  %308 = vmatprep.subr.bf16.mxu0 0
  %309 = vmatpush1.bf16.msra.mxu0 0
  %310 = vmatprep.subr.bf16.mxu0 0
  %311 = vmatpush1.bf16.msra.mxu0 0
  %312 = vmatprep.subr.bf16.mxu0 0
  %313 = vmatpush1.bf16.msra.mxu0 0
  %314 = vmatprep.subr.bf16.mxu0 0
  %315 = vmatpush1.bf16.msra.mxu0 0
  %316 = vmatprep.mubr.bf16.mxu0 0
  %317 = vmatmul.mubr.bf16.gmra.mrb[0].mxu0 %v279
  %v318 = vpop.f32.mrb[0].mxu0
  %v319 = vadd.f32 0.0, %v318
  %v320 = vpop.f32.mrb[0].mxu0
  %v321 = vpop.f32.mrb[0].mxu0
  %v322 = vadd.f32 0.0, %v321
  %v323 = vpop.f32.mrb[0].mxu0
  %v324 = vadd.f32 0.0, %v323
  %325 = vmatprep.mubr.bf16.mxu0 0
  %326 = vmatmul.mubr.bf16.gmra.mrb[0].mxu0 %v282
  %v327 = vpop.f32.mrb[0].mxu0
  %v328 = vadd.f32 0.0, %v327
  %v329 = vpop.f32.mrb[0].mxu0
  %v330 = vadd.f32 0.0, %v329
  %v331 = vpop.f32.mrb[0].mxu0
  %v332 = vadd.f32 0.0, %v331
  %v333 = vpop.f32.mrb[0].mxu0
  %v334 = vadd.f32 0.0, %v333
  %335 = vdwg.mxu0
  %338 = vrot.lane.b32.xlu0 %v319, 64
  %v339 = vpop.permute.xlu0 %338
  %340 = vrot.lane.b32.xlu0 %v322, 64
  %v341 = vpop.permute.xlu0 %340
  %v344 = vadd.f32 %v339, 0.0
  %v345 = vadd.f32 %v328, %v341
  %v346 = vadd.f32 %v344, %v330
  %v347 = vadd.f32 %v345, %v334
  %v348 = vlaneseq
  %v349 = vshrl.u32 %v348, 7
  %v350 = vsub.s32 0, %v349
  %v351 = vrot.slane %v88, %v350
  %v352 = vadd.f32 %v346, %v351
  %v353 = vadd.f32 %v347, %v351
  %356 = vrot.lane.b32.xlu0 %v328, 64
  %v357 = vpop.permute.xlu0 %356
  %358 = vrot.lane.b32.xlu0 %v332, 64
  %v359 = vpop.permute.xlu0 %358
  %v362 = vadd.f32 %v319, %v357
  %v363 = vadd.f32 %v322, %v359
  %v364 = vadd.f32 %v362, %v324
  %v365 = vadd.f32 %v363, 0.0
  %v366 = vadd.f32 %v364, %v351
  %v367 = vadd.f32 %v365, %v351
  %370 = vrot.lane.b32.xlu0 %v212, 64
  %v371 = vpop.permute.xlu0 %370
  %372 = vrot.lane.b32.xlu0 %v213, 64
  %v373 = vpop.permute.xlu0 %372
  %v376 = vadd.f32 %v352, %v371
  %v377 = vadd.f32 %v353, %v373
  %v378 = vmax.f32 %v376, 0.0
  %v379 = vmax.f32 %v377, 0.0
  %v380 = vadd.f32 %v366, %v207
  %v381 = vadd.f32 %v367, %v207
  %v382 = vmax.f32 %v380, 0.0
  %v383 = vmax.f32 %v381, 0.0
  %v384 = vld [vmem:[%s2 + $0x4] sm:$0x1]
  %v385 = vld [vmem:[%s2 + $0x5] sm:$0x1]
  %v386 = vld [vmem:[%s2 + $0x6] sm:$0x1]
  %v387 = vpack.c.bf16 %v382, %v378
  %v388 = vpack.c.bf16 %v383, %v379
  %v389 = vld [vmem:[%s1 + $0xa0] sm:$0xf]
  %v390 = vld [vmem:[%s1 + $0xa8] sm:$0xf]
  %v391 = vld [vmem:[%s1 + $0xb0] sm:$0xf]
  %v392 = vld [vmem:[%s1 + $0xb8] sm:$0xf]
  %v393 = vld [vmem:[%s1 + $0xc0] sm:$0xf]
  %v394 = vld [vmem:[%s1 + $0xc8] sm:$0xf]
  %v395 = vld [vmem:[%s1 + $0xd0] sm:$0xf]
  %v396 = vld [vmem:[%s1 + $0xd8] sm:$0xf]
  %v405 = vunpack.c.l.b16 %v389
  %v406 = vunpack.c.l.b16 %v390
  %v407 = vunpack.c.l.b16 %v391
  %v408 = vunpack.c.l.b16 %v392
  %v409 = vunpack.c.l.b16 %v393
  %v410 = vunpack.c.l.b16 %v394
  %v411 = vunpack.c.l.b16 %v395
  %v412 = vunpack.c.l.b16 %v396
  %v413 = vpack.c.b16 %v406, %v405
  %v414 = vpack.c.b16 %v408, %v407
  %v415 = vpack.c.b16 %v410, %v409
  %v416 = vpack.c.b16 %v412, %v411
  %v422 = vsel %vm139, %v387, 0
  %v425 = vsel %vm139, %v388, 0
  %427 = vmatprep.subr.bf16.mxu0 0
  %428 = vmatpush1.bf16.msra.mxu0 %v413
  %429 = vmatprep.subr.bf16.mxu0 0
  %430 = vmatpush1.bf16.msra.mxu0 %v414
  %431 = vmatprep.subr.bf16.mxu0 0
  %432 = vmatpush1.bf16.msra.mxu0 %v415
  %433 = vmatprep.subr.bf16.mxu0 0
  %434 = vmatpush1.bf16.msra.mxu0 %v416
  %435 = vmatprep.subr.bf16.mxu0 0
  %436 = vmatpush1.bf16.msra.mxu0 0
  %437 = vmatprep.subr.bf16.mxu0 0
  %438 = vmatpush1.bf16.msra.mxu0 0
  %439 = vmatprep.subr.bf16.mxu0 0
  %440 = vmatpush1.bf16.msra.mxu0 0
  %441 = vmatprep.subr.bf16.mxu0 0
  %442 = vmatpush1.bf16.msra.mxu0 0
  %443 = vmatprep.subr.bf16.mxu0 0
  %444 = vmatpush1.bf16.msra.mxu0 0
  %445 = vmatprep.subr.bf16.mxu0 0
  %446 = vmatpush1.bf16.msra.mxu0 0
  %447 = vmatprep.subr.bf16.mxu0 0
  %448 = vmatpush1.bf16.msra.mxu0 0
  %449 = vmatprep.subr.bf16.mxu0 0
  %450 = vmatpush1.bf16.msra.mxu0 0
  %451 = vmatprep.subr.bf16.mxu0 0
  %452 = vmatpush1.bf16.msra.mxu0 0
  %453 = vmatprep.subr.bf16.mxu0 0
  %454 = vmatpush1.bf16.msra.mxu0 0
  %455 = vmatprep.subr.bf16.mxu0 0
  %456 = vmatpush1.bf16.msra.mxu0 0
  %457 = vmatprep.subr.bf16.mxu0 0
  %458 = vmatpush1.bf16.msra.mxu0 0
  %459 = vmatprep.mubr.bf16.mxu0 0
  %460 = vmatmul.mubr.bf16.gmra.mrb[0].mxu0 %v422
  %v461 = vpop.f32.mrb[0].mxu0
  %v462 = vadd.f32 0.0, %v461
  %v463 = vpop.f32.mrb[0].mxu0
  %v464 = vpop.f32.mrb[0].mxu0
  %v465 = vadd.f32 0.0, %v464
  %v466 = vpop.f32.mrb[0].mxu0
  %467 = vmatprep.mubr.bf16.mxu0 0
  %468 = vmatmul.mubr.bf16.gmra.mrb[0].mxu0 %v425
  %v469 = vpop.f32.mrb[0].mxu0
  %v470 = vadd.f32 0.0, %v469
  %v471 = vpop.f32.mrb[0].mxu0
  %v472 = vpop.f32.mrb[0].mxu0
  %v473 = vadd.f32 0.0, %v472
  %v474 = vpop.f32.mrb[0].mxu0
  %475 = vdwg.mxu0
  %v476 = vlaneseq
  %v477 = vshrl.u32 %v476, 7
  %v478 = vsub.s32 0, %v477
  %v479 = vrot.slane %v384, %v478
  %481 = vrot.lane.b32.xlu0 %v479, 32
  %v482 = vpop.permute.xlu0 %481
  %v484 = vadd.f32 %v462, %v482
  %v485 = vadd.f32 %v465, %v482
  %v486 = vadd.f32 %v470, %v482
  %v487 = vadd.f32 %v473, %v482
  %v488 = vmax.f32 %v484, 0.0
  %v489 = vmax.f32 %v485, 0.0
  %v490 = vmax.f32 %v486, 0.0
  %v491 = vmax.f32 %v487, 0.0
  %496 = vrot.lane.b32.xlu0 %v462, 64
  %v497 = vpop.permute.xlu0 %496
  %498 = vrot.lane.b32.xlu0 %v465, 64
  %v499 = vpop.permute.xlu0 %498
  %500 = vrot.lane.b32.xlu0 %v470, 64
  %v501 = vpop.permute.xlu0 %500
  %502 = vrot.lane.b32.xlu0 %v473, 64
  %v503 = vpop.permute.xlu0 %502
  %v508 = vadd.f32 %v465, %v497
  %v509 = vadd.f32 %v470, %v499
  %v510 = vadd.f32 %v473, %v501
  %v511 = vadd.f32 %v503, 0.0
  %v512 = vadd.f32 %v508, %v479
  %v513 = vadd.f32 %v509, %v479
  %v514 = vadd.f32 %v510, %v479
  %v515 = vadd.f32 %v511, %v479
  %v516 = vmax.f32 %v512, 0.0
  %v517 = vmax.f32 %v513, 0.0
  %v518 = vmax.f32 %v514, 0.0
  %v519 = vmax.f32 %v515, 0.0
  %v520 = vlaneseq
  %v521 = vshrl.u32 %v520, 7
  %v522 = vsub.s32 0, %v521
  %v523 = vrot.slane %v386, %v522
  %525 = vrot.lane.b32.xlu0 %v523, 96
  %v526 = vpop.permute.xlu0 %525
  %v528 = vadd.f32 %v462, %v526
  %v529 = vadd.f32 %v465, %v526
  %v530 = vadd.f32 %v470, %v526
  %v531 = vadd.f32 %v473, %v526
  %536 = vrot.lane.b32.xlu0 %v516, 32
  %v537 = vpop.permute.xlu0 %536
  %538 = vrot.lane.b32.xlu0 %v517, 32
  %v539 = vpop.permute.xlu0 %538
  %540 = vrot.lane.b32.xlu0 %v518, 32
  %v541 = vpop.permute.xlu0 %540
  %542 = vrot.lane.b32.xlu0 %v519, 32
  %v543 = vpop.permute.xlu0 %542
  %v548 = vpack.c.bf16 %v489, %v488
  %v549 = vpack.c.bf16 %v491, %v490
  %v550 = vpack.c.bf16 %v539, %v537
  %v551 = vpack.c.bf16 %v543, %v541
  %v552 = vld [vmem:[%s1 + $0xe0] sm:$0xf]
  %v553 = vld [vmem:[%s1 + $0xe8] sm:$0xf]
  %v554 = vld [vmem:[%s1 + $0xf0] sm:$0xf]
  %v555 = vld [vmem:[%s1 + $0xf8] sm:$0xf]
  %560 = vrot.lane.b32.xlu0 %v548, 96
  %v561 = vpop.permute.xlu0 %560
  %562 = vrot.lane.b32.xlu0 %v549, 96
  %v563 = vpop.permute.xlu0 %562
  %564 = vrot.lane.b32.xlu0 %v550, 96
  %v565 = vpop.permute.xlu0 %564
  %566 = vrot.lane.b32.xlu0 %v551, 96
  %v567 = vpop.permute.xlu0 %566
  %v572 = vunpack.c.l.b16 %v552
  %v573 = vunpack.c.l.b16 %v553
  %v574 = vunpack.c.l.b16 %v554
  %v575 = vunpack.c.l.b16 %v555
  %v576 = vpack.c.b16 %v573, %v572
  %v577 = vpack.c.b16 %v575, %v574
  %v581 = vsel %vm38, %v561, 0
  %v584 = vsel %vm38, %v563, 0
  %v587 = vsel %vm38, %v565, 0
  %v590 = vsel %vm38, %v567, 0
  %592 = vmatprep.subr.bf16.mxu0 0
  %593 = vmatpush1.bf16.msra.mxu0 %v576
  %594 = vmatprep.subr.bf16.mxu0 0
  %595 = vmatpush1.bf16.msra.mxu0 %v577
  %596 = vmatprep.subr.bf16.mxu0 0
  %597 = vmatpush1.bf16.msra.mxu0 0
  %598 = vmatprep.subr.bf16.mxu0 0
  %599 = vmatpush1.bf16.msra.mxu0 0
  %600 = vmatprep.subr.bf16.mxu0 0
  %601 = vmatpush1.bf16.msra.mxu0 0
  %602 = vmatprep.subr.bf16.mxu0 0
  %603 = vmatpush1.bf16.msra.mxu0 0
  %604 = vmatprep.subr.bf16.mxu0 0
  %605 = vmatpush1.bf16.msra.mxu0 0
  %606 = vmatprep.subr.bf16.mxu0 0
  %607 = vmatpush1.bf16.msra.mxu0 0
  %608 = vmatprep.subr.bf16.mxu0 0
  %609 = vmatpush1.bf16.msra.mxu0 0
  %610 = vmatprep.subr.bf16.mxu0 0
  %611 = vmatpush1.bf16.msra.mxu0 0
  %612 = vmatprep.subr.bf16.mxu0 0
  %613 = vmatpush1.bf16.msra.mxu0 0
  %614 = vmatprep.subr.bf16.mxu0 0
  %615 = vmatpush1.bf16.msra.mxu0 0
  %616 = vmatprep.subr.bf16.mxu0 0
  %617 = vmatpush1.bf16.msra.mxu0 0
  %618 = vmatprep.subr.bf16.mxu0 0
  %619 = vmatpush1.bf16.msra.mxu0 0
  %620 = vmatprep.subr.bf16.mxu0 0
  %621 = vmatpush1.bf16.msra.mxu0 0
  %622 = vmatprep.subr.bf16.mxu0 0
  %623 = vmatpush1.bf16.msra.mxu0 0
  %624 = vmatprep.mubr.bf16.mxu0 0
  %625 = vmatmul.mubr.bf16.gmra.mrb[0].mxu0 %v581
  %v626 = vpop.f32.mrb[0].mxu0
  %v627 = vadd.f32 0.0, %v626
  %v628 = vpop.f32.mrb[0].mxu0
  %v629 = vpop.f32.mrb[0].mxu0
  %v630 = vadd.f32 0.0, %v629
  %v631 = vpop.f32.mrb[0].mxu0
  %632 = vmatprep.mubr.bf16.mxu0 0
  %633 = vmatmul.mubr.bf16.gmra.mrb[0].mxu0 %v584
  %v634 = vpop.f32.mrb[0].mxu0
  %v635 = vadd.f32 0.0, %v634
  %v636 = vpop.f32.mrb[0].mxu0
  %v637 = vpop.f32.mrb[0].mxu0
  %v638 = vadd.f32 0.0, %v637
  %v639 = vpop.f32.mrb[0].mxu0
  %640 = vmatprep.mubr.bf16.mxu0 0
  %641 = vmatmul.mubr.bf16.gmra.mrb[0].mxu0 %v587
  %v642 = vpop.f32.mrb[0].mxu0
  %v643 = vadd.f32 0.0, %v642
  %v644 = vpop.f32.mrb[0].mxu0
  %v645 = vpop.f32.mrb[0].mxu0
  %v646 = vadd.f32 0.0, %v645
  %v647 = vpop.f32.mrb[0].mxu0
  %648 = vmatprep.mubr.bf16.mxu0 0
  %649 = vmatmul.mubr.bf16.gmra.mrb[0].mxu0 %v590
  %v650 = vpop.f32.mrb[0].mxu0
  %v651 = vadd.f32 0.0, %v650
  %v652 = vpop.f32.mrb[0].mxu0
  %v653 = vpop.f32.mrb[0].mxu0
  %v654 = vadd.f32 0.0, %v653
  %v655 = vpop.f32.mrb[0].mxu0
  %656 = vdwg.mxu0
  %661 = vrot.lane.b32.xlu0 %v627, 96
  %v662 = vpop.permute.xlu0 %661
  %663 = vrot.lane.b32.xlu0 %v630, 96
  %v664 = vpop.permute.xlu0 %663
  %665 = vrot.lane.b32.xlu0 %v635, 96
  %v666 = vpop.permute.xlu0 %665
  %667 = vrot.lane.b32.xlu0 %v638, 96
  %v668 = vpop.permute.xlu0 %667
  %v673 = vadd.f32 %v662, 0.0
  %v674 = vadd.f32 %v643, %v664
  %v675 = vadd.f32 %v646, %v666
  %v676 = vadd.f32 %v651, %v668
  %681 = vrot.lane.b32.xlu0 %v643, 64
  %v682 = vpop.permute.xlu0 %681
  %683 = vrot.lane.b32.xlu0 %v646, 64
  %v684 = vpop.permute.xlu0 %683
  %685 = vrot.lane.b32.xlu0 %v651, 64
  %v686 = vpop.permute.xlu0 %685
  %687 = vrot.lane.b32.xlu0 %v654, 64
  %v688 = vpop.permute.xlu0 %687
  %v693 = vadd.f32 %v673, %v682
  %v694 = vadd.f32 %v674, %v684
  %v695 = vadd.f32 %v675, %v686
  %v696 = vadd.f32 %v676, %v688
  %v697 = vlaneseq
  %v698 = vshrl.u32 %v697, 7
  %v699 = vsub.s32 0, %v698
  %v700 = vrot.slane %v385, %v699
  %v701 = vadd.f32 %v693, %v700
  %v702 = vadd.f32 %v694, %v700
  %v703 = vadd.f32 %v695, %v700
  %v704 = vadd.f32 %v696, %v700
  %705 = vrot.lane.b32.xlu0 %v643, 96
  %v706 = vpop.permute.xlu0 %705
  %707 = vrot.lane.b32.xlu0 %v646, 96
  %v708 = vpop.permute.xlu0 %707
  %709 = vrot.lane.b32.xlu0 %v651, 96
  %v710 = vpop.permute.xlu0 %709
  %711 = vrot.lane.b32.xlu0 %v654, 96
  %v712 = vpop.permute.xlu0 %711
  %v717 = vadd.f32 %v627, %v706
  %v718 = vadd.f32 %v630, %v708
  %v719 = vadd.f32 %v635, %v710
  %v720 = vadd.f32 %v638, %v712
  %722 = vrot.lane.b32.xlu0 %v630, 64
  %v723 = vpop.permute.xlu0 %722
  %724 = vrot.lane.b32.xlu0 %v635, 64
  %v725 = vpop.permute.xlu0 %724
  %726 = vrot.lane.b32.xlu0 %v638, 64
  %v727 = vpop.permute.xlu0 %726
  %728 = vrot.lane.b32.xlu0 0.0, 64
  %v729 = vpop.permute.xlu0 %728
  %v734 = vadd.f32 %v717, %v723
  %v735 = vadd.f32 %v718, %v725
  %v736 = vadd.f32 %v719, %v727
  %v737 = vadd.f32 %v720, %v729
  %v738 = vadd.f32 %v734, %v700
  %v739 = vadd.f32 %v735, %v700
  %v740 = vadd.f32 %v736, %v700
  %v741 = vadd.f32 %v737, %v700
  %746 = vrot.lane.b32.xlu0 %v528, 32
  %v747 = vpop.permute.xlu0 %746
  %748 = vrot.lane.b32.xlu0 %v529, 32
  %v749 = vpop.permute.xlu0 %748
  %750 = vrot.lane.b32.xlu0 %v530, 32
  %v751 = vpop.permute.xlu0 %750
  %752 = vrot.lane.b32.xlu0 %v531, 32
  %v753 = vpop.permute.xlu0 %752
  %v758 = vadd.f32 %v701, %v747
  %v759 = vadd.f32 %v702, %v749
  %v760 = vadd.f32 %v703, %v751
  %v761 = vadd.f32 %v704, %v753
  %v762 = vmax.f32 %v758, 0.0
  %v763 = vmax.f32 %v759, 0.0
  %v764 = vmax.f32 %v760, 0.0
  %v765 = vmax.f32 %v761, 0.0
  %v766 = vadd.f32 %v738, %v523
  %v767 = vadd.f32 %v739, %v523
  %v768 = vadd.f32 %v740, %v523
  %v769 = vadd.f32 %v741, %v523
  %v770 = vmax.f32 %v766, 0.0
  %v771 = vmax.f32 %v767, 0.0
  %v772 = vmax.f32 %v768, 0.0
  %v773 = vmax.f32 %v769, 0.0
  %v774 = vld [vmem:[%s2 + $0x7] sm:$0x1]
  %v775 = vld [vmem:[%s2 + $0x8] sm:$0x1]
  %v776 = vld [vmem:[%s2 + $0x9] sm:$0x1]
  %v777 = vpack.c.bf16 %v770, %v762
  %v778 = vpack.c.bf16 %v771, %v763
  %v779 = vpack.c.bf16 %v772, %v764
  %v780 = vpack.c.bf16 %v773, %v765
  %v781 = vld [vmem:[%s1 + $0x100] sm:$0xf]
  %v782 = vld [vmem:[%s1 + $0x108] sm:$0xf]
  %v783 = vld [vmem:[%s1 + $0x110] sm:$0xf]
  %v784 = vld [vmem:[%s1 + $0x118] sm:$0xf]
  %v789 = vunpack.c.l.b16 %v781
  %v790 = vunpack.c.l.b16 %v782
  %v791 = vunpack.c.l.b16 %v783
  %v792 = vunpack.c.l.b16 %v784
  %v793 = vpack.c.b16 %v790, %v789
  %v794 = vpack.c.b16 %v792, %v791
  %v798 = vsel %vm38, %v777, 0
  %v801 = vsel %vm38, %v778, 0
  %v804 = vsel %vm38, %v779, 0
  %v807 = vsel %vm38, %v780, 0
  %809 = vmatprep.subr.bf16.mxu0 0
  %810 = vmatpush1.bf16.msra.mxu0 %v793
  %811 = vmatprep.subr.bf16.mxu0 0
  %812 = vmatpush1.bf16.msra.mxu0 %v794
  %813 = vmatprep.subr.bf16.mxu0 0
  %814 = vmatpush1.bf16.msra.mxu0 0
  %815 = vmatprep.subr.bf16.mxu0 0
  %816 = vmatpush1.bf16.msra.mxu0 0
  %817 = vmatprep.subr.bf16.mxu0 0
  %818 = vmatpush1.bf16.msra.mxu0 0
  %819 = vmatprep.subr.bf16.mxu0 0
  %820 = vmatpush1.bf16.msra.mxu0 0
  %821 = vmatprep.subr.bf16.mxu0 0
  %822 = vmatpush1.bf16.msra.mxu0 0
  %823 = vmatprep.subr.bf16.mxu0 0
  %824 = vmatpush1.bf16.msra.mxu0 0
  %825 = vmatprep.subr.bf16.mxu0 0
  %826 = vmatpush1.bf16.msra.mxu0 0
  %827 = vmatprep.subr.bf16.mxu0 0
  %828 = vmatpush1.bf16.msra.mxu0 0
  %829 = vmatprep.subr.bf16.mxu0 0
  %830 = vmatpush1.bf16.msra.mxu0 0
  %831 = vmatprep.subr.bf16.mxu0 0
  %832 = vmatpush1.bf16.msra.mxu0 0
  %833 = vmatprep.subr.bf16.mxu0 0
  %834 = vmatpush1.bf16.msra.mxu0 0
  %835 = vmatprep.subr.bf16.mxu0 0
  %836 = vmatpush1.bf16.msra.mxu0 0
  %837 = vmatprep.subr.bf16.mxu0 0
  %838 = vmatpush1.bf16.msra.mxu0 0
  %839 = vmatprep.subr.bf16.mxu0 0
  %840 = vmatpush1.bf16.msra.mxu0 0
  %841 = vmatprep.mubr.bf16.mxu0 0
  %842 = vmatmul.mubr.bf16.gmra.mrb[0].mxu0 %v798
  %v843 = vpop.f32.mrb[0].mxu0
  %v844 = vadd.f32 0.0, %v843
  %v845 = vpop.f32.mrb[0].mxu0
  %v846 = vpop.f32.mrb[0].mxu0
  %v847 = vadd.f32 0.0, %v846
  %v848 = vpop.f32.mrb[0].mxu0
  %849 = vmatprep.mubr.bf16.mxu0 0
  %850 = vmatmul.mubr.bf16.gmra.mrb[0].mxu0 %v801
  %v851 = vpop.f32.mrb[0].mxu0
  %v852 = vadd.f32 0.0, %v851
  %v853 = vpop.f32.mrb[0].mxu0
  %v854 = vpop.f32.mrb[0].mxu0
  %v855 = vadd.f32 0.0, %v854
  %v856 = vpop.f32.mrb[0].mxu0
  %857 = vmatprep.mubr.bf16.mxu0 0
  %858 = vmatmul.mubr.bf16.gmra.mrb[0].mxu0 %v804
  %v859 = vpop.f32.mrb[0].mxu0
  %v860 = vadd.f32 0.0, %v859
  %v861 = vpop.f32.mrb[0].mxu0
  %v862 = vpop.f32.mrb[0].mxu0
  %v863 = vadd.f32 0.0, %v862
  %v864 = vpop.f32.mrb[0].mxu0
  %865 = vmatprep.mubr.bf16.mxu0 0
  %866 = vmatmul.mubr.bf16.gmra.mrb[0].mxu0 %v807
  %v867 = vpop.f32.mrb[0].mxu0
  %v868 = vadd.f32 0.0, %v867
  %v869 = vpop.f32.mrb[0].mxu0
  %v870 = vpop.f32.mrb[0].mxu0
  %v871 = vadd.f32 0.0, %v870
  %v872 = vpop.f32.mrb[0].mxu0
  %873 = vdwg.mxu0
  %v874 = vlaneseq
  %v875 = vshrl.u32 %v874, 7
  %v876 = vsub.s32 0, %v875
  %v877 = vrot.slane %v774, %v876
  %879 = vrot.lane.b32.xlu0 %v877, 16
  %v880 = vpop.permute.xlu0 %879
  %v882 = vadd.f32 %v844, %v880
  %v883 = vadd.f32 %v847, %v880
  %v884 = vadd.f32 %v852, %v880
  %v885 = vadd.f32 %v855, %v880
  %v886 = vadd.f32 %v860, %v880
  %v887 = vadd.f32 %v863, %v880
  %v888 = vadd.f32 %v868, %v880
  %v889 = vadd.f32 %v871, %v880
  %v890 = vmax.f32 %v882, 0.0
  %v891 = vmax.f32 %v883, 0.0
  %v892 = vmax.f32 %v884, 0.0
  %v893 = vmax.f32 %v885, 0.0
  %v894 = vmax.f32 %v886, 0.0
  %v895 = vmax.f32 %v887, 0.0
  %v896 = vmax.f32 %v888, 0.0
  %v897 = vmax.f32 %v889, 0.0
  %906 = vrot.lane.b32.xlu0 %v844, 96
  %v907 = vpop.permute.xlu0 %906
  %908 = vrot.lane.b32.xlu0 %v847, 96
  %v909 = vpop.permute.xlu0 %908
  %910 = vrot.lane.b32.xlu0 %v852, 96
  %v911 = vpop.permute.xlu0 %910
  %912 = vrot.lane.b32.xlu0 %v855, 96
  %v913 = vpop.permute.xlu0 %912
  %914 = vrot.lane.b32.xlu0 %v860, 96
  %v915 = vpop.permute.xlu0 %914
  %916 = vrot.lane.b32.xlu0 %v863, 96
  %v917 = vpop.permute.xlu0 %916
  %918 = vrot.lane.b32.xlu0 %v868, 96
  %v919 = vpop.permute.xlu0 %918
  %920 = vrot.lane.b32.xlu0 %v871, 96
  %v921 = vpop.permute.xlu0 %920
  %v930 = vadd.f32 %v847, %v907
  %v931 = vadd.f32 %v852, %v909
  %v932 = vadd.f32 %v855, %v911
  %v933 = vadd.f32 %v860, %v913
  %v934 = vadd.f32 %v863, %v915
  %v935 = vadd.f32 %v868, %v917
  %v936 = vadd.f32 %v871, %v919
  %v937 = vadd.f32 %v921, 0.0
  %v938 = vadd.f32 %v930, %v877
  %v939 = vadd.f32 %v931, %v877
  %v940 = vadd.f32 %v932, %v877
  %v941 = vadd.f32 %v933, %v877
  %v942 = vadd.f32 %v934, %v877
  %v943 = vadd.f32 %v935, %v877
  %v944 = vadd.f32 %v936, %v877
  %v945 = vadd.f32 %v937, %v877
  %v946 = vmax.f32 %v938, 0.0
  %v947 = vmax.f32 %v939, 0.0
  %v948 = vmax.f32 %v940, 0.0
  %v949 = vmax.f32 %v941, 0.0
  %v950 = vmax.f32 %v942, 0.0
  %v951 = vmax.f32 %v943, 0.0
  %v952 = vmax.f32 %v944, 0.0
  %v953 = vmax.f32 %v945, 0.0
  %v954 = vlaneseq
  %v955 = vshrl.u32 %v954, 7
  %v956 = vsub.s32 0, %v955
  %v957 = vrot.slane %v776, %v956
  %959 = vrot.lane.b32.xlu0 %v957, 48
  %v960 = vpop.permute.xlu0 %959
  %v962 = vadd.f32 %v844, %v960
  %v963 = vadd.f32 %v847, %v960
  %v964 = vadd.f32 %v852, %v960
  %v965 = vadd.f32 %v855, %v960
  %v966 = vadd.f32 %v860, %v960
  %v967 = vadd.f32 %v863, %v960
  %v968 = vadd.f32 %v868, %v960
  %v969 = vadd.f32 %v871, %v960
  %978 = vrot.lane.b32.xlu0 %v946, 16
  %v979 = vpop.permute.xlu0 %978
  %980 = vrot.lane.b32.xlu0 %v947, 16
  %v981 = vpop.permute.xlu0 %980
  %982 = vrot.lane.b32.xlu0 %v948, 16
  %v983 = vpop.permute.xlu0 %982
  %984 = vrot.lane.b32.xlu0 %v949, 16
  %v985 = vpop.permute.xlu0 %984
  %986 = vrot.lane.b32.xlu0 %v950, 16
  %v987 = vpop.permute.xlu0 %986
  %988 = vrot.lane.b32.xlu0 %v951, 16
  %v989 = vpop.permute.xlu0 %988
  %990 = vrot.lane.b32.xlu0 %v952, 16
  %v991 = vpop.permute.xlu0 %990
  %992 = vrot.lane.b32.xlu0 %v953, 16
  %v993 = vpop.permute.xlu0 %992
  %v1002 = vpack.c.bf16 %v891, %v890
  %v1003 = vpack.c.bf16 %v893, %v892
  %v1004 = vpack.c.bf16 %v895, %v894
  %v1005 = vpack.c.bf16 %v897, %v896
  %v1006 = vpack.c.bf16 %v981, %v979
  %v1007 = vpack.c.bf16 %v985, %v983
  %v1008 = vpack.c.bf16 %v989, %v987
  %v1009 = vpack.c.bf16 %v993, %v991
  %v1010 = vld [vmem:[%s1 + $0x120] sm:$0xf]
  %v1011 = vld [vmem:[%s1 + $0x128] sm:$0xf]
  %1020 = vrot.lane.b32.xlu0 %v1002, 112
  %v1021 = vpop.permute.xlu0 %1020
  %1022 = vrot.lane.b32.xlu0 %v1003, 112
  %v1023 = vpop.permute.xlu0 %1022
  %1024 = vrot.lane.b32.xlu0 %v1004, 112
  %v1025 = vpop.permute.xlu0 %1024
  %1026 = vrot.lane.b32.xlu0 %v1005, 112
  %v1027 = vpop.permute.xlu0 %1026
  %1028 = vrot.lane.b32.xlu0 %v1006, 112
  %v1029 = vpop.permute.xlu0 %1028
  %1030 = vrot.lane.b32.xlu0 %v1007, 112
  %v1031 = vpop.permute.xlu0 %1030
  %1032 = vrot.lane.b32.xlu0 %v1008, 112
  %v1033 = vpop.permute.xlu0 %1032
  %1034 = vrot.lane.b32.xlu0 %v1009, 112
  %v1035 = vpop.permute.xlu0 %1034
  %v1038 = vunpack.c.l.b16 %v1010
  %v1039 = vunpack.c.l.b16 %v1011
  %v1040 = vpack.c.b16 %v1039, %v1038
  %vm1042 = vcmask 130048
  %v1044 = vsel %vm1042, %v1021, 0
  %v1047 = vsel %vm1042, %v1023, 0
  %v1050 = vsel %vm1042, %v1025, 0
  %v1053 = vsel %vm1042, %v1027, 0
  %v1056 = vsel %vm1042, %v1029, 0
  %v1059 = vsel %vm1042, %v1031, 0
  %v1062 = vsel %vm1042, %v1033, 0
  %v1065 = vsel %vm1042, %v1035, 0
  %1067 = vmatprep.subr.bf16.mxu0 0
  %1068 = vmatpush1.bf16.msra.mxu0 %v1040
  %1069 = vmatprep.subr.bf16.mxu0 0
  %1070 = vmatpush1.bf16.msra.mxu0 0
  %1071 = vmatprep.subr.bf16.mxu0 0
  %1072 = vmatpush1.bf16.msra.mxu0 0
  %1073 = vmatprep.subr.bf16.mxu0 0
  %1074 = vmatpush1.bf16.msra.mxu0 0
  %1075 = vmatprep.subr.bf16.mxu0 0
  %1076 = vmatpush1.bf16.msra.mxu0 0
  %1077 = vmatprep.subr.bf16.mxu0 0
  %1078 = vmatpush1.bf16.msra.mxu0 0
  %1079 = vmatprep.subr.bf16.mxu0 0
  %1080 = vmatpush1.bf16.msra.mxu0 0
  %1081 = vmatprep.subr.bf16.mxu0 0
  %1082 = vmatpush1.bf16.msra.mxu0 0
  %1083 = vmatprep.subr.bf16.mxu0 0
  %1084 = vmatpush1.bf16.msra.mxu0 0
  %1085 = vmatprep.subr.bf16.mxu0 0
  %1086 = vmatpush1.bf16.msra.mxu0 0
  %1087 = vmatprep.subr.bf16.mxu0 0
  %1088 = vmatpush1.bf16.msra.mxu0 0
  %1089 = vmatprep.subr.bf16.mxu0 0
  %1090 = vmatpush1.bf16.msra.mxu0 0
  %1091 = vmatprep.subr.bf16.mxu0 0
  %1092 = vmatpush1.bf16.msra.mxu0 0
  %1093 = vmatprep.subr.bf16.mxu0 0
  %1094 = vmatpush1.bf16.msra.mxu0 0
  %1095 = vmatprep.subr.bf16.mxu0 0
  %1096 = vmatpush1.bf16.msra.mxu0 0
  %1097 = vmatprep.subr.bf16.mxu0 0
  %1098 = vmatpush1.bf16.msra.mxu0 0
  %1099 = vmatprep.mubr.bf16.mxu0 0
  %1100 = vmatmul.mubr.bf16.gmra.mrb[0].mxu0 %v1044
  %v1101 = vpop.f32.mrb[0].mxu0
  %v1102 = vadd.f32 0.0, %v1101
  %v1103 = vpop.f32.mrb[0].mxu0
  %v1104 = vpop.f32.mrb[0].mxu0
  %v1105 = vadd.f32 0.0, %v1104
  %v1106 = vpop.f32.mrb[0].mxu0
  %1107 = vmatprep.mubr.bf16.mxu0 0
  %1108 = vmatmul.mubr.bf16.gmra.mrb[0].mxu0 %v1047
  %v1109 = vpop.f32.mrb[0].mxu0
  %v1110 = vadd.f32 0.0, %v1109
  %v1111 = vpop.f32.mrb[0].mxu0
  %v1112 = vpop.f32.mrb[0].mxu0
  %v1113 = vadd.f32 0.0, %v1112
  %v1114 = vpop.f32.mrb[0].mxu0
  %1115 = vmatprep.mubr.bf16.mxu0 0
  %1116 = vmatmul.mubr.bf16.gmra.mrb[0].mxu0 %v1050
  %v1117 = vpop.f32.mrb[0].mxu0
  %v1118 = vadd.f32 0.0, %v1117
  %v1119 = vpop.f32.mrb[0].mxu0
  %v1120 = vpop.f32.mrb[0].mxu0
  %v1121 = vadd.f32 0.0, %v1120
  %v1122 = vpop.f32.mrb[0].mxu0
  %1123 = vmatprep.mubr.bf16.mxu0 0
  %1124 = vmatmul.mubr.bf16.gmra.mrb[0].mxu0 %v1053
  %v1125 = vpop.f32.mrb[0].mxu0
  %v1126 = vadd.f32 0.0, %v1125
  %v1127 = vpop.f32.mrb[0].mxu0
  %v1128 = vpop.f32.mrb[0].mxu0
  %v1129 = vadd.f32 0.0, %v1128
  %v1130 = vpop.f32.mrb[0].mxu0
  %1131 = vmatprep.mubr.bf16.mxu0 0
  %1132 = vmatmul.mubr.bf16.gmra.mrb[0].mxu0 %v1056
  %v1133 = vpop.f32.mrb[0].mxu0
  %v1134 = vadd.f32 0.0, %v1133
  %v1135 = vpop.f32.mrb[0].mxu0
  %v1136 = vpop.f32.mrb[0].mxu0
  %v1137 = vadd.f32 0.0, %v1136
  %v1138 = vpop.f32.mrb[0].mxu0
  %1139 = vmatprep.mubr.bf16.mxu0 0
  %1140 = vmatmul.mubr.bf16.gmra.mrb[0].mxu0 %v1059
  %v1141 = vpop.f32.mrb[0].mxu0
  %v1142 = vadd.f32 0.0, %v1141
  %v1143 = vpop.f32.mrb[0].mxu0
  %v1144 = vpop.f32.mrb[0].mxu0
  %v1145 = vadd.f32 0.0, %v1144
  %v1146 = vpop.f32.mrb[0].mxu0
  %1147 = vmatprep.mubr.bf16.mxu0 0
  %1148 = vmatmul.mubr.bf16.gmra.mrb[0].mxu0 %v1062
  %v1149 = vpop.f32.mrb[0].mxu0
  %v1150 = vadd.f32 0.0, %v1149
  %v1151 = vpop.f32.mrb[0].mxu0
  %v1152 = vpop.f32.mrb[0].mxu0
  %v1153 = vadd.f32 0.0, %v1152
  %v1154 = vpop.f32.mrb[0].mxu0
  %1155 = vmatprep.mubr.bf16.mxu0 0
  %1156 = vmatmul.mubr.bf16.gmra.mrb[0].mxu0 %v1065
  %v1157 = vpop.f32.mrb[0].mxu0
  %v1158 = vadd.f32 0.0, %v1157
  %v1159 = vpop.f32.mrb[0].mxu0
  %v1160 = vpop.f32.mrb[0].mxu0
  %v1161 = vadd.f32 0.0, %v1160
  %v1162 = vpop.f32.mrb[0].mxu0
  %1163 = vdwg.mxu0
  %1172 = vrot.lane.b32.xlu0 %v1102, 112
  %v1173 = vpop.permute.xlu0 %1172
  %1174 = vrot.lane.b32.xlu0 %v1105, 112
  %v1175 = vpop.permute.xlu0 %1174
  %1176 = vrot.lane.b32.xlu0 %v1110, 112
  %v1177 = vpop.permute.xlu0 %1176
  %1178 = vrot.lane.b32.xlu0 %v1113, 112
  %v1179 = vpop.permute.xlu0 %1178
  %1180 = vrot.lane.b32.xlu0 %v1118, 112
  %v1181 = vpop.permute.xlu0 %1180
  %1182 = vrot.lane.b32.xlu0 %v1121, 112
  %v1183 = vpop.permute.xlu0 %1182
  %1184 = vrot.lane.b32.xlu0 %v1126, 112
  %v1185 = vpop.permute.xlu0 %1184
  %1186 = vrot.lane.b32.xlu0 %v1129, 112
  %v1187 = vpop.permute.xlu0 %1186
  %v1196 = vadd.f32 %v1173, 0.0
  %v1197 = vadd.f32 %v1134, %v1175
  %v1198 = vadd.f32 %v1137, %v1177
  %v1199 = vadd.f32 %v1142, %v1179
  %v1200 = vadd.f32 %v1145, %v1181
  %v1201 = vadd.f32 %v1150, %v1183
  %v1202 = vadd.f32 %v1153, %v1185
  %v1203 = vadd.f32 %v1158, %v1187
  %1212 = vrot.lane.b32.xlu0 %v1134, 96
  %v1213 = vpop.permute.xlu0 %1212
  %1214 = vrot.lane.b32.xlu0 %v1137, 96
  %v1215 = vpop.permute.xlu0 %1214
  %1216 = vrot.lane.b32.xlu0 %v1142, 96
  %v1217 = vpop.permute.xlu0 %1216
  %1218 = vrot.lane.b32.xlu0 %v1145, 96
  %v1219 = vpop.permute.xlu0 %1218
  %1220 = vrot.lane.b32.xlu0 %v1150, 96
  %v1221 = vpop.permute.xlu0 %1220
  %1222 = vrot.lane.b32.xlu0 %v1153, 96
  %v1223 = vpop.permute.xlu0 %1222
  %1224 = vrot.lane.b32.xlu0 %v1158, 96
  %v1225 = vpop.permute.xlu0 %1224
  %1226 = vrot.lane.b32.xlu0 %v1161, 96
  %v1227 = vpop.permute.xlu0 %1226
  %v1236 = vadd.f32 %v1196, %v1213
  %v1237 = vadd.f32 %v1197, %v1215
  %v1238 = vadd.f32 %v1198, %v1217
  %v1239 = vadd.f32 %v1199, %v1219
  %v1240 = vadd.f32 %v1200, %v1221
  %v1241 = vadd.f32 %v1201, %v1223
  %v1242 = vadd.f32 %v1202, %v1225
  %v1243 = vadd.f32 %v1203, %v1227
  %v1244 = vlaneseq
  %v1245 = vshrl.u32 %v1244, 7
  %v1246 = vsub.s32 0, %v1245
  %v1247 = vrot.slane %v775, %v1246
  %v1248 = vadd.f32 %v1236, %v1247
  %v1249 = vadd.f32 %v1237, %v1247
  %v1250 = vadd.f32 %v1238, %v1247
  %v1251 = vadd.f32 %v1239, %v1247
  %v1252 = vadd.f32 %v1240, %v1247
  %v1253 = vadd.f32 %v1241, %v1247
  %v1254 = vadd.f32 %v1242, %v1247
  %v1255 = vadd.f32 %v1243, %v1247
  %1256 = vrot.lane.b32.xlu0 %v1134, 112
  %v1257 = vpop.permute.xlu0 %1256
  %1258 = vrot.lane.b32.xlu0 %v1137, 112
  %v1259 = vpop.permute.xlu0 %1258
  %1260 = vrot.lane.b32.xlu0 %v1142, 112
  %v1261 = vpop.permute.xlu0 %1260
  %1262 = vrot.lane.b32.xlu0 %v1145, 112
  %v1263 = vpop.permute.xlu0 %1262
  %1264 = vrot.lane.b32.xlu0 %v1150, 112
  %v1265 = vpop.permute.xlu0 %1264
  %1266 = vrot.lane.b32.xlu0 %v1153, 112
  %v1267 = vpop.permute.xlu0 %1266
  %1268 = vrot.lane.b32.xlu0 %v1158, 112
  %v1269 = vpop.permute.xlu0 %1268
  %1270 = vrot.lane.b32.xlu0 %v1161, 112
  %v1271 = vpop.permute.xlu0 %1270
  %v1280 = vadd.f32 %v1102, %v1257
  %v1281 = vadd.f32 %v1105, %v1259
  %v1282 = vadd.f32 %v1110, %v1261
  %v1283 = vadd.f32 %v1113, %v1263
  %v1284 = vadd.f32 %v1118, %v1265
  %v1285 = vadd.f32 %v1121, %v1267
  %v1286 = vadd.f32 %v1126, %v1269
  %v1287 = vadd.f32 %v1129, %v1271
  %1288 = vrot.lane.b32.xlu0 %v1105, 96
  %v1289 = vpop.permute.xlu0 %1288
  %1290 = vrot.lane.b32.xlu0 %v1110, 96
  %v1291 = vpop.permute.xlu0 %1290
  %1292 = vrot.lane.b32.xlu0 %v1113, 96
  %v1293 = vpop.permute.xlu0 %1292
  %1294 = vrot.lane.b32.xlu0 %v1118, 96
  %v1295 = vpop.permute.xlu0 %1294
  %1296 = vrot.lane.b32.xlu0 %v1121, 96
  %v1297 = vpop.permute.xlu0 %1296
  %1298 = vrot.lane.b32.xlu0 %v1126, 96
  %v1299 = vpop.permute.xlu0 %1298
  %1300 = vrot.lane.b32.xlu0 %v1129, 96
  %v1301 = vpop.permute.xlu0 %1300
  %1302 = vrot.lane.b32.xlu0 0.0, 96
  %v1303 = vpop.permute.xlu0 %1302
  %v1312 = vadd.f32 %v1280, %v1289
  %v1313 = vadd.f32 %v1281, %v1291
  %v1314 = vadd.f32 %v1282, %v1293
  %v1315 = vadd.f32 %v1283, %v1295
  %v1316 = vadd.f32 %v1284, %v1297
  %v1317 = vadd.f32 %v1285, %v1299
  %v1318 = vadd.f32 %v1286, %v1301
  %v1319 = vadd.f32 %v1287, %v1303
  %v1320 = vadd.f32 %v1312, %v1247
  %v1321 = vadd.f32 %v1313, %v1247
  %v1322 = vadd.f32 %v1314, %v1247
  %v1323 = vadd.f32 %v1315, %v1247
  %v1324 = vadd.f32 %v1316, %v1247
  %v1325 = vadd.f32 %v1317, %v1247
  %v1326 = vadd.f32 %v1318, %v1247
  %v1327 = vadd.f32 %v1319, %v1247
  %1336 = vrot.lane.b32.xlu0 %v962, 80
  %v1337 = vpop.permute.xlu0 %1336
  %1338 = vrot.lane.b32.xlu0 %v963, 80
  %v1339 = vpop.permute.xlu0 %1338
  %1340 = vrot.lane.b32.xlu0 %v964, 80
  %v1341 = vpop.permute.xlu0 %1340
  %1342 = vrot.lane.b32.xlu0 %v965, 80
  %v1343 = vpop.permute.xlu0 %1342
  %1344 = vrot.lane.b32.xlu0 %v966, 80
  %v1345 = vpop.permute.xlu0 %1344
  %1346 = vrot.lane.b32.xlu0 %v967, 80
  %v1347 = vpop.permute.xlu0 %1346
  %1348 = vrot.lane.b32.xlu0 %v968, 80
  %v1349 = vpop.permute.xlu0 %1348
  %1350 = vrot.lane.b32.xlu0 %v969, 80
  %v1351 = vpop.permute.xlu0 %1350
  %v1360 = vadd.f32 %v1248, %v1337
  %v1361 = vadd.f32 %v1249, %v1339
  %v1362 = vadd.f32 %v1250, %v1341
  %v1363 = vadd.f32 %v1251, %v1343
  %v1364 = vadd.f32 %v1252, %v1345
  %v1365 = vadd.f32 %v1253, %v1347
  %v1366 = vadd.f32 %v1254, %v1349
  %v1367 = vadd.f32 %v1255, %v1351
  %v1368 = vmax.f32 %v1360, 0.0
  %v1369 = vmax.f32 %v1361, 0.0
  %v1370 = vmax.f32 %v1362, 0.0
  %v1371 = vmax.f32 %v1363, 0.0
  %v1372 = vmax.f32 %v1364, 0.0
  %v1373 = vmax.f32 %v1365, 0.0
  %v1374 = vmax.f32 %v1366, 0.0
  %v1375 = vmax.f32 %v1367, 0.0
  %v1376 = vadd.f32 %v1320, %v957
  %v1377 = vadd.f32 %v1321, %v957
  %v1378 = vadd.f32 %v1322, %v957
  %v1379 = vadd.f32 %v1323, %v957
  %v1380 = vadd.f32 %v1324, %v957
  %v1381 = vadd.f32 %v1325, %v957
  %v1382 = vadd.f32 %v1326, %v957
  %v1383 = vadd.f32 %v1327, %v957
  %v1384 = vmax.f32 %v1376, 0.0
  %v1385 = vmax.f32 %v1377, 0.0
  %v1386 = vmax.f32 %v1378, 0.0
  %v1387 = vmax.f32 %v1379, 0.0
  %v1388 = vmax.f32 %v1380, 0.0
  %v1389 = vmax.f32 %v1381, 0.0
  %v1390 = vmax.f32 %v1382, 0.0
  %v1391 = vmax.f32 %v1383, 0.0
  %v1392 = vld [vmem:[%s2 + $0xa] sm:$0x1]
  %v1393 = vld [vmem:[%s2 + $0xb] sm:$0x1]
  %v1394 = vld [vmem:[%s2 + $0xc] sm:$0x1]
  %v1395 = vpack.c.bf16 %v1384, %v1368
  %v1396 = vpack.c.bf16 %v1385, %v1369
  %v1397 = vpack.c.bf16 %v1386, %v1370
  %v1398 = vpack.c.bf16 %v1387, %v1371
  %v1399 = vpack.c.bf16 %v1388, %v1372
  %v1400 = vpack.c.bf16 %v1389, %v1373
  %v1401 = vpack.c.bf16 %v1390, %v1374
  %v1402 = vpack.c.bf16 %v1391, %v1375
  %v1403 = vld [vmem:[%s1 + $0x130] sm:$0xf]
  %v1404 = vld [vmem:[%s1 + $0x138] sm:$0xf]
  %v1407 = vunpack.c.l.b16 %v1403
  %v1408 = vunpack.c.l.b16 %v1404
  %v1409 = vpack.c.b16 %v1408, %v1407
  %v1412 = vsel %vm1042, %v1395, 0
  %v1415 = vsel %vm1042, %v1396, 0
  %v1418 = vsel %vm1042, %v1397, 0
  %v1421 = vsel %vm1042, %v1398, 0
  %v1424 = vsel %vm1042, %v1399, 0
  %v1427 = vsel %vm1042, %v1400, 0
  %v1430 = vsel %vm1042, %v1401, 0
  %v1433 = vsel %vm1042, %v1402, 0
  %1435 = vmatprep.subr.bf16.mxu0 0
  %1436 = vmatpush1.bf16.msra.mxu0 %v1409
  %1437 = vmatprep.subr.bf16.mxu0 0
  %1438 = vmatpush1.bf16.msra.mxu0 0
  %1439 = vmatprep.subr.bf16.mxu0 0
  %1440 = vmatpush1.bf16.msra.mxu0 0
  %1441 = vmatprep.subr.bf16.mxu0 0
  %1442 = vmatpush1.bf16.msra.mxu0 0
  %1443 = vmatprep.subr.bf16.mxu0 0
  %1444 = vmatpush1.bf16.msra.mxu0 0
  %1445 = vmatprep.subr.bf16.mxu0 0
  %1446 = vmatpush1.bf16.msra.mxu0 0
  %1447 = vmatprep.subr.bf16.mxu0 0
  %1448 = vmatpush1.bf16.msra.mxu0 0
  %1449 = vmatprep.subr.bf16.mxu0 0
  %1450 = vmatpush1.bf16.msra.mxu0 0
  %1451 = vmatprep.subr.bf16.mxu0 0
  %1452 = vmatpush1.bf16.msra.mxu0 0
  %1453 = vmatprep.subr.bf16.mxu0 0
  %1454 = vmatpush1.bf16.msra.mxu0 0
  %1455 = vmatprep.subr.bf16.mxu0 0
  %1456 = vmatpush1.bf16.msra.mxu0 0
  %1457 = vmatprep.subr.bf16.mxu0 0
  %1458 = vmatpush1.bf16.msra.mxu0 0
  %1459 = vmatprep.subr.bf16.mxu0 0
  %1460 = vmatpush1.bf16.msra.mxu0 0
  %1461 = vmatprep.subr.bf16.mxu0 0
  %1462 = vmatpush1.bf16.msra.mxu0 0
  %1463 = vmatprep.subr.bf16.mxu0 0
  %1464 = vmatpush1.bf16.msra.mxu0 0
  %1465 = vmatprep.subr.bf16.mxu0 0
  %1466 = vmatpush1.bf16.msra.mxu0 0
  %1467 = vmatprep.mubr.bf16.mxu0 0
  %1468 = vmatmul.mubr.bf16.gmra.mrb[0].mxu0 %v1412
  %v1469 = vpop.f32.mrb[0].mxu0
  %v1470 = vadd.f32 0.0, %v1469
  %v1471 = vpop.f32.mrb[0].mxu0
  %v1472 = vpop.f32.mrb[0].mxu0
  %v1473 = vadd.f32 0.0, %v1472
  %v1474 = vpop.f32.mrb[0].mxu0
  %1475 = vmatprep.mubr.bf16.mxu0 0
  %1476 = vmatmul.mubr.bf16.gmra.mrb[0].mxu0 %v1415
  %v1477 = vpop.f32.mrb[0].mxu0
  %v1478 = vadd.f32 0.0, %v1477
  %v1479 = vpop.f32.mrb[0].mxu0
  %v1480 = vpop.f32.mrb[0].mxu0
  %v1481 = vadd.f32 0.0, %v1480
  %v1482 = vpop.f32.mrb[0].mxu0
  %1483 = vmatprep.mubr.bf16.mxu0 0
  %1484 = vmatmul.mubr.bf16.gmra.mrb[0].mxu0 %v1418
  %v1485 = vpop.f32.mrb[0].mxu0
  %v1486 = vadd.f32 0.0, %v1485
  %v1487 = vpop.f32.mrb[0].mxu0
  %v1488 = vpop.f32.mrb[0].mxu0
  %v1489 = vadd.f32 0.0, %v1488
  %v1490 = vpop.f32.mrb[0].mxu0
  %1491 = vmatprep.mubr.bf16.mxu0 0
  %1492 = vmatmul.mubr.bf16.gmra.mrb[0].mxu0 %v1421
  %v1493 = vpop.f32.mrb[0].mxu0
  %v1494 = vadd.f32 0.0, %v1493
  %v1495 = vpop.f32.mrb[0].mxu0
  %v1496 = vpop.f32.mrb[0].mxu0
  %v1497 = vadd.f32 0.0, %v1496
  %v1498 = vpop.f32.mrb[0].mxu0
  %1499 = vmatprep.mubr.bf16.mxu0 0
  %1500 = vmatmul.mubr.bf16.gmra.mrb[0].mxu0 %v1424
  %v1501 = vpop.f32.mrb[0].mxu0
  %v1502 = vadd.f32 0.0, %v1501
  %v1503 = vpop.f32.mrb[0].mxu0
  %v1504 = vpop.f32.mrb[0].mxu0
  %v1505 = vadd.f32 0.0, %v1504
  %v1506 = vpop.f32.mrb[0].mxu0
  %1507 = vmatprep.mubr.bf16.mxu0 0
  %1508 = vmatmul.mubr.bf16.gmra.mrb[0].mxu0 %v1427
  %v1509 = vpop.f32.mrb[0].mxu0
  %v1510 = vadd.f32 0.0, %v1509
  %v1511 = vpop.f32.mrb[0].mxu0
  %v1512 = vpop.f32.mrb[0].mxu0
  %v1513 = vadd.f32 0.0, %v1512
  %v1514 = vpop.f32.mrb[0].mxu0
  %1515 = vmatprep.mubr.bf16.mxu0 0
  %1516 = vmatmul.mubr.bf16.gmra.mrb[0].mxu0 %v1430
  %v1517 = vpop.f32.mrb[0].mxu0
  %v1518 = vadd.f32 0.0, %v1517
  %v1519 = vpop.f32.mrb[0].mxu0
  %v1520 = vpop.f32.mrb[0].mxu0
  %v1521 = vadd.f32 0.0, %v1520
  %v1522 = vpop.f32.mrb[0].mxu0
  %1523 = vmatprep.mubr.bf16.mxu0 0
  %1524 = vmatmul.mubr.bf16.gmra.mrb[0].mxu0 %v1433
  %v1525 = vpop.f32.mrb[0].mxu0
  %v1526 = vadd.f32 0.0, %v1525
  %v1527 = vpop.f32.mrb[0].mxu0
  %v1528 = vpop.f32.mrb[0].mxu0
  %v1529 = vadd.f32 0.0, %v1528
  %v1530 = vpop.f32.mrb[0].mxu0
  %1531 = vdwg.mxu0
  %v1532 = vlaneseq
  %v1533 = vshrl.u32 %v1532, 7
  %v1534 = vsub.s32 0, %v1533
  %v1535 = vrot.slane %v1392, %v1534
  %1537 = vrot.lane.b32.xlu0 %v1535, 8
  %v1538 = vpop.permute.xlu0 %1537
  %v1540 = vadd.f32 %v1470, %v1538
  %v1541 = vadd.f32 %v1473, %v1538
  %v1542 = vadd.f32 %v1478, %v1538
  %v1543 = vadd.f32 %v1481, %v1538
  %v1544 = vadd.f32 %v1486, %v1538
  %v1545 = vadd.f32 %v1489, %v1538
  %v1546 = vadd.f32 %v1494, %v1538
  %v1547 = vadd.f32 %v1497, %v1538
  %v1548 = vadd.f32 %v1502, %v1538
  %v1549 = vadd.f32 %v1505, %v1538
  %v1550 = vadd.f32 %v1510, %v1538
  %v1551 = vadd.f32 %v1513, %v1538
  %v1552 = vadd.f32 %v1518, %v1538
  %v1553 = vadd.f32 %v1521, %v1538
  %v1554 = vadd.f32 %v1526, %v1538
  %v1555 = vadd.f32 %v1529, %v1538
  %v1556 = vmax.f32 %v1540, 0.0
  %v1557 = vmax.f32 %v1541, 0.0
  %v1558 = vmax.f32 %v1542, 0.0
  %v1559 = vmax.f32 %v1543, 0.0
  %v1560 = vmax.f32 %v1544, 0.0
  %v1561 = vmax.f32 %v1545, 0.0
  %v1562 = vmax.f32 %v1546, 0.0
  %v1563 = vmax.f32 %v1547, 0.0
  %v1564 = vmax.f32 %v1548, 0.0
  %v1565 = vmax.f32 %v1549, 0.0
  %v1566 = vmax.f32 %v1550, 0.0
  %v1567 = vmax.f32 %v1551, 0.0
  %v1568 = vmax.f32 %v1552, 0.0
  %v1569 = vmax.f32 %v1553, 0.0
  %v1570 = vmax.f32 %v1554, 0.0
  %v1571 = vmax.f32 %v1555, 0.0
  %1588 = vrot.lane.b32.xlu0 %v1470, 112
  %v1589 = vpop.permute.xlu0 %1588
  %1590 = vrot.lane.b32.xlu0 %v1473, 112
  %v1591 = vpop.permute.xlu0 %1590
  %1592 = vrot.lane.b32.xlu0 %v1478, 112
  %v1593 = vpop.permute.xlu0 %1592
  %1594 = vrot.lane.b32.xlu0 %v1481, 112
  %v1595 = vpop.permute.xlu0 %1594
  %1596 = vrot.lane.b32.xlu0 %v1486, 112
  %v1597 = vpop.permute.xlu0 %1596
  %1598 = vrot.lane.b32.xlu0 %v1489, 112
  %v1599 = vpop.permute.xlu0 %1598
  %1600 = vrot.lane.b32.xlu0 %v1494, 112
  %v1601 = vpop.permute.xlu0 %1600
  %1602 = vrot.lane.b32.xlu0 %v1497, 112
  %v1603 = vpop.permute.xlu0 %1602
  %1604 = vrot.lane.b32.xlu0 %v1502, 112
  %v1605 = vpop.permute.xlu0 %1604
  %1606 = vrot.lane.b32.xlu0 %v1505, 112
  %v1607 = vpop.permute.xlu0 %1606
  %1608 = vrot.lane.b32.xlu0 %v1510, 112
  %v1609 = vpop.permute.xlu0 %1608
  %1610 = vrot.lane.b32.xlu0 %v1513, 112
  %v1611 = vpop.permute.xlu0 %1610
  %1612 = vrot.lane.b32.xlu0 %v1518, 112
  %v1613 = vpop.permute.xlu0 %1612
  %1614 = vrot.lane.b32.xlu0 %v1521, 112
  %v1615 = vpop.permute.xlu0 %1614
  %1616 = vrot.lane.b32.xlu0 %v1526, 112
  %v1617 = vpop.permute.xlu0 %1616
  %1618 = vrot.lane.b32.xlu0 %v1529, 112
  %v1619 = vpop.permute.xlu0 %1618
  %v1636 = vadd.f32 %v1473, %v1589
  %v1637 = vadd.f32 %v1478, %v1591
  %v1638 = vadd.f32 %v1481, %v1593
  %v1639 = vadd.f32 %v1486, %v1595
  %v1640 = vadd.f32 %v1489, %v1597
  %v1641 = vadd.f32 %v1494, %v1599
  %v1642 = vadd.f32 %v1497, %v1601
  %v1643 = vadd.f32 %v1502, %v1603
  %v1644 = vadd.f32 %v1505, %v1605
  %v1645 = vadd.f32 %v1510, %v1607
  %v1646 = vadd.f32 %v1513, %v1609
  %v1647 = vadd.f32 %v1518, %v1611
  %v1648 = vadd.f32 %v1521, %v1613
  %v1649 = vadd.f32 %v1526, %v1615
  %v1650 = vadd.f32 %v1529, %v1617
  %v1651 = vadd.f32 %v1619, 0.0
  %v1652 = vadd.f32 %v1636, %v1535
  %v1653 = vadd.f32 %v1637, %v1535
  %v1654 = vadd.f32 %v1638, %v1535
  %v1655 = vadd.f32 %v1639, %v1535
  %v1656 = vadd.f32 %v1640, %v1535
  %v1657 = vadd.f32 %v1641, %v1535
  %v1658 = vadd.f32 %v1642, %v1535
  %v1659 = vadd.f32 %v1643, %v1535
  %v1660 = vadd.f32 %v1644, %v1535
  %v1661 = vadd.f32 %v1645, %v1535
  %v1662 = vadd.f32 %v1646, %v1535
  %v1663 = vadd.f32 %v1647, %v1535
  %v1664 = vadd.f32 %v1648, %v1535
  %v1665 = vadd.f32 %v1649, %v1535
  %v1666 = vadd.f32 %v1650, %v1535
  %v1667 = vadd.f32 %v1651, %v1535
  %v1668 = vmax.f32 %v1652, 0.0
  %v1669 = vmax.f32 %v1653, 0.0
  %v1670 = vmax.f32 %v1654, 0.0
  %v1671 = vmax.f32 %v1655, 0.0
  %v1672 = vmax.f32 %v1656, 0.0
  %v1673 = vmax.f32 %v1657, 0.0
  %v1674 = vmax.f32 %v1658, 0.0
  %v1675 = vmax.f32 %v1659, 0.0
  %v1676 = vmax.f32 %v1660, 0.0
  %v1677 = vmax.f32 %v1661, 0.0
  %v1678 = vmax.f32 %v1662, 0.0
  %v1679 = vmax.f32 %v1663, 0.0
  %v1680 = vmax.f32 %v1664, 0.0
  %v1681 = vmax.f32 %v1665, 0.0
  %v1682 = vmax.f32 %v1666, 0.0
  %v1683 = vmax.f32 %v1667, 0.0
  %v1684 = vlaneseq
  %v1685 = vshrl.u32 %v1684, 7
  %v1686 = vsub.s32 0, %v1685
  %v1687 = vrot.slane %v1394, %v1686
  %1689 = vrot.lane.b32.xlu0 %v1687, 24
  %v1690 = vpop.permute.xlu0 %1689
  %v1692 = vadd.f32 %v1470, %v1690
  %v1693 = vadd.f32 %v1473, %v1690
  %v1694 = vadd.f32 %v1478, %v1690
  %v1695 = vadd.f32 %v1481, %v1690
  %v1696 = vadd.f32 %v1486, %v1690
  %v1697 = vadd.f32 %v1489, %v1690
  %v1698 = vadd.f32 %v1494, %v1690
  %v1699 = vadd.f32 %v1497, %v1690
  %v1700 = vadd.f32 %v1502, %v1690
  %v1701 = vadd.f32 %v1505, %v1690
  %v1702 = vadd.f32 %v1510, %v1690
  %v1703 = vadd.f32 %v1513, %v1690
  %v1704 = vadd.f32 %v1518, %v1690
  %v1705 = vadd.f32 %v1521, %v1690
  %v1706 = vadd.f32 %v1526, %v1690
  %v1707 = vadd.f32 %v1529, %v1690
  %1724 = vrot.lane.b32.xlu0 %v1668, 8
  %v1725 = vpop.permute.xlu0 %1724
  %1726 = vrot.lane.b32.xlu0 %v1669, 8
  %v1727 = vpop.permute.xlu0 %1726
  %1728 = vrot.lane.b32.xlu0 %v1670, 8
  %v1729 = vpop.permute.xlu0 %1728
  %1730 = vrot.lane.b32.xlu0 %v1671, 8
  %v1731 = vpop.permute.xlu0 %1730
  %1732 = vrot.lane.b32.xlu0 %v1672, 8
  %v1733 = vpop.permute.xlu0 %1732
  %1734 = vrot.lane.b32.xlu0 %v1673, 8
  %v1735 = vpop.permute.xlu0 %1734
  %1736 = vrot.lane.b32.xlu0 %v1674, 8
  %v1737 = vpop.permute.xlu0 %1736
  %1738 = vrot.lane.b32.xlu0 %v1675, 8
  %v1739 = vpop.permute.xlu0 %1738
  %1740 = vrot.lane.b32.xlu0 %v1676, 8
  %v1741 = vpop.permute.xlu0 %1740
  %1742 = vrot.lane.b32.xlu0 %v1677, 8
  %v1743 = vpop.permute.xlu0 %1742
  %1744 = vrot.lane.b32.xlu0 %v1678, 8
  %v1745 = vpop.permute.xlu0 %1744
  %1746 = vrot.lane.b32.xlu0 %v1679, 8
  %v1747 = vpop.permute.xlu0 %1746
  %1748 = vrot.lane.b32.xlu0 %v1680, 8
  %v1749 = vpop.permute.xlu0 %1748
  %1750 = vrot.lane.b32.xlu0 %v1681, 8
  %v1751 = vpop.permute.xlu0 %1750
  %1752 = vrot.lane.b32.xlu0 %v1682, 8
  %v1753 = vpop.permute.xlu0 %1752
  %1754 = vrot.lane.b32.xlu0 %v1683, 8
  %v1755 = vpop.permute.xlu0 %1754
  %v1772 = vpack.c.bf16 %v1557, %v1556
  %v1773 = vpack.c.bf16 %v1559, %v1558
  %v1774 = vpack.c.bf16 %v1561, %v1560
  %v1775 = vpack.c.bf16 %v1563, %v1562
  %v1776 = vpack.c.bf16 %v1565, %v1564
  %v1777 = vpack.c.bf16 %v1567, %v1566
  %v1778 = vpack.c.bf16 %v1569, %v1568
  %v1779 = vpack.c.bf16 %v1571, %v1570
  %v1780 = vpack.c.bf16 %v1727, %v1725
  %v1781 = vpack.c.bf16 %v1731, %v1729
  %v1782 = vpack.c.bf16 %v1735, %v1733
  %v1783 = vpack.c.bf16 %v1739, %v1737
  %v1784 = vpack.c.bf16 %v1743, %v1741
  %v1785 = vpack.c.bf16 %v1747, %v1745
  %v1786 = vpack.c.bf16 %v1751, %v1749
  %v1787 = vpack.c.bf16 %v1755, %v1753
  %v1788 = vld [vmem:[%s1 + $0x140] sm:$0xf]
  %1805 = vrot.lane.b32.xlu0 %v1772, 120
  %v1806 = vpop.permute.xlu0 %1805
  %1807 = vrot.lane.b32.xlu0 %v1773, 120
  %v1808 = vpop.permute.xlu0 %1807
  %1809 = vrot.lane.b32.xlu0 %v1774, 120
  %v1810 = vpop.permute.xlu0 %1809
  %1811 = vrot.lane.b32.xlu0 %v1775, 120
  %v1812 = vpop.permute.xlu0 %1811
  %1813 = vrot.lane.b32.xlu0 %v1776, 120
  %v1814 = vpop.permute.xlu0 %1813
  %1815 = vrot.lane.b32.xlu0 %v1777, 120
  %v1816 = vpop.permute.xlu0 %1815
  %1817 = vrot.lane.b32.xlu0 %v1778, 120
  %v1818 = vpop.permute.xlu0 %1817
  %1819 = vrot.lane.b32.xlu0 %v1779, 120
  %v1820 = vpop.permute.xlu0 %1819
  %1821 = vrot.lane.b32.xlu0 %v1780, 120
  %v1822 = vpop.permute.xlu0 %1821
  %1823 = vrot.lane.b32.xlu0 %v1781, 120
  %v1824 = vpop.permute.xlu0 %1823
  %1825 = vrot.lane.b32.xlu0 %v1782, 120
  %v1826 = vpop.permute.xlu0 %1825
  %1827 = vrot.lane.b32.xlu0 %v1783, 120
  %v1828 = vpop.permute.xlu0 %1827
  %1829 = vrot.lane.b32.xlu0 %v1784, 120
  %v1830 = vpop.permute.xlu0 %1829
  %1831 = vrot.lane.b32.xlu0 %v1785, 120
  %v1832 = vpop.permute.xlu0 %1831
  %1833 = vrot.lane.b32.xlu0 %v1786, 120
  %v1834 = vpop.permute.xlu0 %1833
  %1835 = vrot.lane.b32.xlu0 %v1787, 120
  %v1836 = vpop.permute.xlu0 %1835
  %vm1837 = vcmask 64512
  %v1839 = vsel %vm1837, %v1806, 0
  %v1842 = vsel %vm1837, %v1808, 0
  %v1845 = vsel %vm1837, %v1810, 0
  %v1848 = vsel %vm1837, %v1812, 0
  %v1851 = vsel %vm1837, %v1814, 0
  %v1854 = vsel %vm1837, %v1816, 0
  %v1857 = vsel %vm1837, %v1818, 0
  %v1860 = vsel %vm1837, %v1820, 0
  %v1863 = vsel %vm1837, %v1822, 0
  %v1866 = vsel %vm1837, %v1824, 0
  %v1869 = vsel %vm1837, %v1826, 0
  %v1872 = vsel %vm1837, %v1828, 0
  %v1875 = vsel %vm1837, %v1830, 0
  %v1878 = vsel %vm1837, %v1832, 0
  %v1881 = vsel %vm1837, %v1834, 0
  %v1884 = vsel %vm1837, %v1836, 0
  %vm1886 = vcmask 1043456
  %v1888 = vsel %vm1886, %v1788, 0
  %1890 = vmatprep.subr.bf16.mxu0 0
  %1891 = vmatpush1.bf16.msra.mxu0 %v1888
  %1892 = vmatprep.subr.bf16.mxu0 0
  %1893 = vmatpush1.bf16.msra.mxu0 0
  %1894 = vmatprep.subr.bf16.mxu0 0
  %1895 = vmatpush1.bf16.msra.mxu0 0
  %1896 = vmatprep.subr.bf16.mxu0 0
  %1897 = vmatpush1.bf16.msra.mxu0 0
  %1898 = vmatprep.subr.bf16.mxu0 0
  %1899 = vmatpush1.bf16.msra.mxu0 0
  %1900 = vmatprep.subr.bf16.mxu0 0
  %1901 = vmatpush1.bf16.msra.mxu0 0
  %1902 = vmatprep.subr.bf16.mxu0 0
  %1903 = vmatpush1.bf16.msra.mxu0 0
  %1904 = vmatprep.subr.bf16.mxu0 0
  %1905 = vmatpush1.bf16.msra.mxu0 0
  %1906 = vmatprep.subr.bf16.mxu0 0
  %1907 = vmatpush1.bf16.msra.mxu0 0
  %1908 = vmatprep.subr.bf16.mxu0 0
  %1909 = vmatpush1.bf16.msra.mxu0 0
  %1910 = vmatprep.subr.bf16.mxu0 0
  %1911 = vmatpush1.bf16.msra.mxu0 0
  %1912 = vmatprep.subr.bf16.mxu0 0
  %1913 = vmatpush1.bf16.msra.mxu0 0
  %1914 = vmatprep.subr.bf16.mxu0 0
  %1915 = vmatpush1.bf16.msra.mxu0 0
  %1916 = vmatprep.subr.bf16.mxu0 0
  %1917 = vmatpush1.bf16.msra.mxu0 0
  %1918 = vmatprep.subr.bf16.mxu0 0
  %1919 = vmatpush1.bf16.msra.mxu0 0
  %1920 = vmatprep.subr.bf16.mxu0 0
  %1921 = vmatpush1.bf16.msra.mxu0 0
  %1922 = vmatprep.mubr.bf16.mxu0 0
  %1923 = vmatmul.mubr.bf16.gmra.mrb[0].mxu0 %v1839
  %v1924 = vpop.f32.mrb[0].mxu0
  %v1925 = vadd.f32 0.0, %v1924
  %v1926 = vpop.f32.mrb[0].mxu0
  %v1927 = vpop.f32.mrb[0].mxu0
  %v1928 = vadd.f32 0.0, %v1927
  %v1929 = vpop.f32.mrb[0].mxu0
  %1930 = vmatprep.mubr.bf16.mxu0 0
  %1931 = vmatmul.mubr.bf16.gmra.mrb[0].mxu0 %v1842
  %v1932 = vpop.f32.mrb[0].mxu0
  %v1933 = vadd.f32 0.0, %v1932
  %v1934 = vpop.f32.mrb[0].mxu0
  %v1935 = vpop.f32.mrb[0].mxu0
  %v1936 = vadd.f32 0.0, %v1935
  %v1937 = vpop.f32.mrb[0].mxu0
  %1938 = vmatprep.mubr.bf16.mxu0 0
  %1939 = vmatmul.mubr.bf16.gmra.mrb[0].mxu0 %v1845
  %v1940 = vpop.f32.mrb[0].mxu0
  %v1941 = vadd.f32 0.0, %v1940
  %v1942 = vpop.f32.mrb[0].mxu0
  %v1943 = vpop.f32.mrb[0].mxu0
  %v1944 = vadd.f32 0.0, %v1943
  %v1945 = vpop.f32.mrb[0].mxu0
  %1946 = vmatprep.mubr.bf16.mxu0 0
  %1947 = vmatmul.mubr.bf16.gmra.mrb[0].mxu0 %v1848
  %v1948 = vpop.f32.mrb[0].mxu0
  %v1949 = vadd.f32 0.0, %v1948
  %v1950 = vpop.f32.mrb[0].mxu0
  %v1951 = vpop.f32.mrb[0].mxu0
  %v1952 = vadd.f32 0.0, %v1951
  %v1953 = vpop.f32.mrb[0].mxu0
  %1954 = vmatprep.mubr.bf16.mxu0 0
  %1955 = vmatmul.mubr.bf16.gmra.mrb[0].mxu0 %v1851
  %v1956 = vpop.f32.mrb[0].mxu0
  %v1957 = vadd.f32 0.0, %v1956
  %v1958 = vpop.f32.mrb[0].mxu0
  %v1959 = vpop.f32.mrb[0].mxu0
  %v1960 = vadd.f32 0.0, %v1959
  %v1961 = vpop.f32.mrb[0].mxu0
  %1962 = vmatprep.mubr.bf16.mxu0 0
  %1963 = vmatmul.mubr.bf16.gmra.mrb[0].mxu0 %v1854
  %v1964 = vpop.f32.mrb[0].mxu0
  %v1965 = vadd.f32 0.0, %v1964
  %v1966 = vpop.f32.mrb[0].mxu0
  %v1967 = vpop.f32.mrb[0].mxu0
  %v1968 = vadd.f32 0.0, %v1967
  %v1969 = vpop.f32.mrb[0].mxu0
  %1970 = vmatprep.mubr.bf16.mxu0 0
  %1971 = vmatmul.mubr.bf16.gmra.mrb[0].mxu0 %v1857
  %v1972 = vpop.f32.mrb[0].mxu0
  %v1973 = vadd.f32 0.0, %v1972
  %v1974 = vpop.f32.mrb[0].mxu0
  %v1975 = vpop.f32.mrb[0].mxu0
  %v1976 = vadd.f32 0.0, %v1975
  %v1977 = vpop.f32.mrb[0].mxu0
  %1978 = vmatprep.mubr.bf16.mxu0 0
  %1979 = vmatmul.mubr.bf16.gmra.mrb[0].mxu0 %v1860
  %v1980 = vpop.f32.mrb[0].mxu0
  %v1981 = vadd.f32 0.0, %v1980
  %v1982 = vpop.f32.mrb[0].mxu0
  %v1983 = vpop.f32.mrb[0].mxu0
  %v1984 = vadd.f32 0.0, %v1983
  %v1985 = vpop.f32.mrb[0].mxu0
  %1986 = vmatprep.mubr.bf16.mxu0 0
  %1987 = vmatmul.mubr.bf16.gmra.mrb[0].mxu0 %v1863
  %v1988 = vpop.f32.mrb[0].mxu0
  %v1989 = vadd.f32 0.0, %v1988
  %v1990 = vpop.f32.mrb[0].mxu0
  %v1991 = vpop.f32.mrb[0].mxu0
  %v1992 = vadd.f32 0.0, %v1991
  %v1993 = vpop.f32.mrb[0].mxu0
  %1994 = vmatprep.mubr.bf16.mxu0 0
  %1995 = vmatmul.mubr.bf16.gmra.mrb[0].mxu0 %v1866
  %v1996 = vpop.f32.mrb[0].mxu0
  %v1997 = vadd.f32 0.0, %v1996
  %v1998 = vpop.f32.mrb[0].mxu0
  %v1999 = vpop.f32.mrb[0].mxu0
  %v2000 = vadd.f32 0.0, %v1999
  %v2001 = vpop.f32.mrb[0].mxu0
  %2002 = vmatprep.mubr.bf16.mxu0 0
  %2003 = vmatmul.mubr.bf16.gmra.mrb[0].mxu0 %v1869
  %v2004 = vpop.f32.mrb[0].mxu0
  %v2005 = vadd.f32 0.0, %v2004
  %v2006 = vpop.f32.mrb[0].mxu0
  %v2007 = vpop.f32.mrb[0].mxu0
  %v2008 = vadd.f32 0.0, %v2007
  %v2009 = vpop.f32.mrb[0].mxu0
  %2010 = vmatprep.mubr.bf16.mxu0 0
  %2011 = vmatmul.mubr.bf16.gmra.mrb[0].mxu0 %v1872
  %v2012 = vpop.f32.mrb[0].mxu0
  %v2013 = vadd.f32 0.0, %v2012
  %v2014 = vpop.f32.mrb[0].mxu0
  %v2015 = vpop.f32.mrb[0].mxu0
  %v2016 = vadd.f32 0.0, %v2015
  %v2017 = vpop.f32.mrb[0].mxu0
  %2018 = vmatprep.mubr.bf16.mxu0 0
  %2019 = vmatmul.mubr.bf16.gmra.mrb[0].mxu0 %v1875
  %v2020 = vpop.f32.mrb[0].mxu0
  %v2021 = vadd.f32 0.0, %v2020
  %v2022 = vpop.f32.mrb[0].mxu0
  %v2023 = vpop.f32.mrb[0].mxu0
  %v2024 = vadd.f32 0.0, %v2023
  %v2025 = vpop.f32.mrb[0].mxu0
  %2026 = vmatprep.mubr.bf16.mxu0 0
  %2027 = vmatmul.mubr.bf16.gmra.mrb[0].mxu0 %v1878
  %v2028 = vpop.f32.mrb[0].mxu0
  %v2029 = vadd.f32 0.0, %v2028
  %v2030 = vpop.f32.mrb[0].mxu0
  %v2031 = vpop.f32.mrb[0].mxu0
  %v2032 = vadd.f32 0.0, %v2031
  %v2033 = vpop.f32.mrb[0].mxu0
  %2034 = vmatprep.mubr.bf16.mxu0 0
  %2035 = vmatmul.mubr.bf16.gmra.mrb[0].mxu0 %v1881
  %v2036 = vpop.f32.mrb[0].mxu0
  %v2037 = vadd.f32 0.0, %v2036
  %v2038 = vpop.f32.mrb[0].mxu0
  %v2039 = vpop.f32.mrb[0].mxu0
  %v2040 = vadd.f32 0.0, %v2039
  %v2041 = vpop.f32.mrb[0].mxu0
  %2042 = vmatprep.mubr.bf16.mxu0 0
  %2043 = vmatmul.mubr.bf16.gmra.mrb[0].mxu0 %v1884
  %v2044 = vpop.f32.mrb[0].mxu0
  %v2045 = vadd.f32 0.0, %v2044
  %v2046 = vpop.f32.mrb[0].mxu0
  %v2047 = vpop.f32.mrb[0].mxu0
  %v2048 = vadd.f32 0.0, %v2047
  %v2049 = vpop.f32.mrb[0].mxu0
  %2050 = vdwg.mxu0
  %2067 = vrot.lane.b32.xlu0 %v1925, 120
  %v2068 = vpop.permute.xlu0 %2067
  %2069 = vrot.lane.b32.xlu0 %v1928, 120
  %v2070 = vpop.permute.xlu0 %2069
  %2071 = vrot.lane.b32.xlu0 %v1933, 120
  %v2072 = vpop.permute.xlu0 %2071
  %2073 = vrot.lane.b32.xlu0 %v1936, 120
  %v2074 = vpop.permute.xlu0 %2073
  %2075 = vrot.lane.b32.xlu0 %v1941, 120
  %v2076 = vpop.permute.xlu0 %2075
  %2077 = vrot.lane.b32.xlu0 %v1944, 120
  %v2078 = vpop.permute.xlu0 %2077
  %2079 = vrot.lane.b32.xlu0 %v1949, 120
  %v2080 = vpop.permute.xlu0 %2079
  %2081 = vrot.lane.b32.xlu0 %v1952, 120
  %v2082 = vpop.permute.xlu0 %2081
  %2083 = vrot.lane.b32.xlu0 %v1957, 120
  %v2084 = vpop.permute.xlu0 %2083
  %2085 = vrot.lane.b32.xlu0 %v1960, 120
  %v2086 = vpop.permute.xlu0 %2085
  %2087 = vrot.lane.b32.xlu0 %v1965, 120
  %v2088 = vpop.permute.xlu0 %2087
  %2089 = vrot.lane.b32.xlu0 %v1968, 120
  %v2090 = vpop.permute.xlu0 %2089
  %2091 = vrot.lane.b32.xlu0 %v1973, 120
  %v2092 = vpop.permute.xlu0 %2091
  %2093 = vrot.lane.b32.xlu0 %v1976, 120
  %v2094 = vpop.permute.xlu0 %2093
  %2095 = vrot.lane.b32.xlu0 %v1981, 120
  %v2096 = vpop.permute.xlu0 %2095
  %2097 = vrot.lane.b32.xlu0 %v1984, 120
  %v2098 = vpop.permute.xlu0 %2097
  %v2115 = vadd.f32 %v2068, 0.0
  %v2116 = vadd.f32 %v1989, %v2070
  %v2117 = vadd.f32 %v1992, %v2072
  %v2118 = vadd.f32 %v1997, %v2074
  %v2119 = vadd.f32 %v2000, %v2076
  %v2120 = vadd.f32 %v2005, %v2078
  %v2121 = vadd.f32 %v2008, %v2080
  %v2122 = vadd.f32 %v2013, %v2082
  %v2123 = vadd.f32 %v2016, %v2084
  %v2124 = vadd.f32 %v2021, %v2086
  %v2125 = vadd.f32 %v2024, %v2088
  %v2126 = vadd.f32 %v2029, %v2090
  %v2127 = vadd.f32 %v2032, %v2092
  %v2128 = vadd.f32 %v2037, %v2094
  %v2129 = vadd.f32 %v2040, %v2096
  %v2130 = vadd.f32 %v2045, %v2098
  %2147 = vrot.lane.b32.xlu0 %v1989, 112
  %v2148 = vpop.permute.xlu0 %2147
  %2149 = vrot.lane.b32.xlu0 %v1992, 112
  %v2150 = vpop.permute.xlu0 %2149
  %2151 = vrot.lane.b32.xlu0 %v1997, 112
  %v2152 = vpop.permute.xlu0 %2151
  %2153 = vrot.lane.b32.xlu0 %v2000, 112
  %v2154 = vpop.permute.xlu0 %2153
  %2155 = vrot.lane.b32.xlu0 %v2005, 112
  %v2156 = vpop.permute.xlu0 %2155
  %2157 = vrot.lane.b32.xlu0 %v2008, 112
  %v2158 = vpop.permute.xlu0 %2157
  %2159 = vrot.lane.b32.xlu0 %v2013, 112
  %v2160 = vpop.permute.xlu0 %2159
  %2161 = vrot.lane.b32.xlu0 %v2016, 112
  %v2162 = vpop.permute.xlu0 %2161
  %2163 = vrot.lane.b32.xlu0 %v2021, 112
  %v2164 = vpop.permute.xlu0 %2163
  %2165 = vrot.lane.b32.xlu0 %v2024, 112
  %v2166 = vpop.permute.xlu0 %2165
  %2167 = vrot.lane.b32.xlu0 %v2029, 112
  %v2168 = vpop.permute.xlu0 %2167
  %2169 = vrot.lane.b32.xlu0 %v2032, 112
  %v2170 = vpop.permute.xlu0 %2169
  %2171 = vrot.lane.b32.xlu0 %v2037, 112
  %v2172 = vpop.permute.xlu0 %2171
  %2173 = vrot.lane.b32.xlu0 %v2040, 112
  %v2174 = vpop.permute.xlu0 %2173
  %2175 = vrot.lane.b32.xlu0 %v2045, 112
  %v2176 = vpop.permute.xlu0 %2175
  %2177 = vrot.lane.b32.xlu0 %v2048, 112
  %v2178 = vpop.permute.xlu0 %2177
  %v2195 = vadd.f32 %v2115, %v2148
  %v2196 = vadd.f32 %v2116, %v2150
  %v2197 = vadd.f32 %v2117, %v2152
  %v2198 = vadd.f32 %v2118, %v2154
  %v2199 = vadd.f32 %v2119, %v2156
  %v2200 = vadd.f32 %v2120, %v2158
  %v2201 = vadd.f32 %v2121, %v2160
  %v2202 = vadd.f32 %v2122, %v2162
  %v2203 = vadd.f32 %v2123, %v2164
  %v2204 = vadd.f32 %v2124, %v2166
  %v2205 = vadd.f32 %v2125, %v2168
  %v2206 = vadd.f32 %v2126, %v2170
  %v2207 = vadd.f32 %v2127, %v2172
  %v2208 = vadd.f32 %v2128, %v2174
  %v2209 = vadd.f32 %v2129, %v2176
  %v2210 = vadd.f32 %v2130, %v2178
  %v2211 = vlaneseq
  %v2212 = vshrl.u32 %v2211, 7
  %v2213 = vsub.s32 0, %v2212
  %v2214 = vrot.slane %v1393, %v2213
  %v2215 = vadd.f32 %v2195, %v2214
  %v2216 = vadd.f32 %v2196, %v2214
  %v2217 = vadd.f32 %v2197, %v2214
  %v2218 = vadd.f32 %v2198, %v2214
  %v2219 = vadd.f32 %v2199, %v2214
  %v2220 = vadd.f32 %v2200, %v2214
  %v2221 = vadd.f32 %v2201, %v2214
  %v2222 = vadd.f32 %v2202, %v2214
  %v2223 = vadd.f32 %v2203, %v2214
  %v2224 = vadd.f32 %v2204, %v2214
  %v2225 = vadd.f32 %v2205, %v2214
  %v2226 = vadd.f32 %v2206, %v2214
  %v2227 = vadd.f32 %v2207, %v2214
  %v2228 = vadd.f32 %v2208, %v2214
  %v2229 = vadd.f32 %v2209, %v2214
  %v2230 = vadd.f32 %v2210, %v2214
  %2231 = vrot.lane.b32.xlu0 %v1989, 120
  %v2232 = vpop.permute.xlu0 %2231
  %2233 = vrot.lane.b32.xlu0 %v1992, 120
  %v2234 = vpop.permute.xlu0 %2233
  %2235 = vrot.lane.b32.xlu0 %v1997, 120
  %v2236 = vpop.permute.xlu0 %2235
  %2237 = vrot.lane.b32.xlu0 %v2000, 120
  %v2238 = vpop.permute.xlu0 %2237
  %2239 = vrot.lane.b32.xlu0 %v2005, 120
  %v2240 = vpop.permute.xlu0 %2239
  %2241 = vrot.lane.b32.xlu0 %v2008, 120
  %v2242 = vpop.permute.xlu0 %2241
  %2243 = vrot.lane.b32.xlu0 %v2013, 120
  %v2244 = vpop.permute.xlu0 %2243
  %2245 = vrot.lane.b32.xlu0 %v2016, 120
  %v2246 = vpop.permute.xlu0 %2245
  %2247 = vrot.lane.b32.xlu0 %v2021, 120
  %v2248 = vpop.permute.xlu0 %2247
  %2249 = vrot.lane.b32.xlu0 %v2024, 120
  %v2250 = vpop.permute.xlu0 %2249
  %2251 = vrot.lane.b32.xlu0 %v2029, 120
  %v2252 = vpop.permute.xlu0 %2251
  %2253 = vrot.lane.b32.xlu0 %v2032, 120
  %v2254 = vpop.permute.xlu0 %2253
  %2255 = vrot.lane.b32.xlu0 %v2037, 120
  %v2256 = vpop.permute.xlu0 %2255
  %2257 = vrot.lane.b32.xlu0 %v2040, 120
  %v2258 = vpop.permute.xlu0 %2257
  %2259 = vrot.lane.b32.xlu0 %v2045, 120
  %v2260 = vpop.permute.xlu0 %2259
  %2261 = vrot.lane.b32.xlu0 %v2048, 120
  %v2262 = vpop.permute.xlu0 %2261
  %v2279 = vadd.f32 %v1925, %v2232
  %v2280 = vadd.f32 %v1928, %v2234
  %v2281 = vadd.f32 %v1933, %v2236
  %v2282 = vadd.f32 %v1936, %v2238
  %v2283 = vadd.f32 %v1941, %v2240
  %v2284 = vadd.f32 %v1944, %v2242
  %v2285 = vadd.f32 %v1949, %v2244
  %v2286 = vadd.f32 %v1952, %v2246
  %v2287 = vadd.f32 %v1957, %v2248
  %v2288 = vadd.f32 %v1960, %v2250
  %v2289 = vadd.f32 %v1965, %v2252
  %v2290 = vadd.f32 %v1968, %v2254
  %v2291 = vadd.f32 %v1973, %v2256
  %v2292 = vadd.f32 %v1976, %v2258
  %v2293 = vadd.f32 %v1981, %v2260
  %v2294 = vadd.f32 %v1984, %v2262
  %2295 = vrot.lane.b32.xlu0 %v1928, 112
  %v2296 = vpop.permute.xlu0 %2295
  %2297 = vrot.lane.b32.xlu0 %v1933, 112
  %v2298 = vpop.permute.xlu0 %2297
  %2299 = vrot.lane.b32.xlu0 %v1936, 112
  %v2300 = vpop.permute.xlu0 %2299
  %2301 = vrot.lane.b32.xlu0 %v1941, 112
  %v2302 = vpop.permute.xlu0 %2301
  %2303 = vrot.lane.b32.xlu0 %v1944, 112
  %v2304 = vpop.permute.xlu0 %2303
  %2305 = vrot.lane.b32.xlu0 %v1949, 112
  %v2306 = vpop.permute.xlu0 %2305
  %2307 = vrot.lane.b32.xlu0 %v1952, 112
  %v2308 = vpop.permute.xlu0 %2307
  %2309 = vrot.lane.b32.xlu0 %v1957, 112
  %v2310 = vpop.permute.xlu0 %2309
  %2311 = vrot.lane.b32.xlu0 %v1960, 112
  %v2312 = vpop.permute.xlu0 %2311
  %2313 = vrot.lane.b32.xlu0 %v1965, 112
  %v2314 = vpop.permute.xlu0 %2313
  %2315 = vrot.lane.b32.xlu0 %v1968, 112
  %v2316 = vpop.permute.xlu0 %2315
  %2317 = vrot.lane.b32.xlu0 %v1973, 112
  %v2318 = vpop.permute.xlu0 %2317
  %2319 = vrot.lane.b32.xlu0 %v1976, 112
  %v2320 = vpop.permute.xlu0 %2319
  %2321 = vrot.lane.b32.xlu0 %v1981, 112
  %v2322 = vpop.permute.xlu0 %2321
  %2323 = vrot.lane.b32.xlu0 %v1984, 112
  %v2324 = vpop.permute.xlu0 %2323
  %2325 = vrot.lane.b32.xlu0 0.0, 112
  %v2326 = vpop.permute.xlu0 %2325
  %v2343 = vadd.f32 %v2279, %v2296
  %v2344 = vadd.f32 %v2280, %v2298
  %v2345 = vadd.f32 %v2281, %v2300
  %v2346 = vadd.f32 %v2282, %v2302
  %v2347 = vadd.f32 %v2283, %v2304
  %v2348 = vadd.f32 %v2284, %v2306
  %v2349 = vadd.f32 %v2285, %v2308
  %v2350 = vadd.f32 %v2286, %v2310
  %v2351 = vadd.f32 %v2287, %v2312
  %v2352 = vadd.f32 %v2288, %v2314
  %v2353 = vadd.f32 %v2289, %v2316
  %v2354 = vadd.f32 %v2290, %v2318
  %v2355 = vadd.f32 %v2291, %v2320
  %v2356 = vadd.f32 %v2292, %v2322
  %v2357 = vadd.f32 %v2293, %v2324
  %v2358 = vadd.f32 %v2294, %v2326
  %v2359 = vadd.f32 %v2343, %v2214
  %v2360 = vadd.f32 %v2344, %v2214
  %v2361 = vadd.f32 %v2345, %v2214
  %v2362 = vadd.f32 %v2346, %v2214
  %v2363 = vadd.f32 %v2347, %v2214
  %v2364 = vadd.f32 %v2348, %v2214
  %v2365 = vadd.f32 %v2349, %v2214
  %v2366 = vadd.f32 %v2350, %v2214
  %v2367 = vadd.f32 %v2351, %v2214
  %v2368 = vadd.f32 %v2352, %v2214
  %v2369 = vadd.f32 %v2353, %v2214
  %v2370 = vadd.f32 %v2354, %v2214
  %v2371 = vadd.f32 %v2355, %v2214
  %v2372 = vadd.f32 %v2356, %v2214
  %v2373 = vadd.f32 %v2357, %v2214
  %v2374 = vadd.f32 %v2358, %v2214
  %2391 = vrot.lane.b32.xlu0 %v1692, 104
  %v2392 = vpop.permute.xlu0 %2391
  %2393 = vrot.lane.b32.xlu0 %v1693, 104
  %v2394 = vpop.permute.xlu0 %2393
  %2395 = vrot.lane.b32.xlu0 %v1694, 104
  %v2396 = vpop.permute.xlu0 %2395
  %2397 = vrot.lane.b32.xlu0 %v1695, 104
  %v2398 = vpop.permute.xlu0 %2397
  %2399 = vrot.lane.b32.xlu0 %v1696, 104
  %v2400 = vpop.permute.xlu0 %2399
  %2401 = vrot.lane.b32.xlu0 %v1697, 104
  %v2402 = vpop.permute.xlu0 %2401
  %2403 = vrot.lane.b32.xlu0 %v1698, 104
  %v2404 = vpop.permute.xlu0 %2403
  %2405 = vrot.lane.b32.xlu0 %v1699, 104
  %v2406 = vpop.permute.xlu0 %2405
  %2407 = vrot.lane.b32.xlu0 %v1700, 104
  %v2408 = vpop.permute.xlu0 %2407
  %2409 = vrot.lane.b32.xlu0 %v1701, 104
  %v2410 = vpop.permute.xlu0 %2409
  %2411 = vrot.lane.b32.xlu0 %v1702, 104
  %v2412 = vpop.permute.xlu0 %2411
  %2413 = vrot.lane.b32.xlu0 %v1703, 104
  %v2414 = vpop.permute.xlu0 %2413
  %2415 = vrot.lane.b32.xlu0 %v1704, 104
  %v2416 = vpop.permute.xlu0 %2415
  %2417 = vrot.lane.b32.xlu0 %v1705, 104
  %v2418 = vpop.permute.xlu0 %2417
  %2419 = vrot.lane.b32.xlu0 %v1706, 104
  %v2420 = vpop.permute.xlu0 %2419
  %2421 = vrot.lane.b32.xlu0 %v1707, 104
  %v2422 = vpop.permute.xlu0 %2421
  %v2439 = vadd.f32 %v2215, %v2392
  %v2440 = vadd.f32 %v2216, %v2394
  %v2441 = vadd.f32 %v2217, %v2396
  %v2442 = vadd.f32 %v2218, %v2398
  %v2443 = vadd.f32 %v2219, %v2400
  %v2444 = vadd.f32 %v2220, %v2402
  %v2445 = vadd.f32 %v2221, %v2404
  %v2446 = vadd.f32 %v2222, %v2406
  %v2447 = vadd.f32 %v2223, %v2408
  %v2448 = vadd.f32 %v2224, %v2410
  %v2449 = vadd.f32 %v2225, %v2412
  %v2450 = vadd.f32 %v2226, %v2414
  %v2451 = vadd.f32 %v2227, %v2416
  %v2452 = vadd.f32 %v2228, %v2418
  %v2453 = vadd.f32 %v2229, %v2420
  %v2454 = vadd.f32 %v2230, %v2422
  %v2455 = vmax.f32 %v2439, 0.0
  %v2456 = vmax.f32 %v2440, 0.0
  %v2457 = vmax.f32 %v2441, 0.0
  %v2458 = vmax.f32 %v2442, 0.0
  %v2459 = vmax.f32 %v2443, 0.0
  %v2460 = vmax.f32 %v2444, 0.0
  %v2461 = vmax.f32 %v2445, 0.0
  %v2462 = vmax.f32 %v2446, 0.0
  %v2463 = vmax.f32 %v2447, 0.0
  %v2464 = vmax.f32 %v2448, 0.0
  %v2465 = vmax.f32 %v2449, 0.0
  %v2466 = vmax.f32 %v2450, 0.0
  %v2467 = vmax.f32 %v2451, 0.0
  %v2468 = vmax.f32 %v2452, 0.0
  %v2469 = vmax.f32 %v2453, 0.0
  %v2470 = vmax.f32 %v2454, 0.0
  %v2471 = vadd.f32 %v2359, %v1687
  %v2472 = vadd.f32 %v2360, %v1687
  %v2473 = vadd.f32 %v2361, %v1687
  %v2474 = vadd.f32 %v2362, %v1687
  %v2475 = vadd.f32 %v2363, %v1687
  %v2476 = vadd.f32 %v2364, %v1687
  %v2477 = vadd.f32 %v2365, %v1687
  %v2478 = vadd.f32 %v2366, %v1687
  %v2479 = vadd.f32 %v2367, %v1687
  %v2480 = vadd.f32 %v2368, %v1687
  %v2481 = vadd.f32 %v2369, %v1687
  %v2482 = vadd.f32 %v2370, %v1687
  %v2483 = vadd.f32 %v2371, %v1687
  %v2484 = vadd.f32 %v2372, %v1687
  %v2485 = vadd.f32 %v2373, %v1687
  %v2486 = vadd.f32 %v2374, %v1687
  %v2487 = vmax.f32 %v2471, 0.0
  %v2488 = vmax.f32 %v2472, 0.0
  %v2489 = vmax.f32 %v2473, 0.0
  %v2490 = vmax.f32 %v2474, 0.0
  %v2491 = vmax.f32 %v2475, 0.0
  %v2492 = vmax.f32 %v2476, 0.0
  %v2493 = vmax.f32 %v2477, 0.0
  %v2494 = vmax.f32 %v2478, 0.0
  %v2495 = vmax.f32 %v2479, 0.0
  %v2496 = vmax.f32 %v2480, 0.0
  %v2497 = vmax.f32 %v2481, 0.0
  %v2498 = vmax.f32 %v2482, 0.0
  %v2499 = vmax.f32 %v2483, 0.0
  %v2500 = vmax.f32 %v2484, 0.0
  %v2501 = vmax.f32 %v2485, 0.0
  %v2502 = vmax.f32 %v2486, 0.0
  %v2503 = vpack.c.bf16 %v2487, %v2455
  %v2504 = vpack.c.bf16 %v2488, %v2456
  %v2505 = vpack.c.bf16 %v2489, %v2457
  %v2506 = vpack.c.bf16 %v2490, %v2458
  %v2507 = vpack.c.bf16 %v2491, %v2459
  %v2508 = vpack.c.bf16 %v2492, %v2460
  %v2509 = vpack.c.bf16 %v2493, %v2461
  %v2510 = vpack.c.bf16 %v2494, %v2462
  %v2511 = vpack.c.bf16 %v2495, %v2463
  %v2512 = vpack.c.bf16 %v2496, %v2464
  %v2513 = vpack.c.bf16 %v2497, %v2465
  %v2514 = vpack.c.bf16 %v2498, %v2466
  %v2515 = vpack.c.bf16 %v2499, %v2467
  %v2516 = vpack.c.bf16 %v2500, %v2468
  %v2517 = vpack.c.bf16 %v2501, %v2469
  %v2518 = vpack.c.bf16 %v2502, %v2470
  %v2519 = vld [vmem:[%s1 + $0x150] sm:$0xf]
  %v2521 = vsel %vm1837, %v2503, 0
  %v2524 = vsel %vm1837, %v2504, 0
  %v2527 = vsel %vm1837, %v2505, 0
  %v2530 = vsel %vm1837, %v2506, 0
  %v2533 = vsel %vm1837, %v2507, 0
  %v2536 = vsel %vm1837, %v2508, 0
  %v2539 = vsel %vm1837, %v2509, 0
  %v2542 = vsel %vm1837, %v2510, 0
  %v2545 = vsel %vm1837, %v2511, 0
  %v2548 = vsel %vm1837, %v2512, 0
  %v2551 = vsel %vm1837, %v2513, 0
  %v2554 = vsel %vm1837, %v2514, 0
  %v2557 = vsel %vm1837, %v2515, 0
  %v2560 = vsel %vm1837, %v2516, 0
  %v2563 = vsel %vm1837, %v2517, 0
  %v2566 = vsel %vm1837, %v2518, 0
  %v2569 = vsel %vm1886, %v2519, 0
  %2571 = vmatprep.subr.bf16.mxu0 0
  %2572 = vmatpush1.bf16.msra.mxu0 %v2569
  %2573 = vmatprep.subr.bf16.mxu0 0
  %2574 = vmatpush1.bf16.msra.mxu0 0
  %2575 = vmatprep.subr.bf16.mxu0 0
  %2576 = vmatpush1.bf16.msra.mxu0 0
  %2577 = vmatprep.subr.bf16.mxu0 0
  %2578 = vmatpush1.bf16.msra.mxu0 0
  %2579 = vmatprep.subr.bf16.mxu0 0
  %2580 = vmatpush1.bf16.msra.mxu0 0
  %2581 = vmatprep.subr.bf16.mxu0 0
  %2582 = vmatpush1.bf16.msra.mxu0 0
  %2583 = vmatprep.subr.bf16.mxu0 0
  %2584 = vmatpush1.bf16.msra.mxu0 0
  %2585 = vmatprep.subr.bf16.mxu0 0
  %2586 = vmatpush1.bf16.msra.mxu0 0
  %2587 = vmatprep.subr.bf16.mxu0 0
  %2588 = vmatpush1.bf16.msra.mxu0 0
  %2589 = vmatprep.subr.bf16.mxu0 0
  %2590 = vmatpush1.bf16.msra.mxu0 0
  %2591 = vmatprep.subr.bf16.mxu0 0
  %2592 = vmatpush1.bf16.msra.mxu0 0
  %2593 = vmatprep.subr.bf16.mxu0 0
  %2594 = vmatpush1.bf16.msra.mxu0 0
  %2595 = vmatprep.subr.bf16.mxu0 0
  %2596 = vmatpush1.bf16.msra.mxu0 0
  %2597 = vmatprep.subr.bf16.mxu0 0
  %2598 = vmatpush1.bf16.msra.mxu0 0
  %2599 = vmatprep.subr.bf16.mxu0 0
  %2600 = vmatpush1.bf16.msra.mxu0 0
  %2601 = vmatprep.subr.bf16.mxu0 0
  %2602 = vmatpush1.bf16.msra.mxu0 0
  %2603 = vmatprep.mubr.bf16.mxu0 0
  %2604 = vmatmul.mubr.bf16.gmra.mrb[0].mxu0 %v2521
  %v2605 = vpop.f32.mrb[0].mxu0
  %v2606 = vpop.f32.mrb[0].mxu0
  %v2607 = vpop.f32.mrb[0].mxu0
  %v2608 = vpop.f32.mrb[0].mxu0
  %2609 = vmatprep.mubr.bf16.mxu0 0
  %2610 = vmatmul.mubr.bf16.gmra.mrb[0].mxu0 %v2524
  %v2611 = vpop.f32.mrb[0].mxu0
  %v2612 = vadd.f32 0.0, %v2611
  %v2613 = vpop.f32.mrb[0].mxu0
  %v2614 = vpop.f32.mrb[0].mxu0
  %v2615 = vadd.f32 0.0, %v2614
  %v2616 = vpop.f32.mrb[0].mxu0
  %2617 = vmatprep.mubr.bf16.mxu0 0
  %2618 = vmatmul.mubr.bf16.gmra.mrb[0].mxu0 %v2527
  %v2619 = vpop.f32.mrb[0].mxu0
  %v2620 = vadd.f32 0.0, %v2619
  %v2621 = vpop.f32.mrb[0].mxu0
  %v2622 = vpop.f32.mrb[0].mxu0
  %v2623 = vadd.f32 0.0, %v2622
  %v2624 = vpop.f32.mrb[0].mxu0
  %2625 = vmatprep.mubr.bf16.mxu0 0
  %2626 = vmatmul.mubr.bf16.gmra.mrb[0].mxu0 %v2530
  %v2627 = vpop.f32.mrb[0].mxu0
  %v2628 = vadd.f32 0.0, %v2627
  %v2629 = vpop.f32.mrb[0].mxu0
  %v2630 = vpop.f32.mrb[0].mxu0
  %v2631 = vadd.f32 0.0, %v2630
  %v2632 = vpop.f32.mrb[0].mxu0
  %2633 = vmatprep.mubr.bf16.mxu0 0
  %2634 = vmatmul.mubr.bf16.gmra.mrb[0].mxu0 %v2533
  %v2635 = vpop.f32.mrb[0].mxu0
  %v2636 = vadd.f32 0.0, %v2635
  %v2637 = vpop.f32.mrb[0].mxu0
  %v2638 = vpop.f32.mrb[0].mxu0
  %v2639 = vadd.f32 0.0, %v2638
  %v2640 = vpop.f32.mrb[0].mxu0
  %2641 = vmatprep.mubr.bf16.mxu0 0
  %2642 = vmatmul.mubr.bf16.gmra.mrb[0].mxu0 %v2536
  %v2643 = vpop.f32.mrb[0].mxu0
  %v2644 = vadd.f32 0.0, %v2643
  %v2645 = vpop.f32.mrb[0].mxu0
  %v2646 = vpop.f32.mrb[0].mxu0
  %v2647 = vadd.f32 0.0, %v2646
  %v2648 = vpop.f32.mrb[0].mxu0
  %2649 = vmatprep.mubr.bf16.mxu0 0
  %2650 = vmatmul.mubr.bf16.gmra.mrb[0].mxu0 %v2539
  %v2651 = vpop.f32.mrb[0].mxu0
  %v2652 = vadd.f32 0.0, %v2651
  %v2653 = vpop.f32.mrb[0].mxu0
  %v2654 = vpop.f32.mrb[0].mxu0
  %v2655 = vadd.f32 0.0, %v2654
  %v2656 = vpop.f32.mrb[0].mxu0
  %2657 = vmatprep.mubr.bf16.mxu0 0
  %2658 = vmatmul.mubr.bf16.gmra.mrb[0].mxu0 %v2542
  %v2659 = vpop.f32.mrb[0].mxu0
  %v2660 = vadd.f32 0.0, %v2659
  %v2661 = vpop.f32.mrb[0].mxu0
  %v2662 = vpop.f32.mrb[0].mxu0
  %v2663 = vadd.f32 0.0, %v2662
  %v2664 = vpop.f32.mrb[0].mxu0
  %2665 = vmatprep.mubr.bf16.mxu0 0
  %2666 = vmatmul.mubr.bf16.gmra.mrb[0].mxu0 %v2545
  %v2667 = vpop.f32.mrb[0].mxu0
  %v2668 = vadd.f32 0.0, %v2667
  %v2669 = vpop.f32.mrb[0].mxu0
  %v2670 = vpop.f32.mrb[0].mxu0
  %v2671 = vadd.f32 0.0, %v2670
  %v2672 = vpop.f32.mrb[0].mxu0
  %2673 = vmatprep.mubr.bf16.mxu0 0
  %2674 = vmatmul.mubr.bf16.gmra.mrb[0].mxu0 %v2548
  %v2675 = vpop.f32.mrb[0].mxu0
  %v2676 = vadd.f32 0.0, %v2675
  %v2677 = vpop.f32.mrb[0].mxu0
  %v2678 = vpop.f32.mrb[0].mxu0
  %v2679 = vadd.f32 0.0, %v2678
  %v2680 = vpop.f32.mrb[0].mxu0
  %2681 = vmatprep.mubr.bf16.mxu0 0
  %2682 = vmatmul.mubr.bf16.gmra.mrb[0].mxu0 %v2551
  %v2683 = vpop.f32.mrb[0].mxu0
  %v2684 = vadd.f32 0.0, %v2683
  %v2685 = vpop.f32.mrb[0].mxu0
  %v2686 = vpop.f32.mrb[0].mxu0
  %v2687 = vadd.f32 0.0, %v2686
  %v2688 = vpop.f32.mrb[0].mxu0
  %2689 = vmatprep.mubr.bf16.mxu0 0
  %2690 = vmatmul.mubr.bf16.gmra.mrb[0].mxu0 %v2554
  %v2691 = vpop.f32.mrb[0].mxu0
  %v2692 = vadd.f32 0.0, %v2691
  %v2693 = vpop.f32.mrb[0].mxu0
  %v2694 = vpop.f32.mrb[0].mxu0
  %v2695 = vadd.f32 0.0, %v2694
  %v2696 = vpop.f32.mrb[0].mxu0
  %2697 = vmatprep.mubr.bf16.mxu0 0
  %2698 = vmatmul.mubr.bf16.gmra.mrb[0].mxu0 %v2557
  %v2699 = vpop.f32.mrb[0].mxu0
  %v2700 = vadd.f32 0.0, %v2699
  %v2701 = vpop.f32.mrb[0].mxu0
  %v2702 = vpop.f32.mrb[0].mxu0
  %v2703 = vadd.f32 0.0, %v2702
  %v2704 = vpop.f32.mrb[0].mxu0
  %2705 = vmatprep.mubr.bf16.mxu0 0
  %2706 = vmatmul.mubr.bf16.gmra.mrb[0].mxu0 %v2560
  %v2707 = vpop.f32.mrb[0].mxu0
  %v2708 = vadd.f32 0.0, %v2707
  %v2709 = vpop.f32.mrb[0].mxu0
  %v2710 = vpop.f32.mrb[0].mxu0
  %v2711 = vadd.f32 0.0, %v2710
  %v2712 = vpop.f32.mrb[0].mxu0
  %2713 = vmatprep.mubr.bf16.mxu0 0
  %2714 = vmatmul.mubr.bf16.gmra.mrb[0].mxu0 %v2563
  %v2715 = vpop.f32.mrb[0].mxu0
  %v2716 = vadd.f32 0.0, %v2715
  %v2717 = vpop.f32.mrb[0].mxu0
  %v2718 = vpop.f32.mrb[0].mxu0
  %v2719 = vpop.f32.mrb[0].mxu0
  %2720 = vmatprep.mubr.bf16.mxu0 0
  %2721 = vmatmul.mubr.bf16.gmra.mrb[0].mxu0 %v2566
  %v2722 = vpop.f32.mrb[0].mxu0
  %v2723 = vpop.f32.mrb[0].mxu0
  %v2724 = vpop.f32.mrb[0].mxu0
  %v2725 = vpop.f32.mrb[0].mxu0
  %2726 = vdwg.mxu0
  %2753 = vrot.lane.b32.xlu0 %v2612, 120
  %v2754 = vpop.permute.xlu0 %2753
  %2755 = vrot.lane.b32.xlu0 %v2615, 120
  %v2756 = vpop.permute.xlu0 %2755
  %2757 = vrot.lane.b32.xlu0 %v2620, 120
  %v2758 = vpop.permute.xlu0 %2757
  %2759 = vrot.lane.b32.xlu0 %v2623, 120
  %v2760 = vpop.permute.xlu0 %2759
  %2761 = vrot.lane.b32.xlu0 %v2628, 120
  %v2762 = vpop.permute.xlu0 %2761
  %2763 = vrot.lane.b32.xlu0 %v2631, 120
  %v2764 = vpop.permute.xlu0 %2763
  %2765 = vrot.lane.b32.xlu0 %v2636, 120
  %v2766 = vpop.permute.xlu0 %2765
  %2767 = vrot.lane.b32.xlu0 %v2639, 120
  %v2768 = vpop.permute.xlu0 %2767
  %2769 = vrot.lane.b32.xlu0 %v2644, 120
  %v2770 = vpop.permute.xlu0 %2769
  %2771 = vrot.lane.b32.xlu0 %v2647, 120
  %v2772 = vpop.permute.xlu0 %2771
  %2773 = vrot.lane.b32.xlu0 %v2652, 120
  %v2774 = vpop.permute.xlu0 %2773
  %2775 = vrot.lane.b32.xlu0 %v2655, 120
  %v2776 = vpop.permute.xlu0 %2775
  %2777 = vrot.lane.b32.xlu0 %v2660, 120
  %v2778 = vpop.permute.xlu0 %2777
  %2779 = vrot.lane.b32.xlu0 %v2663, 120
  %v2780 = vpop.permute.xlu0 %2779
  %2781 = vrot.lane.b32.xlu0 %v2668, 120
  %v2782 = vpop.permute.xlu0 %2781
  %2783 = vrot.lane.b32.xlu0 %v2671, 120
  %v2784 = vpop.permute.xlu0 %2783
  %2785 = vrot.lane.b32.xlu0 %v2676, 120
  %v2786 = vpop.permute.xlu0 %2785
  %2787 = vrot.lane.b32.xlu0 %v2679, 120
  %v2788 = vpop.permute.xlu0 %2787
  %2789 = vrot.lane.b32.xlu0 %v2684, 120
  %v2790 = vpop.permute.xlu0 %2789
  %2791 = vrot.lane.b32.xlu0 %v2687, 120
  %v2792 = vpop.permute.xlu0 %2791
  %2793 = vrot.lane.b32.xlu0 %v2692, 120
  %v2794 = vpop.permute.xlu0 %2793
  %2795 = vrot.lane.b32.xlu0 %v2695, 120
  %v2796 = vpop.permute.xlu0 %2795
  %2797 = vrot.lane.b32.xlu0 %v2700, 120
  %v2798 = vpop.permute.xlu0 %2797
  %2799 = vrot.lane.b32.xlu0 %v2703, 120
  %v2800 = vpop.permute.xlu0 %2799
  %2801 = vrot.lane.b32.xlu0 %v2708, 120
  %v2802 = vpop.permute.xlu0 %2801
  %2803 = vrot.lane.b32.xlu0 %v2711, 120
  %v2804 = vpop.permute.xlu0 %2803
  %v2831 = vadd.f32 %v2615, %v2754
  %v2832 = vadd.f32 %v2620, %v2756
  %v2833 = vadd.f32 %v2623, %v2758
  %v2834 = vadd.f32 %v2628, %v2760
  %v2835 = vadd.f32 %v2631, %v2762
  %v2836 = vadd.f32 %v2636, %v2764
  %v2837 = vadd.f32 %v2639, %v2766
  %v2838 = vadd.f32 %v2644, %v2768
  %v2839 = vadd.f32 %v2647, %v2770
  %v2840 = vadd.f32 %v2652, %v2772
  %v2841 = vadd.f32 %v2655, %v2774
  %v2842 = vadd.f32 %v2660, %v2776
  %v2843 = vadd.f32 %v2663, %v2778
  %v2844 = vadd.f32 %v2668, %v2780
  %v2845 = vadd.f32 %v2671, %v2782
  %v2846 = vadd.f32 %v2676, %v2784
  %v2847 = vadd.f32 %v2679, %v2786
  %v2848 = vadd.f32 %v2684, %v2788
  %v2849 = vadd.f32 %v2687, %v2790
  %v2850 = vadd.f32 %v2692, %v2792
  %v2851 = vadd.f32 %v2695, %v2794
  %v2852 = vadd.f32 %v2700, %v2796
  %v2853 = vadd.f32 %v2703, %v2798
  %v2854 = vadd.f32 %v2708, %v2800
  %v2855 = vadd.f32 %v2711, %v2802
  %v2856 = vadd.f32 %v2716, %v2804
  %2857 = vrot.lane.b32.xlu0 %v2615, 124
  %v2858 = vpop.permute.xlu0 %2857
  %2860 = vrot.lane.b32.xlu0 %v2620, 124
  %v2861 = vpop.permute.xlu0 %2860
  %2863 = vrot.lane.b32.xlu0 %v2623, 124
  %v2864 = vpop.permute.xlu0 %2863
  %2866 = vrot.lane.b32.xlu0 %v2628, 124
  %v2867 = vpop.permute.xlu0 %2866
  %2869 = vrot.lane.b32.xlu0 %v2631, 124
  %v2870 = vpop.permute.xlu0 %2869
  %2872 = vrot.lane.b32.xlu0 %v2636, 124
  %v2873 = vpop.permute.xlu0 %2872
  %2875 = vrot.lane.b32.xlu0 %v2639, 124
  %v2876 = vpop.permute.xlu0 %2875
  %2878 = vrot.lane.b32.xlu0 %v2644, 124
  %v2879 = vpop.permute.xlu0 %2878
  %2881 = vrot.lane.b32.xlu0 %v2647, 124
  %v2882 = vpop.permute.xlu0 %2881
  %2884 = vrot.lane.b32.xlu0 %v2652, 124
  %v2885 = vpop.permute.xlu0 %2884
  %2887 = vrot.lane.b32.xlu0 %v2655, 124
  %v2888 = vpop.permute.xlu0 %2887
  %2890 = vrot.lane.b32.xlu0 %v2660, 124
  %v2891 = vpop.permute.xlu0 %2890
  %2893 = vrot.lane.b32.xlu0 %v2663, 124
  %v2894 = vpop.permute.xlu0 %2893
  %2896 = vrot.lane.b32.xlu0 %v2668, 124
  %v2897 = vpop.permute.xlu0 %2896
  %2899 = vrot.lane.b32.xlu0 %v2671, 124
  %v2900 = vpop.permute.xlu0 %2899
  %2902 = vrot.lane.b32.xlu0 %v2676, 124
  %v2903 = vpop.permute.xlu0 %2902
  %2905 = vrot.lane.b32.xlu0 %v2679, 124
  %v2906 = vpop.permute.xlu0 %2905
  %2908 = vrot.lane.b32.xlu0 %v2684, 124
  %v2909 = vpop.permute.xlu0 %2908
  %2911 = vrot.lane.b32.xlu0 %v2687, 124
  %v2912 = vpop.permute.xlu0 %2911
  %2914 = vrot.lane.b32.xlu0 %v2692, 124
  %v2915 = vpop.permute.xlu0 %2914
  %2917 = vrot.lane.b32.xlu0 %v2695, 124
  %v2918 = vpop.permute.xlu0 %2917
  %2920 = vrot.lane.b32.xlu0 %v2700, 124
  %v2921 = vpop.permute.xlu0 %2920
  %2923 = vrot.lane.b32.xlu0 %v2703, 124
  %v2924 = vpop.permute.xlu0 %2923
  %2926 = vrot.lane.b32.xlu0 %v2708, 124
  %v2927 = vpop.permute.xlu0 %2926
  %2929 = vrot.lane.b32.xlu0 %v2711, 124
  %v2930 = vpop.permute.xlu0 %2929
  %2933 = vrot.lane.b32.xlu0 %v2716, 124
  %v2934 = vpop.permute.xlu0 %2933
  %vm2936 = vcmask 31744
  %2937 = vst.msk [vmem:[%s3] sm:$0xff] %vm2936, %v2831
  %2938 = vst.msk [vmem:[%s3 + $0x8] sm:$0xff] %vm2936, %v2858
  %2939 = vst.msk [vmem:[%s3 + $0x10] sm:$0xff] %vm2936, %v2832
  %2940 = vst.msk [vmem:[%s3 + $0x18] sm:$0xff] %vm2936, %v2861
  %2941 = vst.msk [vmem:[%s3 + $0x20] sm:$0xff] %vm2936, %v2833
  %2942 = vst.msk [vmem:[%s3 + $0x28] sm:$0xff] %vm2936, %v2864
  %2943 = vst.msk [vmem:[%s3 + $0x30] sm:$0xff] %vm2936, %v2834
  %2944 = vst.msk [vmem:[%s3 + $0x38] sm:$0xff] %vm2936, %v2867
  %2945 = vst.msk [vmem:[%s3 + $0x40] sm:$0xff] %vm2936, %v2835
  %2946 = vst.msk [vmem:[%s3 + $0x48] sm:$0xff] %vm2936, %v2870
  %2947 = vst.msk [vmem:[%s3 + $0x50] sm:$0xff] %vm2936, %v2836
  %2948 = vst.msk [vmem:[%s3 + $0x58] sm:$0xff] %vm2936, %v2873
  %2949 = vst.msk [vmem:[%s3 + $0x60] sm:$0xff] %vm2936, %v2837
  %2950 = vst.msk [vmem:[%s3 + $0x68] sm:$0xff] %vm2936, %v2876
  %2951 = vst.msk [vmem:[%s3 + $0x70] sm:$0xff] %vm2936, %v2838
  %2952 = vst.msk [vmem:[%s3 + $0x78] sm:$0xff] %vm2936, %v2879
  %2953 = vst.msk [vmem:[%s3 + $0x80] sm:$0xff] %vm2936, %v2839
  %2954 = vst.msk [vmem:[%s3 + $0x88] sm:$0xff] %vm2936, %v2882
  %2955 = vst.msk [vmem:[%s3 + $0x90] sm:$0xff] %vm2936, %v2840
  %2956 = vst.msk [vmem:[%s3 + $0x98] sm:$0xff] %vm2936, %v2885
  %2957 = vst.msk [vmem:[%s3 + $0xa0] sm:$0xff] %vm2936, %v2841
  %2958 = vst.msk [vmem:[%s3 + $0xa8] sm:$0xff] %vm2936, %v2888
  %2959 = vst.msk [vmem:[%s3 + $0xb0] sm:$0xff] %vm2936, %v2842
  %2960 = vst.msk [vmem:[%s3 + $0xb8] sm:$0xff] %vm2936, %v2891
  %2961 = vst.msk [vmem:[%s3 + $0xc0] sm:$0xff] %vm2936, %v2843
  %2962 = vst.msk [vmem:[%s3 + $0xc8] sm:$0xff] %vm2936, %v2894
  %2963 = vst.msk [vmem:[%s3 + $0xd0] sm:$0xff] %vm2936, %v2844
  %2964 = vst.msk [vmem:[%s3 + $0xd8] sm:$0xff] %vm2936, %v2897
  %2965 = vst.msk [vmem:[%s3 + $0xe0] sm:$0xff] %vm2936, %v2845
  %2966 = vst.msk [vmem:[%s3 + $0xe8] sm:$0xff] %vm2936, %v2900
  %2967 = vst.msk [vmem:[%s3 + $0xf0] sm:$0xff] %vm2936, %v2846
  %2968 = vst.msk [vmem:[%s3 + $0xf8] sm:$0xff] %vm2936, %v2903
  %2969 = vst.msk [vmem:[%s3 + $0x100] sm:$0xff] %vm2936, %v2847
  %2970 = vst.msk [vmem:[%s3 + $0x108] sm:$0xff] %vm2936, %v2906
  %2971 = vst.msk [vmem:[%s3 + $0x110] sm:$0xff] %vm2936, %v2848
  %2972 = vst.msk [vmem:[%s3 + $0x118] sm:$0xff] %vm2936, %v2909
  %2973 = vst.msk [vmem:[%s3 + $0x120] sm:$0xff] %vm2936, %v2849
  %2974 = vst.msk [vmem:[%s3 + $0x128] sm:$0xff] %vm2936, %v2912
  %2975 = vst.msk [vmem:[%s3 + $0x130] sm:$0xff] %vm2936, %v2850
  %2976 = vst.msk [vmem:[%s3 + $0x138] sm:$0xff] %vm2936, %v2915
  %2977 = vst.msk [vmem:[%s3 + $0x140] sm:$0xff] %vm2936, %v2851
  %2978 = vst.msk [vmem:[%s3 + $0x148] sm:$0xff] %vm2936, %v2918
  %2979 = vst.msk [vmem:[%s3 + $0x150] sm:$0xff] %vm2936, %v2852
  %2980 = vst.msk [vmem:[%s3 + $0x158] sm:$0xff] %vm2936, %v2921
  %2981 = vst.msk [vmem:[%s3 + $0x160] sm:$0xff] %vm2936, %v2853
  %2982 = vst.msk [vmem:[%s3 + $0x168] sm:$0xff] %vm2936, %v2924
  %2983 = vst.msk [vmem:[%s3 + $0x170] sm:$0xff] %vm2936, %v2854
  %2984 = vst.msk [vmem:[%s3 + $0x178] sm:$0xff] %vm2936, %v2927
  %2985 = vst.msk [vmem:[%s3 + $0x180] sm:$0xff] %vm2936, %v2855
  %2986 = vst.msk [vmem:[%s3 + $0x188] sm:$0xff] %vm2936, %v2930
  %2987 = vst.msk [vmem:[%s3 + $0x190] sm:$0xff] %vm2936, %v2856
  %2988 = vst.msk [vmem:[%s3 + $0x198] sm:$0xff] %vm2936, %v2934
  // Predicated region
  $region14: #{resnet_decoder_forward.1} parent=0 // pred_check
    _
  $region15: #{resnet_decoder_forward.1} parent=0 // pred_check_branch
    %2990 = sbr.rel (0) target = $region17
  $region16: #{resnet_decoder_forward.1} parent=0 // pred_region
    _
  $region17: #{resnet_decoder_forward.1} parent=0 // pred_fallthru
    _
  // Predicated region
  $region18: #{resnet_decoder_forward.1} parent=0 // pred_check
    _
  $region19: #{resnet_decoder_forward.1} parent=0 // pred_check_branch
    %2992 = sbr.rel (0) target = $region21
  $region20: #{resnet_decoder_forward.1} parent=0 // pred_region
    _
  $region21: #{resnet_decoder_forward.1} parent=0 // pred_fallthru
    _

</llo_original>
